<compile_context>
chip_gen: v5e
topology: v5e:2x2
jax: 0.10.0
libtpu: 0.0.40
codegen_flags: <defaults>
</compile_context>

<pallas_src>
import functools

import jax
import jax.numpy as jnp
from jax.experimental import pallas as pl
from jax.experimental.pallas import tpu as pltpu


# ----------------------------------------------------------------------------
# helpers / device info
# ----------------------------------------------------------------------------
def _round_up(x, m):
    return (x + m - 1) // m * m


def _pad_axis(x, axis, new_size):
    pad = [(0, 0)] * x.ndim
    pad[axis] = (0, new_size - x.shape[axis])
    return jnp.pad(x, pad)


def _pad_gate_cols(w_t, h, h_pad):
    """w_t: (K, 4*h) in PyTorch gate order [i, f, g, o] -> (K, 4*h_pad),
    each gate block starting on a 128-lane boundary."""
    k = w_t.shape[0]
    w4 = w_t.reshape(k, 4, h)
    w4 = jnp.pad(w4, ((0, 0), (0, 0), (0, h_pad - h)))
    return w4.reshape(k, 4 * h_pad)


_DEVICE_KIND = ""
try:
    _DEVICE_KIND = jax.devices()[0].device_kind.lower()
except Exception:  # pragma: no cover - defensive only
    pass
_IS_V5E = ("v5 lite" in _DEVICE_KIND) or ("v5e" in _DEVICE_KIND)

# Explicit scoped-VMEM ceiling used for all pallas_calls: safe on v7x (64 MiB
# physical) while raising the 16/32 MiB defaults on v5e/v6e.
_VMEM_LIMIT_BYTES = 48 * 1024 * 1024
# Per-invocation VMEM budget used to size the LSTM batch tile.
_LSTM_VMEM_BUDGET = 40 * 1024 * 1024


# ----------------------------------------------------------------------------
# Kernel 1: generic tiled matmul + bias   out = x @ w + b
#   - multi-K path: grid (M/tm, N/tn, K/tk), reduction last, f32 acc scratch
#   - single-K path (Kp fits one tile, the common case here): no scratch,
#     direct o_ref store (no zero-fill / extra add / extra vst)
# ----------------------------------------------------------------------------
def _matmul_bias_acc_kernel(x_ref, w_ref, b_ref, o_ref, acc_ref):
    @pl.when(pl.program_id(2) == 0)
    def _():
        acc_ref[...] = jnp.zeros_like(acc_ref)

    acc_ref[...] += jnp.dot(
        x_ref[...].astype(w_ref.dtype), w_ref[...],
        preferred_element_type=jnp.float32)

    @pl.when(pl.program_id(2) == pl.num_programs(2) - 1)
    def _():
        o_ref[...] = (acc_ref[...] + b_ref[...].astype(jnp.float32)
                      ).astype(o_ref.dtype)


def _matmul_bias_singlek_kernel(x_ref, w_ref, b_ref, o_ref):
    o_ref[...] = (jnp.dot(x_ref[...].astype(w_ref.dtype), w_ref[...],
                          preferred_element_type=jnp.float32)
                  + b_ref[...].astype(jnp.float32)).astype(o_ref.dtype)


def pallas_matmul_bias(x, w, b, *, tile_m=512, tile_n=1024, tile_k=512,
                       out_dtype=jnp.float32, w_buffering=None,
                       vmem_limit_bytes=_VMEM_LIMIT_BYTES):
    """x: (M, K), w: (K, N), b: (N,) -> (M, N).

    Large tile_m => the (K, N) weight is streamed far fewer times (the logits
    projection is then MXU-bound instead of HBM-bound on the vocab weight).
    """
    M, K = x.shape
    Kw, N = w.shape
    assert K == Kw and b.shape == (N,)

    tm = min(tile_m, _round_up(M, 8))
    tn = min(tile_n, _round_up(N, 128))
    tk = min(tile_k, _round_up(K, 128))
    Mp, Np, Kp = _round_up(M, tm), _round_up(N, tn), _round_up(K, tk)

    if (Mp, Kp) != (M, K):
        x = jnp.pad(x, ((0, Mp - M), (0, Kp - K)))
    if (Kp, Np) != (K, N):
        w = jnp.pad(w, ((0, Kp - K), (0, Np - N)))
    if Np != N:
        b = jnp.pad(b, (0, Np - N))
    b2 = b.reshape(1, Np)

    w_spec_kwargs = {}
    if w_buffering is not None:
        w_spec_kwargs["pipeline_mode"] = pl.Buffered(w_buffering)

    cp_kwargs = {}
    if vmem_limit_bytes is not None:
        cp_kwargs["vmem_limit_bytes"] = vmem_limit_bytes

    if Kp == tk:
        # Single reduction step: skip the accumulator scratch entirely.
        out = pl.pallas_call(
            _matmul_bias_singlek_kernel,
            out_shape=jax.ShapeDtypeStruct((Mp, Np), out_dtype),
            grid_spec=pltpu.PrefetchScalarGridSpec(
                num_scalar_prefetch=0,
                grid=(Mp // tm, Np // tn),
                in_specs=[
                    pl.BlockSpec((tm, Kp), lambda i, j: (i, 0)),
                    pl.BlockSpec((Kp, tn), lambda i, j: (0, j), **w_spec_kwargs),
                    pl.BlockSpec((1, tn), lambda i, j: (0, j)),
                ],
                out_specs=pl.BlockSpec((tm, tn), lambda i, j: (i, j)),
            ),
            compiler_params=pltpu.CompilerParams(
                dimension_semantics=("parallel", "parallel"), **cp_kwargs),
        )(x, w, b2)
    else:
        out = pl.pallas_call(
            _matmul_bias_acc_kernel,
            out_shape=jax.ShapeDtypeStruct((Mp, Np), out_dtype),
            grid_spec=pltpu.PrefetchScalarGridSpec(
                num_scalar_prefetch=0,
                grid=(Mp // tm, Np // tn, Kp // tk),
                in_specs=[
                    pl.BlockSpec((tm, tk), lambda i, j, k: (i, k)),
                    pl.BlockSpec((tk, tn), lambda i, j, k: (k, j),
                                 **w_spec_kwargs),
                    pl.BlockSpec((1, tn), lambda i, j, k: (0, j)),
                ],
                out_specs=pl.BlockSpec((tm, tn), lambda i, j, k: (i, j)),
                scratch_shapes=[pltpu.VMEM((tm, tn), jnp.float32)],
            ),
            compiler_params=pltpu.CompilerParams(
                dimension_semantics=("parallel", "parallel", "arbitrary"),
                **cp_kwargs),
        )(x, w, b2)

    if (Mp, Np) != (M, N):
        out = out[:M, :N]
    return out


# ----------------------------------------------------------------------------
# Kernel 2: LSTM recurrence only (batch-chunk grid).
#   xw_tm:  (L, Bp, 4*Hp) bf16  pre-activations x@W_ih + b_ih + b_hh (hoisted)
#   w_hh_t: (Hp, 4*Hp)    bf16, gate blocks lane-aligned
#   out:    (L, Bp, Hp)   bf16 hidden states
#   Grid over batch chunks (parallel axis -> both v7x TensorCores, pipelined
#   xw DMA, bounded VMEM).  h/c are fori_loop carries (vregs, no VMEM
#   round-trip); only h_prev @ W_hh is on the critical path.
#   PyTorch gate order: i, f, g, o.
# ----------------------------------------------------------------------------
def _lstm_kernel(xw_ref, whh_ref, h_out_ref, *, seq_len, hidden_pad):
    Hp = hidden_pad
    tb = xw_ref.shape[1]
    compute_dtype = whh_ref.dtype

    def step(t, carry):
        h_prev, c_prev = carry
        gates = (xw_ref[t].astype(jnp.float32)
                 + jnp.dot(h_prev.astype(compute_dtype), whh_ref[...],
                           preferred_element_type=jnp.float32))    # (tb, 4Hp)
        i_g = jax.nn.sigmoid(gates[:, 0 * Hp:1 * Hp])
        f_g = jax.nn.sigmoid(gates[:, 1 * Hp:2 * Hp])
        g_g = jnp.tanh(gates[:, 2 * Hp:3 * Hp])
        o_g = jax.nn.sigmoid(gates[:, 3 * Hp:4 * Hp])
        c_new = f_g * c_prev + i_g * g_g
        h_new = o_g * jnp.tanh(c_new)
        h_out_ref[t] = h_new.astype(h_out_ref.dtype)
        return h_new, c_new

    h0 = jnp.zeros((tb, Hp), jnp.float32)
    c0 = jnp.zeros((tb, Hp), jnp.float32)
    # Full unroll for short sequences; partial unroll for longer ones so the
    # LLO scheduler can still overlap the step-t+1 MXU push with the step-t
    # EUP/VPU gate math without blowing up code size / spilling.
    unroll = True if seq_len <= 16 else 4
    jax.lax.fori_loop(0, seq_len, step, (h0, c0), unroll=unroll)


def _pick_lstm_batch_tile(batch, seq_len, hidden_pad,
                          budget_bytes=_LSTM_VMEM_BUDGET):
    """Largest batch tile (multiple of 8, <=256) whose double-buffered
    xw/h/W_hh blocks fit the per-invocation VMEM budget."""
    tb = min(256, _round_up(batch, 8))

    def est(t):
        xw_blk = seq_len * t * 4 * hidden_pad * 2      # bf16
        h_blk = seq_len * t * hidden_pad * 2           # bf16
        whh = hidden_pad * 4 * hidden_pad * 2          # bf16
        return 2 * (xw_blk + h_blk + whh)

    while tb > 8 and est(tb) > budget_bytes:
        tb = max(8, _round_up(tb // 2, 8))
    return tb


def pallas_lstm(xw_tm, w_hh_t, *, batch_tile,
                vmem_limit_bytes=_VMEM_LIMIT_BYTES):
    L, Bp, G = xw_tm.shape
    Hp = w_hh_t.shape[0]
    assert G == 4 * Hp
    assert Bp % batch_tile == 0
    kernel = functools.partial(_lstm_kernel, seq_len=L, hidden_pad=Hp)
    return pl.pallas_call(
        kernel,
        out_shape=jax.ShapeDtypeStruct((L, Bp, Hp), jnp.bfloat16),
        grid_spec=pltpu.PrefetchScalarGridSpec(
            num_scalar_prefetch=0,
            grid=(Bp // batch_tile,),
            in_specs=[
                pl.BlockSpec((L, batch_tile, 4 * Hp), lambda b: (0, b, 0)),
                pl.BlockSpec((Hp, 4 * Hp), lambda b: (0, 0)),
            ],
            out_specs=pl.BlockSpec((L, batch_tile, Hp), lambda b: (0, b, 0)),
        ),
        compiler_params=pltpu.CompilerParams(
            dimension_semantics=("parallel",),
            vmem_limit_bytes=vmem_limit_bytes),
    )(xw_tm, w_hh_t)


# ----------------------------------------------------------------------------
# Parameter construction (deterministic, matches nn.Module shapes)
# ----------------------------------------------------------------------------
def init_params(key, im_embedding_size, embed_size, hidden_size, vocab_size):
    ks = jax.random.split(key, 8)
    s = 0.1
    return {
        # nn.Linear(im_embedding_size, embed_size)
        "inp_w": s * jax.random.normal(ks[0], (embed_size, im_embedding_size), jnp.float32),
        "inp_b": s * jax.random.normal(ks[1], (embed_size,), jnp.float32),
        # nn.Embedding(vocab_size, embed_size)
        "embed": s * jax.random.normal(ks[2], (vocab_size, embed_size), jnp.float32),
        # nn.LSTM(embed_size, hidden_size, 1, batch_first=True)
        "w_ih": s * jax.random.normal(ks[3], (4 * hidden_size, embed_size), jnp.float32),
        "w_hh": s * jax.random.normal(ks[4], (4 * hidden_size, hidden_size), jnp.float32),
        "b_ih": s * jax.random.normal(ks[5], (4 * hidden_size,), jnp.float32),
        "b_hh": s * jax.random.normal(ks[6], (4 * hidden_size,), jnp.float32),
        # nn.Linear(hidden_size, vocab_size)
        "out_w": s * jax.random.normal(ks[7], (vocab_size, hidden_size), jnp.float32),
        "out_b": jnp.zeros((vocab_size,), jnp.float32),
    }


# ----------------------------------------------------------------------------
# One-time packing: pad to (8,128)-friendly shapes, lane-align gate blocks,
# cast matmul weights to bf16 (f32 accumulation happens in the kernels).
# ----------------------------------------------------------------------------
def pack_params(params, compute_dtype=jnp.bfloat16):
    E = params["inp_w"].shape[0]
    H = params["w_hh"].shape[1]
    V = params["out_w"].shape[0]
    Ep, Hp, Vp = _round_up(E, 128), _round_up(H, 128), _round_up(V, 128)

    w_ih_t = _pad_gate_cols(params["w_ih"].T, H, Hp)            # (E, 4Hp)
    w_ih_t = _pad_axis(w_ih_t, 0, Ep).astype(compute_dtype)     # (Ep, 4Hp)
    w_hh_t = _pad_gate_cols(params["w_hh"].T, H, Hp)            # (H, 4Hp)
    w_hh_t = _pad_axis(w_hh_t, 0, Hp).astype(compute_dtype)     # (Hp, 4Hp)
    bias = (params["b_ih"] + params["b_hh"]).reshape(4, H)
    bias = jnp.pad(bias, ((0, 0), (0, Hp - H))).reshape(4 * Hp)  # f32

    # TODO(synk): on v7x an fp8-quantized w_out_t_p would double vocab-projection
    # MXU throughput; kept bf16 here to preserve accuracy without validation.
    w_out_t = _pad_axis(_pad_axis(params["out_w"].T, 0, Hp), 1, Vp
                        ).astype(compute_dtype)                 # (Hp, Vp)
    b_out_p = _pad_axis(params["out_b"], 0, Vp)                 # (Vp,) f32

    return {
        "inp_w": params["inp_w"], "inp_b": params["inp_b"],     # tiny; left to XLA
        "embed_p": _pad_axis(params["embed"], 1, Ep),           # (vocab, Ep) f32
        "w_ih_t_p": w_ih_t, "w_hh_t_p": w_hh_t, "bias_p": bias,
        "w_out_t_p": w_out_t, "b_out_p": b_out_p,
        "out_b": params["out_b"],                               # keeps original V
    }


# ----------------------------------------------------------------------------
# Forward pass (mode='train')
# ----------------------------------------------------------------------------
@jax.jit
def image_captioner_forward(packed, im_embeddings, captions):
    """
    im_embeddings: (B, T_im, im_embedding_size) float32
    captions:      (B, Lc) int32
    returns logits (B, T_im + Lc - 1, vocab_size) float32
    """
    B, T_im, _ = im_embeddings.shape
    V = packed["out_b"].shape[0]
    Ep = packed["embed_p"].shape[1]
    Hp = packed["w_hh_t_p"].shape[0]
    L = T_im + captions.shape[1] - 1

    tb = _pick_lstm_batch_tile(B, L, Hp)
    Bp = _round_up(B, tb)

    # self.inp — image projection: only B*T_im rows; negligible compute, so
    # left to XLA instead of a standalone pallas_call.
    im_proj = im_embeddings @ packed["inp_w"].T + packed["inp_b"]   # (B, T_im, E)
    # self.inp_dropout — eval-mode dropout is identity.
    # TODO(synk): training-mode dropout (random mask) not implemented in-kernel.
    im_proj = _pad_axis(im_proj, 2, Ep)                             # (B, T_im, Ep)

    # self.embed(captions[:, :-1]) — gather (glue, plain JAX).
    cap_emb = jnp.take(packed["embed_p"], captions[:, :-1], axis=0)  # (B, Lc-1, Ep)

    seq = jnp.concatenate([im_proj, cap_emb], axis=1)               # (B, L, Ep)
    seq = _pad_axis(seq, 0, Bp)                                     # (Bp, L, Ep)
    # Cast the matmul LHS to bf16 once here (halves x-tile DMA; the MXU
    # consumes bf16 anyway), then lay out time-major rows.
    seq_tm = (jnp.transpose(seq, (1, 0, 2))
              .reshape(L * Bp, Ep).astype(jnp.bfloat16))

    # 1) Hoisted input-side gate pre-activations: one big MXU matmul (bias
    #    folded), output emitted in bf16 to halve the xw HBM round-trip.
    xw = pallas_matmul_bias(seq_tm, packed["w_ih_t_p"], packed["bias_p"],
                            tile_m=512, tile_n=1024, tile_k=512,
                            out_dtype=jnp.bfloat16)                 # (L*Bp, 4Hp)
    xw = xw.reshape(L, Bp, 4 * Hp)

    # 2) LSTM recurrence: batch-chunk grid, only h_prev @ W_hh inside the loop.
    h_all = pallas_lstm(xw, packed["w_hh_t_p"], batch_tile=tb)      # (L, Bp, Hp) bf16

    # 3) H->V projection on batch-first rows (transpose the small bf16 hidden
    #    tensor here so the large logits tensor never needs a transpose).
    h_bf = jnp.transpose(h_all, (1, 0, 2)).reshape(Bp * L, Hp)      # (Bp*L, Hp) bf16
    # TODO(synk): out_dtype=bf16 here would halve the dominant logits HBM write;
    # kept f32 to match the PyTorch module's output precision.
    logits = pallas_matmul_bias(h_bf, packed["w_out_t_p"], packed["b_out_p"],
                                tile_m=512, tile_n=1024, tile_k=512,
                                out_dtype=jnp.float32,
                                w_buffering=3 if _IS_V5E else None)  # (Bp*L, Vp)
    logits = logits.reshape(Bp, L, -1)[:B, :, :V]                   # (B, L, V)
    return logits


# ----------------------------------------------------------------------------
# Pure-JAX reference. compute_dtype=float32 reproduces the PyTorch f32 forward;
# compute_dtype=bfloat16 mirrors the kernels' mixed precision (bf16 MXU inputs,
# bf16 xw/h materialization, f32 accumulation and gate nonlinearities).
# ----------------------------------------------------------------------------
def reference_forward(params, im_embeddings, captions, compute_dtype=jnp.float32):
    cd = compute_dtype
    im_proj = im_embeddings @ params["inp_w"].T + params["inp_b"]
    cap_emb = jnp.take(params["embed"], captions[:, :-1], axis=0)
    seq = jnp.concatenate([im_proj, cap_emb], axis=1)               # (B, L, E)
    H = params["w_hh"].shape[1]

    wih = params["w_ih"].T.astype(cd)
    whh = params["w_hh"].T.astype(cd)
    wout = params["out_w"].T.astype(cd)
    bias = params["b_ih"] + params["b_hh"]

    xw = jnp.dot(seq.astype(cd), wih,
                 preferred_element_type=jnp.float32) + bias         # (B, L, 4H)
    if cd != jnp.float32:
        # Mirror the kernels: xw is materialized in bf16 between kernels.
        xw = xw.astype(cd).astype(jnp.float32)

    def step(carry, xw_t):
        h, c = carry
        gates = xw_t + jnp.dot(h.astype(cd), whh,
                               preferred_element_type=jnp.float32)
        i = jax.nn.sigmoid(gates[:, 0 * H:1 * H])
        f = jax.nn.sigmoid(gates[:, 1 * H:2 * H])
        g = jnp.tanh(gates[:, 2 * H:3 * H])
        o = jax.nn.sigmoid(gates[:, 3 * H:4 * H])
        c = f * c + i * g
        h = o * jnp.tanh(c)
        return (h, c), h

    h0 = jnp.zeros((seq.shape[0], H), jnp.float32)
    (_, _), hs = jax.lax.scan(step, (h0, h0), jnp.transpose(xw, (1, 0, 2)))
    hs = jnp.transpose(hs, (1, 0, 2))                               # (B, L, H)
    return jnp.dot(hs.astype(cd), wout,
                   preferred_element_type=jnp.float32) + params["out_b"]


if __name__ == "__main__":
    # Small, self-consistent shapes.
    B = 2
    IM_EMB = 64
    EMBED = 32
    HIDDEN = 32
    VOCAB = 64
    CAP_LEN = 8          # captions[:, :-1] -> 7 tokens; total seq = 1 + 7 = 8

    key = jax.random.PRNGKey(0)
    k_param, k_im, k_cap = jax.random.split(key, 3)

    params = init_params(k_param, IM_EMB, EMBED, HIDDEN, VOCAB)
    packed = pack_params(params, compute_dtype=jnp.bfloat16)

    im_embeddings = jax.random.normal(k_im, (B, 1, IM_EMB), jnp.float32)
    captions = jax.random.randint(k_cap, (B, CAP_LEN), 0, VOCAB, jnp.int32)

    out = image_captioner_forward(packed, im_embeddings, captions)
    out = jax.block_until_ready(out)

    assert out.shape == (B, 1 + CAP_LEN - 1, VOCAB), out.shape

    # Tight check vs a reference using the same mixed precision as the kernels.
    ref_mixed = reference_forward(params, im_embeddings, captions, jnp.bfloat16)
    assert jnp.allclose(out, ref_mixed, atol=5e-3, rtol=5e-3), \
        float(jnp.max(jnp.abs(out - ref_mixed)))

    # Loose check vs the pure-f32 (PyTorch-equivalent) forward.
    ref_f32 = reference_forward(params, im_embeddings, captions, jnp.float32)
    assert jnp.allclose(out, ref_f32, atol=5e-2, rtol=5e-2), \
        float(jnp.max(jnp.abs(out - ref_f32)))

    print("KERNEL_OK")
</pallas_src>

<mosaic_0001>
module attributes {stable_mosaic.version = 11 : i64} {
  func.func @_matmul_bias_singlek_kernel(%arg0: i32, %arg1: i32, %arg2: memref<64x128xbf16, #tpu.memory_space<vmem>>, %arg3: memref<128x512xbf16, #tpu.memory_space<vmem>>, %arg4: memref<1x512xf32, #tpu.memory_space<vmem>>, %arg5: memref<64x512xbf16, #tpu.memory_space<vmem>>) attributes {dimension_semantics = [#tpu.dimension_semantics<parallel>, #tpu.dimension_semantics<parallel>], iteration_bounds = array<i64: 1, 1>, scalar_prefetch = 0 : i64, scratch_operands = 0 : i64, tpu.core_type = #tpu.core_type<tc>, window_params = [{transform_indices = @transform_0, window_bounds = array<i64: 64, 128>}, {transform_indices = @transform_1, window_bounds = array<i64: 128, 512>}, {transform_indices = @transform_2, window_bounds = array<i64: 1, 512>}, {transform_indices = @transform_3, window_bounds = array<i64: 64, 512>}]} {
    %c0 = arith.constant 0 : index
    %c0_0 = arith.constant 0 : index
    %0 = vector.load %arg2[%c0, %c0_0] : memref<64x128xbf16, #tpu.memory_space<vmem>>, vector<64x128xbf16>
    %c0_1 = arith.constant 0 : index
    %c0_2 = arith.constant 0 : index
    %1 = vector.load %arg3[%c0_1, %c0_2] : memref<128x512xbf16, #tpu.memory_space<vmem>>, vector<128x512xbf16>
    %cst = arith.constant dense<0.000000e+00> : vector<64x512xf32>
    %2 = tpu.matmul %0, %1, %cst {dimension_numbers = #tpu.dot_dimension_numbers<[1], [0], [0], [1], [0, 0, 1, 1], [], []>} : vector<64x128xbf16>, vector<128x512xbf16>, vector<64x512xf32> -> vector<64x512xf32>
    %c0_3 = arith.constant 0 : index
    %c0_4 = arith.constant 0 : index
    %3 = vector.load %arg4[%c0_3, %c0_4] : memref<1x512xf32, #tpu.memory_space<vmem>>, vector<1x512xf32>
    %4 = vector.broadcast %3 : vector<1x512xf32> to vector<64x512xf32>
    %5 = arith.addf %2, %4 : vector<64x512xf32>
    %6 = arith.truncf %5 : vector<64x512xf32> to vector<64x512xbf16>
    %c0_5 = arith.constant 0 : index
    %c0_6 = arith.constant 0 : index
    %7 = vector.load %arg5[%c0_5, %c0_6] : memref<64x512xbf16, #tpu.memory_space<vmem>>, vector<64x512xbf16>
    tpu.vector_store %arg5[%c0_5, %c0_6], %6 {strides = array<i32>} : memref<64x512xbf16, #tpu.memory_space<vmem>>, vector<64x512xbf16>,
    return
  }
  func.func @transform_0(%arg0: i32, %arg1: i32) -> (i32, i32) {
    %c0_i32 = arith.constant 0 : i32
    %c0_i32_0 = arith.constant 0 : i32
    return %arg0, %c0_i32 : i32, i32
  }
  func.func @transform_1(%arg0: i32, %arg1: i32) -> (i32, i32) {
    %c0_i32 = arith.constant 0 : i32
    %c0_i32_0 = arith.constant 0 : i32
    return %c0_i32, %arg1 : i32, i32
  }
  func.func @transform_2(%arg0: i32, %arg1: i32) -> (i32, i32) {
    %c0_i32 = arith.constant 0 : i32
    %c0_i32_0 = arith.constant 0 : i32
    return %c0_i32, %arg1 : i32, i32
  }
  func.func @transform_3(%arg0: i32, %arg1: i32) -> (i32, i32) {
    %c0_i32 = arith.constant 0 : i32
    return %arg0, %arg1 : i32, i32
  }
}

module attributes {stable_mosaic.version = 11 : i64} {
  func.func @_matmul_bias_singlek_kernel(%arg0: i32, %arg1: i32, %arg2: memref<64x128xbf16, #tpu.memory_space<vmem>>, %arg3: memref<128x128xbf16, #tpu.memory_space<vmem>>, %arg4: memref<1x128xf32, #tpu.memory_space<vmem>>, %arg5: memref<64x128xf32, #tpu.memory_space<vmem>>) attributes {dimension_semantics = [#tpu.dimension_semantics<parallel>, #tpu.dimension_semantics<parallel>], iteration_bounds = array<i64: 1, 1>, scalar_prefetch = 0 : i64, scratch_operands = 0 : i64, tpu.core_type = #tpu.core_type<tc>, window_params = [{transform_indices = @transform_0, window_bounds = array<i64: 64, 128>}, {transform_indices = @transform_1, window_bounds = array<i64: 128, 128>}, {transform_indices = @transform_2, window_bounds = array<i64: 1, 128>}, {transform_indices = @transform_3, window_bounds = array<i64: 64, 128>}]} {
    %c0 = arith.constant 0 : index
    %c0_0 = arith.constant 0 : index
    %0 = vector.load %arg2[%c0, %c0_0] : memref<64x128xbf16, #tpu.memory_space<vmem>>, vector<64x128xbf16>
    %c0_1 = arith.constant 0 : index
    %c0_2 = arith.constant 0 : index
    %1 = vector.load %arg3[%c0_1, %c0_2] : memref<128x128xbf16, #tpu.memory_space<vmem>>, vector<128x128xbf16>
    %cst = arith.constant dense<0.000000e+00> : vector<64x128xf32>
    %2 = tpu.matmul %0, %1, %cst {dimension_numbers = #tpu.dot_dimension_numbers<[1], [0], [0], [1], [0, 0, 1, 1], [], []>} : vector<64x128xbf16>, vector<128x128xbf16>, vector<64x128xf32> -> vector<64x128xf32>
    %c0_3 = arith.constant 0 : index
    %c0_4 = arith.constant 0 : index
    %3 = vector.load %arg4[%c0_3, %c0_4] : memref<1x128xf32, #tpu.memory_space<vmem>>, vector<1x128xf32>
    %4 = vector.broadcast %3 : vector<1x128xf32> to vector<64x128xf32>
    %5 = arith.addf %2, %4 : vector<64x128xf32>
    %c0_5 = arith.constant 0 : index
    %c0_6 = arith.constant 0 : index
    %6 = vector.load %arg5[%c0_5, %c0_6] : memref<64x128xf32, #tpu.memory_space<vmem>>, vector<64x128xf32>
    tpu.vector_store %arg5[%c0_5, %c0_6], %5 {strides = array<i32>} : memref<64x128xf32, #tpu.memory_space<vmem>>, vector<64x128xf32>,
    return
  }
  func.func @transform_0(%arg0: i32, %arg1: i32) -> (i32, i32) {
    %c0_i32 = arith.constant 0 : i32
    %c0_i32_0 = arith.constant 0 : i32
    return %arg0, %c0_i32 : i32, i32
  }
  func.func @transform_1(%arg0: i32, %arg1: i32) -> (i32, i32) {
    %c0_i32 = arith.constant 0 : i32
    %c0_i32_0 = arith.constant 0 : i32
    return %c0_i32, %arg1 : i32, i32
  }
  func.func @transform_2(%arg0: i32, %arg1: i32) -> (i32, i32) {
    %c0_i32 = arith.constant 0 : i32
    %c0_i32_0 = arith.constant 0 : i32
    return %c0_i32, %arg1 : i32, i32
  }
  func.func @transform_3(%arg0: i32, %arg1: i32) -> (i32, i32) {
    %c0_i32 = arith.constant 0 : i32
    return %arg0, %arg1 : i32, i32
  }
}

module attributes {stable_mosaic.version = 11 : i64} {
  func.func @_lstm_kernel(%arg0: i32, %arg1: memref<8x8x512xbf16, #tpu.memory_space<vmem>>, %arg2: memref<128x512xbf16, #tpu.memory_space<vmem>>, %arg3: memref<8x8x128xbf16, #tpu.memory_space<vmem>>) attributes {dimension_semantics = [#tpu.dimension_semantics<parallel>], iteration_bounds = array<i64: 1>, scalar_prefetch = 0 : i64, scratch_operands = 0 : i64, tpu.core_type = #tpu.core_type<tc>, window_params = [{transform_indices = @transform_0, window_bounds = array<i64: 8, 8, 512>}, {pipeline_mode = #tpu.pipeline_mode<synchronous>, transform_indices = @transform_1, window_bounds = array<i64: 128, 512>}, {transform_indices = @transform_2, window_bounds = array<i64: 8, 8, 128>}]} {
    %cst = arith.constant 0.000000e+00 : f32
    %0 = vector.broadcast %cst : f32 to vector<8x128xf32>
    %cst_0 = arith.constant 0.000000e+00 : f32
    %1 = vector.broadcast %cst_0 : f32 to vector<8x128xf32>
    %c0_i32 = arith.constant 0 : i32
    %2 = arith.index_cast %c0_i32 : i32 to index
    %c0 = arith.constant 0 : index
    %c0_1 = arith.constant 0 : index
    %3 = vector.load %arg1[%2, %c0, %c0_1] : memref<8x8x512xbf16, #tpu.memory_space<vmem>>, vector<1x8x512xbf16>
    %4 = vector.shape_cast %3 : vector<1x8x512xbf16> to vector<8x512xbf16>
    %5 = arith.extf %4 : vector<8x512xbf16> to vector<8x512xf32>
    %6 = arith.truncf %0 : vector<8x128xf32> to vector<8x128xbf16>
    %c0_2 = arith.constant 0 : index
    %c0_3 = arith.constant 0 : index
    %7 = vector.load %arg2[%c0_2, %c0_3] : memref<128x512xbf16, #tpu.memory_space<vmem>>, vector<128x512xbf16>
    %cst_4 = arith.constant dense<0.000000e+00> : vector<8x512xf32>
    %8 = tpu.matmul %6, %7, %cst_4 {dimension_numbers = #tpu.dot_dimension_numbers<[1], [0], [0], [1], [0, 0, 1, 1], [], []>} : vector<8x128xbf16>, vector<128x512xbf16>, vector<8x512xf32> -> vector<8x512xf32>
    %9 = arith.addf %5, %8 : vector<8x512xf32>
    %10 = vector.extract_strided_slice %9 {offsets = [0, 0], sizes = [8, 128], strides = [1, 1]} : vector<8x512xf32> to vector<8x128xf32>
    %11 = arith.negf %10 : vector<8x128xf32>
    %12 = math.exp %11 : vector<8x128xf32>
    %cst_5 = arith.constant 1.000000e+00 : f32
    %13 = vector.broadcast %cst_5 : f32 to vector<8x128xf32>
    %14 = arith.addf %13, %12 : vector<8x128xf32>
    %15 = arith.divf %13, %14 : vector<8x128xf32>
    %16 = vector.extract_strided_slice %9 {offsets = [0, 128], sizes = [8, 128], strides = [1, 1]} : vector<8x512xf32> to vector<8x128xf32>
    %17 = arith.negf %16 : vector<8x128xf32>
    %18 = math.exp %17 : vector<8x128xf32>
    %cst_6 = arith.constant 1.000000e+00 : f32
    %19 = vector.broadcast %cst_6 : f32 to vector<8x128xf32>
    %20 = arith.addf %19, %18 : vector<8x128xf32>
    %21 = arith.divf %19, %20 : vector<8x128xf32>
    %22 = vector.extract_strided_slice %9 {offsets = [0, 256], sizes = [8, 128], strides = [1, 1]} : vector<8x512xf32> to vector<8x128xf32>
    %23 = math.tanh %22 : vector<8x128xf32>
    %24 = vector.extract_strided_slice %9 {offsets = [0, 384], sizes = [8, 128], strides = [1, 1]} : vector<8x512xf32> to vector<8x128xf32>
    %25 = arith.negf %24 : vector<8x128xf32>
    %26 = math.exp %25 : vector<8x128xf32>
    %cst_7 = arith.constant 1.000000e+00 : f32
    %27 = vector.broadcast %cst_7 : f32 to vector<8x128xf32>
    %28 = arith.addf %27, %26 : vector<8x128xf32>
    %29 = arith.divf %27, %28 : vector<8x128xf32>
    %30 = arith.mulf %21, %1 : vector<8x128xf32>
    %31 = arith.mulf %15, %23 : vector<8x128xf32>
    %32 = arith.addf %30, %31 : vector<8x128xf32>
    %33 = math.tanh %32 : vector<8x128xf32>
    %34 = arith.mulf %29, %33 : vector<8x128xf32>
    %35 = arith.truncf %34 : vector<8x128xf32> to vector<8x128xbf16>
    %36 = arith.index_cast %c0_i32 : i32 to index
    %c0_8 = arith.constant 0 : index
    %c0_9 = arith.constant 0 : index
    %37 = vector.load %arg3[%36, %c0_8, %c0_9] : memref<8x8x128xbf16, #tpu.memory_space<vmem>>, vector<1x8x128xbf16>
    %38 = vector.shape_cast %37 : vector<1x8x128xbf16> to vector<8x128xbf16>
    %39 = vector.shape_cast %35 : vector<8x128xbf16> to vector<1x8x128xbf16>
    tpu.vector_store %arg3[%36, %c0_8, %c0_9], %39 {strides = array<i32>} : memref<8x8x128xbf16, #tpu.memory_space<vmem>>, vector<1x8x128xbf16>,
    %c1_i32 = arith.constant 1 : i32
    %40 = arith.index_cast %c1_i32 : i32 to index
    %c0_10 = arith.constant 0 : index
    %c0_11 = arith.constant 0 : index
    %41 = vector.load %arg1[%40, %c0_10, %c0_11] : memref<8x8x512xbf16, #tpu.memory_space<vmem>>, vector<1x8x512xbf16>
    %42 = vector.shape_cast %41 : vector<1x8x512xbf16> to vector<8x512xbf16>
    %43 = arith.extf %42 : vector<8x512xbf16> to vector<8x512xf32>
    %44 = arith.truncf %34 : vector<8x128xf32> to vector<8x128xbf16>
    %c0_12 = arith.constant 0 : index
    %c0_13 = arith.constant 0 : index
    %45 = vector.load %arg2[%c0_12, %c0_13] : memref<128x512xbf16, #tpu.memory_space<vmem>>, vector<128x512xbf16>
    %cst_14 = arith.constant dense<0.000000e+00> : vector<8x512xf32>
    %46 = tpu.matmul %44, %45, %cst_14 {dimension_numbers = #tpu.dot_dimension_numbers<[1], [0], [0], [1], [0, 0, 1, 1], [], []>} : vector<8x128xbf16>, vector<128x512xbf16>, vector<8x512xf32> -> vector<8x512xf32>
    %47 = arith.addf %43, %46 : vector<8x512xf32>
    %48 = vector.extract_strided_slice %47 {offsets = [0, 0], sizes = [8, 128], strides = [1, 1]} : vector<8x512xf32> to vector<8x128xf32>
    %49 = arith.negf %48 : vector<8x128xf32>
    %50 = math.exp %49 : vector<8x128xf32>
    %cst_15 = arith.constant 1.000000e+00 : f32
    %51 = vector.broadcast %cst_15 : f32 to vector<8x128xf32>
    %52 = arith.addf %51, %50 : vector<8x128xf32>
    %53 = arith.divf %51, %52 : vector<8x128xf32>
    %54 = vector.extract_strided_slice %47 {offsets = [0, 128], sizes = [8, 128], strides = [1, 1]} : vector<8x512xf32> to vector<8x128xf32>
    %55 = arith.negf %54 : vector<8x128xf32>
    %56 = math.exp %55 : vector<8x128xf32>
    %cst_16 = arith.constant 1.000000e+00 : f32
    %57 = vector.broadcast %cst_16 : f32 to vector<8x128xf32>
    %58 = arith.addf %57, %56 : vector<8x128xf32>
    %59 = arith.divf %57, %58 : vector<8x128xf32>
    %60 = vector.extract_strided_slice %47 {offsets = [0, 256], sizes = [8, 128], strides = [1, 1]} : vector<8x512xf32> to vector<8x128xf32>
    %61 = math.tanh %60 : vector<8x128xf32>
    %62 = vector.extract_strided_slice %47 {offsets = [0, 384], sizes = [8, 128], strides = [1, 1]} : vector<8x512xf32> to vector<8x128xf32>
    %63 = arith.negf %62 : vector<8x128xf32>
    %64 = math.exp %63 : vector<8x128xf32>
    %cst_17 = arith.constant 1.000000e+00 : f32
    %65 = vector.broadcast %cst_17 : f32 to vector<8x128xf32>
    %66 = arith.addf %65, %64 : vector<8x128xf32>
    %67 = arith.divf %65, %66 : vector<8x128xf32>
    %68 = arith.mulf %59, %32 : vector<8x128xf32>
    %69 = arith.mulf %53, %61 : vector<8x128xf32>
    %70 = arith.addf %68, %69 : vector<8x128xf32>
    %71 = math.tanh %70 : vector<8x128xf32>
    %72 = arith.mulf %67, %71 : vector<8x128xf32>
    %73 = arith.truncf %72 : vector<8x128xf32> to vector<8x128xbf16>
    %74 = arith.index_cast %c1_i32 : i32 to index
    %c0_18 = arith.constant 0 : index
    %c0_19 = arith.constant 0 : index
    %75 = vector.load %arg3[%74, %c0_18, %c0_19] : memref<8x8x128xbf16, #tpu.memory_space<vmem>>, vector<1x8x128xbf16>
    %76 = vector.shape_cast %75 : vector<1x8x128xbf16> to vector<8x128xbf16>
    %77 = vector.shape_cast %73 : vector<8x128xbf16> to vector<1x8x128xbf16>
    tpu.vector_store %arg3[%74, %c0_18, %c0_19], %77 {strides = array<i32>} : memref<8x8x128xbf16, #tpu.memory_space<vmem>>, vector<1x8x128xbf16>,
    %c2_i32 = arith.constant 2 : i32
    %78 = arith.index_cast %c2_i32 : i32 to index
    %c0_20 = arith.constant 0 : index
    %c0_21 = arith.constant 0 : index
    %79 = vector.load %arg1[%78, %c0_20, %c0_21] : memref<8x8x512xbf16, #tpu.memory_space<vmem>>, vector<1x8x512xbf16>
    %80 = vector.shape_cast %79 : vector<1x8x512xbf16> to vector<8x512xbf16>
    %81 = arith.extf %80 : vector<8x512xbf16> to vector<8x512xf32>
    %82 = arith.truncf %72 : vector<8x128xf32> to vector<8x128xbf16>
    %c0_22 = arith.constant 0 : index
    %c0_23 = arith.constant 0 : index
    %83 = vector.load %arg2[%c0_22, %c0_23] : memref<128x512xbf16, #tpu.memory_space<vmem>>, vector<128x512xbf16>
    %cst_24 = arith.constant dense<0.000000e+00> : vector<8x512xf32>
    %84 = tpu.matmul %82, %83, %cst_24 {dimension_numbers = #tpu.dot_dimension_numbers<[1], [0], [0], [1], [0, 0, 1, 1], [], []>} : vector<8x128xbf16>, vector<128x512xbf16>, vector<8x512xf32> -> vector<8x512xf32>
    %85 = arith.addf %81, %84 : vector<8x512xf32>
    %86 = vector.extract_strided_slice %85 {offsets = [0, 0], sizes = [8, 128], strides = [1, 1]} : vector<8x512xf32> to vector<8x128xf32>
    %87 = arith.negf %86 : vector<8x128xf32>
    %88 = math.exp %87 : vector<8x128xf32>
    %cst_25 = arith.constant 1.000000e+00 : f32
    %89 = vector.broadcast %cst_25 : f32 to vector<8x128xf32>
    %90 = arith.addf %89, %88 : vector<8x128xf32>
    %91 = arith.divf %89, %90 : vector<8x128xf32>
    %92 = vector.extract_strided_slice %85 {offsets = [0, 128], sizes = [8, 128], strides = [1, 1]} : vector<8x512xf32> to vector<8x128xf32>
    %93 = arith.negf %92 : vector<8x128xf32>
    %94 = math.exp %93 : vector<8x128xf32>
    %cst_26 = arith.constant 1.000000e+00 : f32
    %95 = vector.broadcast %cst_26 : f32 to vector<8x128xf32>
    %96 = arith.addf %95, %94 : vector<8x128xf32>
    %97 = arith.divf %95, %96 : vector<8x128xf32>
    %98 = vector.extract_strided_slice %85 {offsets = [0, 256], sizes = [8, 128], strides = [1, 1]} : vector<8x512xf32> to vector<8x128xf32>
    %99 = math.tanh %98 : vector<8x128xf32>
    %100 = vector.extract_strided_slice %85 {offsets = [0, 384], sizes = [8, 128], strides = [1, 1]} : vector<8x512xf32> to vector<8x128xf32>
    %101 = arith.negf %100 : vector<8x128xf32>
    %102 = math.exp %101 : vector<8x128xf32>
    %cst_27 = arith.constant 1.000000e+00 : f32
    %103 = vector.broadcast %cst_27 : f32 to vector<8x128xf32>
    %104 = arith.addf %103, %102 : vector<8x128xf32>
    %105 = arith.divf %103, %104 : vector<8x128xf32>
    %106 = arith.mulf %97, %70 : vector<8x128xf32>
    %107 = arith.mulf %91, %99 : vector<8x128xf32>
    %108 = arith.addf %106, %107 : vector<8x128xf32>
    %109 = math.tanh %108 : vector<8x128xf32>
    %110 = arith.mulf %105, %109 : vector<8x128xf32>
    %111 = arith.truncf %110 : vector<8x128xf32> to vector<8x128xbf16>
    %112 = arith.index_cast %c2_i32 : i32 to index
    %c0_28 = arith.constant 0 : index
    %c0_29 = arith.constant 0 : index
    %113 = vector.load %arg3[%112, %c0_28, %c0_29] : memref<8x8x128xbf16, #tpu.memory_space<vmem>>, vector<1x8x128xbf16>
    %114 = vector.shape_cast %113 : vector<1x8x128xbf16> to vector<8x128xbf16>
    %115 = vector.shape_cast %111 : vector<8x128xbf16> to vector<1x8x128xbf16>
    tpu.vector_store %arg3[%112, %c0_28, %c0_29], %115 {strides = array<i32>} : memref<8x8x128xbf16, #tpu.memory_space<vmem>>, vector<1x8x128xbf16>,
    %c3_i32 = arith.constant 3 : i32
    %116 = arith.index_cast %c3_i32 : i32 to index
    %c0_30 = arith.constant 0 : index
    %c0_31 = arith.constant 0 : index
    %117 = vector.load %arg1[%116, %c0_30, %c0_31] : memref<8x8x512xbf16, #tpu.memory_space<vmem>>, vector<1x8x512xbf16>
    %118 = vector.shape_cast %117 : vector<1x8x512xbf16> to vector<8x512xbf16>
    %119 = arith.extf %118 : vector<8x512xbf16> to vector<8x512xf32>
    %120 = arith.truncf %110 : vector<8x128xf32> to vector<8x128xbf16>
    %c0_32 = arith.constant 0 : index
    %c0_33 = arith.constant 0 : index
    %121 = vector.load %arg2[%c0_32, %c0_33] : memref<128x512xbf16, #tpu.memory_space<vmem>>, vector<128x512xbf16>
    %cst_34 = arith.constant dense<0.000000e+00> : vector<8x512xf32>
    %122 = tpu.matmul %120, %121, %cst_34 {dimension_numbers = #tpu.dot_dimension_numbers<[1], [0], [0], [1], [0, 0, 1, 1], [], []>} : vector<8x128xbf16>, vector<128x512xbf16>, vector<8x512xf32> -> vector<8x512xf32>
    %123 = arith.addf %119, %122 : vector<8x512xf32>
    %124 = vector.extract_strided_slice %123 {offsets = [0, 0], sizes = [8, 128], strides = [1, 1]} : vector<8x512xf32> to vector<8x128xf32>
    %125 = arith.negf %124 : vector<8x128xf32>
    %126 = math.exp %125 : vector<8x128xf32>
    %cst_35 = arith.constant 1.000000e+00 : f32
    %127 = vector.broadcast %cst_35 : f32 to vector<8x128xf32>
    %128 = arith.addf %127, %126 : vector<8x128xf32>
    %129 = arith.divf %127, %128 : vector<8x128xf32>
    %130 = vector.extract_strided_slice %123 {offsets = [0, 128], sizes = [8, 128], strides = [1, 1]} : vector<8x512xf32> to vector<8x128xf32>
    %131 = arith.negf %130 : vector<8x128xf32>
    %132 = math.exp %131 : vector<8x128xf32>
    %cst_36 = arith.constant 1.000000e+00 : f32
    %133 = vector.broadcast %cst_36 : f32 to vector<8x128xf32>
    %134 = arith.addf %133, %132 : vector<8x128xf32>
    %135 = arith.divf %133, %134 : vector<8x128xf32>
    %136 = vector.extract_strided_slice %123 {offsets = [0, 256], sizes = [8, 128], strides = [1, 1]} : vector<8x512xf32> to vector<8x128xf32>
    %137 = math.tanh %136 : vector<8x128xf32>
    %138 = vector.extract_strided_slice %123 {offsets = [0, 384], sizes = [8, 128], strides = [1, 1]} : vector<8x512xf32> to vector<8x128xf32>
    %139 = arith.negf %138 : vector<8x128xf32>
    %140 = math.exp %139 : vector<8x128xf32>
    %cst_37 = arith.constant 1.000000e+00 : f32
    %141 = vector.broadcast %cst_37 : f32 to vector<8x128xf32>
    %142 = arith.addf %141, %140 : vector<8x128xf32>
    %143 = arith.divf %141, %142 : vector<8x128xf32>
    %144 = arith.mulf %135, %108 : vector<8x128xf32>
    %145 = arith.mulf %129, %137 : vector<8x128xf32>
    %146 = arith.addf %144, %145 : vector<8x128xf32>
    %147 = math.tanh %146 : vector<8x128xf32>
    %148 = arith.mulf %143, %147 : vector<8x128xf32>
    %149 = arith.truncf %148 : vector<8x128xf32> to vector<8x128xbf16>
    %150 = arith.index_cast %c3_i32 : i32 to index
    %c0_38 = arith.constant 0 : index
    %c0_39 = arith.constant 0 : index
    %151 = vector.load %arg3[%150, %c0_38, %c0_39] : memref<8x8x128xbf16, #tpu.memory_space<vmem>>, vector<1x8x128xbf16>
    %152 = vector.shape_cast %151 : vector<1x8x128xbf16> to vector<8x128xbf16>
    %153 = vector.shape_cast %149 : vector<8x128xbf16> to vector<1x8x128xbf16>
    tpu.vector_store %arg3[%150, %c0_38, %c0_39], %153 {strides = array<i32>} : memref<8x8x128xbf16, #tpu.memory_space<vmem>>, vector<1x8x128xbf16>,
    %c4_i32 = arith.constant 4 : i32
    %154 = arith.index_cast %c4_i32 : i32 to index
    %c0_40 = arith.constant 0 : index
    %c0_41 = arith.constant 0 : index
    %155 = vector.load %arg1[%154, %c0_40, %c0_41] : memref<8x8x512xbf16, #tpu.memory_space<vmem>>, vector<1x8x512xbf16>
    %156 = vector.shape_cast %155 : vector<1x8x512xbf16> to vector<8x512xbf16>
    %157 = arith.extf %156 : vector<8x512xbf16> to vector<8x512xf32>
    %158 = arith.truncf %148 : vector<8x128xf32> to vector<8x128xbf16>
    %c0_42 = arith.constant 0 : index
    %c0_43 = arith.constant 0 : index
    %159 = vector.load %arg2[%c0_42, %c0_43] : memref<128x512xbf16, #tpu.memory_space<vmem>>, vector<128x512xbf16>
    %cst_44 = arith.constant dense<0.000000e+00> : vector<8x512xf32>
    %160 = tpu.matmul %158, %159, %cst_44 {dimension_numbers = #tpu.dot_dimension_numbers<[1], [0], [0], [1], [0, 0, 1, 1], [], []>} : vector<8x128xbf16>, vector<128x512xbf16>, vector<8x512xf32> -> vector<8x512xf32>
    %161 = arith.addf %157, %160 : vector<8x512xf32>
    %162 = vector.extract_strided_slice %161 {offsets = [0, 0], sizes = [8, 128], strides = [1, 1]} : vector<8x512xf32> to vector<8x128xf32>
    %163 = arith.negf %162 : vector<8x128xf32>
    %164 = math.exp %163 : vector<8x128xf32>
    %cst_45 = arith.constant 1.000000e+00 : f32
    %165 = vector.broadcast %cst_45 : f32 to vector<8x128xf32>
    %166 = arith.addf %165, %164 : vector<8x128xf32>
    %167 = arith.divf %165, %166 : vector<8x128xf32>
    %168 = vector.extract_strided_slice %161 {offsets = [0, 128], sizes = [8, 128], strides = [1, 1]} : vector<8x512xf32> to vector<8x128xf32>
    %169 = arith.negf %168 : vector<8x128xf32>
    %170 = math.exp %169 : vector<8x128xf32>
    %cst_46 = arith.constant 1.000000e+00 : f32
    %171 = vector.broadcast %cst_46 : f32 to vector<8x128xf32>
    %172 = arith.addf %171, %170 : vector<8x128xf32>
    %173 = arith.divf %171, %172 : vector<8x128xf32>
    %174 = vector.extract_strided_slice %161 {offsets = [0, 256], sizes = [8, 128], strides = [1, 1]} : vector<8x512xf32> to vector<8x128xf32>
    %175 = math.tanh %174 : vector<8x128xf32>
    %176 = vector.extract_strided_slice %161 {offsets = [0, 384], sizes = [8, 128], strides = [1, 1]} : vector<8x512xf32> to vector<8x128xf32>
    %177 = arith.negf %176 : vector<8x128xf32>
    %178 = math.exp %177 : vector<8x128xf32>
    %cst_47 = arith.constant 1.000000e+00 : f32
    %179 = vector.broadcast %cst_47 : f32 to vector<8x128xf32>
    %180 = arith.addf %179, %178 : vector<8x128xf32>
    %181 = arith.divf %179, %180 : vector<8x128xf32>
    %182 = arith.mulf %173, %146 : vector<8x128xf32>
    %183 = arith.mulf %167, %175 : vector<8x128xf32>
    %184 = arith.addf %182, %183 : vector<8x128xf32>
    %185 = math.tanh %184 : vector<8x128xf32>
    %186 = arith.mulf %181, %185 : vector<8x128xf32>
    %187 = arith.truncf %186 : vector<8x128xf32> to vector<8x128xbf16>
    %188 = arith.index_cast %c4_i32 : i32 to index
    %c0_48 = arith.constant 0 : index
    %c0_49 = arith.constant 0 : index
    %189 = vector.load %arg3[%188, %c0_48, %c0_49] : memref<8x8x128xbf16, #tpu.memory_space<vmem>>, vector<1x8x128xbf16>
    %190 = vector.shape_cast %189 : vector<1x8x128xbf16> to vector<8x128xbf16>
    %191 = vector.shape_cast %187 : vector<8x128xbf16> to vector<1x8x128xbf16>
    tpu.vector_store %arg3[%188, %c0_48, %c0_49], %191 {strides = array<i32>} : memref<8x8x128xbf16, #tpu.memory_space<vmem>>, vector<1x8x128xbf16>,
    %c5_i32 = arith.constant 5 : i32
    %192 = arith.index_cast %c5_i32 : i32 to index
    %c0_50 = arith.constant 0 : index
    %c0_51 = arith.constant 0 : index
    %193 = vector.load %arg1[%192, %c0_50, %c0_51] : memref<8x8x512xbf16, #tpu.memory_space<vmem>>, vector<1x8x512xbf16>
    %194 = vector.shape_cast %193 : vector<1x8x512xbf16> to vector<8x512xbf16>
    %195 = arith.extf %194 : vector<8x512xbf16> to vector<8x512xf32>
    %196 = arith.truncf %186 : vector<8x128xf32> to vector<8x128xbf16>
    %c0_52 = arith.constant 0 : index
    %c0_53 = arith.constant 0 : index
    %197 = vector.load %arg2[%c0_52, %c0_53] : memref<128x512xbf16, #tpu.memory_space<vmem>>, vector<128x512xbf16>
    %cst_54 = arith.constant dense<0.000000e+00> : vector<8x512xf32>
    %198 = tpu.matmul %196, %197, %cst_54 {dimension_numbers = #tpu.dot_dimension_numbers<[1], [0], [0], [1], [0, 0, 1, 1], [], []>} : vector<8x128xbf16>, vector<128x512xbf16>, vector<8x512xf32> -> vector<8x512xf32>
    %199 = arith.addf %195, %198 : vector<8x512xf32>
    %200 = vector.extract_strided_slice %199 {offsets = [0, 0], sizes = [8, 128], strides = [1, 1]} : vector<8x512xf32> to vector<8x128xf32>
    %201 = arith.negf %200 : vector<8x128xf32>
    %202 = math.exp %201 : vector<8x128xf32>
    %cst_55 = arith.constant 1.000000e+00 : f32
    %203 = vector.broadcast %cst_55 : f32 to vector<8x128xf32>
    %204 = arith.addf %203, %202 : vector<8x128xf32>
    %205 = arith.divf %203, %204 : vector<8x128xf32>
    %206 = vector.extract_strided_slice %199 {offsets = [0, 128], sizes = [8, 128], strides = [1, 1]} : vector<8x512xf32> to vector<8x128xf32>
    %207 = arith.negf %206 : vector<8x128xf32>
    %208 = math.exp %207 : vector<8x128xf32>
    %cst_56 = arith.constant 1.000000e+00 : f32
    %209 = vector.broadcast %cst_56 : f32 to vector<8x128xf32>
    %210 = arith.addf %209, %208 : vector<8x128xf32>
    %211 = arith.divf %209, %210 : vector<8x128xf32>
    %212 = vector.extract_strided_slice %199 {offsets = [0, 256], sizes = [8, 128], strides = [1, 1]} : vector<8x512xf32> to vector<8x128xf32>
    %213 = math.tanh %212 : vector<8x128xf32>
    %214 = vector.extract_strided_slice %199 {offsets = [0, 384], sizes = [8, 128], strides = [1, 1]} : vector<8x512xf32> to vector<8x128xf32>
    %215 = arith.negf %214 : vector<8x128xf32>
    %216 = math.exp %215 : vector<8x128xf32>
    %cst_57 = arith.constant 1.000000e+00 : f32
    %217 = vector.broadcast %cst_57 : f32 to vector<8x128xf32>
    %218 = arith.addf %217, %216 : vector<8x128xf32>
    %219 = arith.divf %217, %218 : vector<8x128xf32>
    %220 = arith.mulf %211, %184 : vector<8x128xf32>
    %221 = arith.mulf %205, %213 : vector<8x128xf32>
    %222 = arith.addf %220, %221 : vector<8x128xf32>
    %223 = math.tanh %222 : vector<8x128xf32>
    %224 = arith.mulf %219, %223 : vector<8x128xf32>
    %225 = arith.truncf %224 : vector<8x128xf32> to vector<8x128xbf16>
    %226 = arith.index_cast %c5_i32 : i32 to index
    %c0_58 = arith.constant 0 : index
    %c0_59 = arith.constant 0 : index
    %227 = vector.load %arg3[%226, %c0_58, %c0_59] : memref<8x8x128xbf16, #tpu.memory_space<vmem>>, vector<1x8x128xbf16>
    %228 = vector.shape_cast %227 : vector<1x8x128xbf16> to vector<8x128xbf16>
    %229 = vector.shape_cast %225 : vector<8x128xbf16> to vector<1x8x128xbf16>
    tpu.vector_store %arg3[%226, %c0_58, %c0_59], %229 {strides = array<i32>} : memref<8x8x128xbf16, #tpu.memory_space<vmem>>, vector<1x8x128xbf16>,
    %c6_i32 = arith.constant 6 : i32
    %230 = arith.index_cast %c6_i32 : i32 to index
    %c0_60 = arith.constant 0 : index
    %c0_61 = arith.constant 0 : index
    %231 = vector.load %arg1[%230, %c0_60, %c0_61] : memref<8x8x512xbf16, #tpu.memory_space<vmem>>, vector<1x8x512xbf16>
    %232 = vector.shape_cast %231 : vector<1x8x512xbf16> to vector<8x512xbf16>
    %233 = arith.extf %232 : vector<8x512xbf16> to vector<8x512xf32>
    %234 = arith.truncf %224 : vector<8x128xf32> to vector<8x128xbf16>
    %c0_62 = arith.constant 0 : index
    %c0_63 = arith.constant 0 : index
    %235 = vector.load %arg2[%c0_62, %c0_63] : memref<128x512xbf16, #tpu.memory_space<vmem>>, vector<128x512xbf16>
    %cst_64 = arith.constant dense<0.000000e+00> : vector<8x512xf32>
    %236 = tpu.matmul %234, %235, %cst_64 {dimension_numbers = #tpu.dot_dimension_numbers<[1], [0], [0], [1], [0, 0, 1, 1], [], []>} : vector<8x128xbf16>, vector<128x512xbf16>, vector<8x512xf32> -> vector<8x512xf32>
    %237 = arith.addf %233, %236 : vector<8x512xf32>
    %238 = vector.extract_strided_slice %237 {offsets = [0, 0], sizes = [8, 128], strides = [1, 1]} : vector<8x512xf32> to vector<8x128xf32>
    %239 = arith.negf %238 : vector<8x128xf32>
    %240 = math.exp %239 : vector<8x128xf32>
    %cst_65 = arith.constant 1.000000e+00 : f32
    %241 = vector.broadcast %cst_65 : f32 to vector<8x128xf32>
    %242 = arith.addf %241, %240 : vector<8x128xf32>
    %243 = arith.divf %241, %242 : vector<8x128xf32>
    %244 = vector.extract_strided_slice %237 {offsets = [0, 128], sizes = [8, 128], strides = [1, 1]} : vector<8x512xf32> to vector<8x128xf32>
    %245 = arith.negf %244 : vector<8x128xf32>
    %246 = math.exp %245 : vector<8x128xf32>
    %cst_66 = arith.constant 1.000000e+00 : f32
    %247 = vector.broadcast %cst_66 : f32 to vector<8x128xf32>
    %248 = arith.addf %247, %246 : vector<8x128xf32>
    %249 = arith.divf %247, %248 : vector<8x128xf32>
    %250 = vector.extract_strided_slice %237 {offsets = [0, 256], sizes = [8, 128], strides = [1, 1]} : vector<8x512xf32> to vector<8x128xf32>
    %251 = math.tanh %250 : vector<8x128xf32>
    %252 = vector.extract_strided_slice %237 {offsets = [0, 384], sizes = [8, 128], strides = [1, 1]} : vector<8x512xf32> to vector<8x128xf32>
    %253 = arith.negf %252 : vector<8x128xf32>
    %254 = math.exp %253 : vector<8x128xf32>
    %cst_67 = arith.constant 1.000000e+00 : f32
    %255 = vector.broadcast %cst_67 : f32 to vector<8x128xf32>
    %256 = arith.addf %255, %254 : vector<8x128xf32>
    %257 = arith.divf %255, %256 : vector<8x128xf32>
    %258 = arith.mulf %249, %222 : vector<8x128xf32>
    %259 = arith.mulf %243, %251 : vector<8x128xf32>
    %260 = arith.addf %258, %259 : vector<8x128xf32>
    %261 = math.tanh %260 : vector<8x128xf32>
    %262 = arith.mulf %257, %261 : vector<8x128xf32>
    %263 = arith.truncf %262 : vector<8x128xf32> to vector<8x128xbf16>
    %264 = arith.index_cast %c6_i32 : i32 to index
    %c0_68 = arith.constant 0 : index
    %c0_69 = arith.constant 0 : index
    %265 = vector.load %arg3[%264, %c0_68, %c0_69] : memref<8x8x128xbf16, #tpu.memory_space<vmem>>, vector<1x8x128xbf16>
    %266 = vector.shape_cast %265 : vector<1x8x128xbf16> to vector<8x128xbf16>
    %267 = vector.shape_cast %263 : vector<8x128xbf16> to vector<1x8x128xbf16>
    tpu.vector_store %arg3[%264, %c0_68, %c0_69], %267 {strides = array<i32>} : memref<8x8x128xbf16, #tpu.memory_space<vmem>>, vector<1x8x128xbf16>,
    %c7_i32 = arith.constant 7 : i32
    %268 = arith.index_cast %c7_i32 : i32 to index
    %c0_70 = arith.constant 0 : index
    %c0_71 = arith.constant 0 : index
    %269 = vector.load %arg1[%268, %c0_70, %c0_71] : memref<8x8x512xbf16, #tpu.memory_space<vmem>>, vector<1x8x512xbf16>
    %270 = vector.shape_cast %269 : vector<1x8x512xbf16> to vector<8x512xbf16>
    %271 = arith.extf %270 : vector<8x512xbf16> to vector<8x512xf32>
    %272 = arith.truncf %262 : vector<8x128xf32> to vector<8x128xbf16>
    %c0_72 = arith.constant 0 : index
    %c0_73 = arith.constant 0 : index
    %273 = vector.load %arg2[%c0_72, %c0_73] : memref<128x512xbf16, #tpu.memory_space<vmem>>, vector<128x512xbf16>
    %cst_74 = arith.constant dense<0.000000e+00> : vector<8x512xf32>
    %274 = tpu.matmul %272, %273, %cst_74 {dimension_numbers = #tpu.dot_dimension_numbers<[1], [0], [0], [1], [0, 0, 1, 1], [], []>} : vector<8x128xbf16>, vector<128x512xbf16>, vector<8x512xf32> -> vector<8x512xf32>
    %275 = arith.addf %271, %274 : vector<8x512xf32>
    %276 = vector.extract_strided_slice %275 {offsets = [0, 0], sizes = [8, 128], strides = [1, 1]} : vector<8x512xf32> to vector<8x128xf32>
    %277 = arith.negf %276 : vector<8x128xf32>
    %278 = math.exp %277 : vector<8x128xf32>
    %cst_75 = arith.constant 1.000000e+00 : f32
    %279 = vector.broadcast %cst_75 : f32 to vector<8x128xf32>
    %280 = arith.addf %279, %278 : vector<8x128xf32>
    %281 = arith.divf %279, %280 : vector<8x128xf32>
    %282 = vector.extract_strided_slice %275 {offsets = [0, 128], sizes = [8, 128], strides = [1, 1]} : vector<8x512xf32> to vector<8x128xf32>
    %283 = arith.negf %282 : vector<8x128xf32>
    %284 = math.exp %283 : vector<8x128xf32>
    %cst_76 = arith.constant 1.000000e+00 : f32
    %285 = vector.broadcast %cst_76 : f32 to vector<8x128xf32>
    %286 = arith.addf %285, %284 : vector<8x128xf32>
    %287 = arith.divf %285, %286 : vector<8x128xf32>
    %288 = vector.extract_strided_slice %275 {offsets = [0, 256], sizes = [8, 128], strides = [1, 1]} : vector<8x512xf32> to vector<8x128xf32>
    %289 = math.tanh %288 : vector<8x128xf32>
    %290 = vector.extract_strided_slice %275 {offsets = [0, 384], sizes = [8, 128], strides = [1, 1]} : vector<8x512xf32> to vector<8x128xf32>
    %291 = arith.negf %290 : vector<8x128xf32>
    %292 = math.exp %291 : vector<8x128xf32>
    %cst_77 = arith.constant 1.000000e+00 : f32
    %293 = vector.broadcast %cst_77 : f32 to vector<8x128xf32>
    %294 = arith.addf %293, %292 : vector<8x128xf32>
    %295 = arith.divf %293, %294 : vector<8x128xf32>
    %296 = arith.mulf %287, %260 : vector<8x128xf32>
    %297 = arith.mulf %281, %289 : vector<8x128xf32>
    %298 = arith.addf %296, %297 : vector<8x128xf32>
    %299 = math.tanh %298 : vector<8x128xf32>
    %300 = arith.mulf %295, %299 : vector<8x128xf32>
    %301 = arith.truncf %300 : vector<8x128xf32> to vector<8x128xbf16>
    %302 = arith.index_cast %c7_i32 : i32 to index
    %c0_78 = arith.constant 0 : index
    %c0_79 = arith.constant 0 : index
    %303 = vector.load %arg3[%302, %c0_78, %c0_79] : memref<8x8x128xbf16, #tpu.memory_space<vmem>>, vector<1x8x128xbf16>
    %304 = vector.shape_cast %303 : vector<1x8x128xbf16> to vector<8x128xbf16>
    %305 = vector.shape_cast %301 : vector<8x128xbf16> to vector<1x8x128xbf16>
    tpu.vector_store %arg3[%302, %c0_78, %c0_79], %305 {strides = array<i32>} : memref<8x8x128xbf16, #tpu.memory_space<vmem>>, vector<1x8x128xbf16>,
    %c8_i32 = arith.constant 8 : i32
    return
  }
  func.func @transform_0(%arg0: i32) -> (i32, i32, i32) {
    %c0_i32 = arith.constant 0 : i32
    %c0_i32_0 = arith.constant 0 : i32
    %c0_i32_1 = arith.constant 0 : i32
    return %c0_i32, %arg0, %c0_i32_0 : i32, i32, i32
  }
  func.func @transform_1(%arg0: i32) -> (i32, i32) {
    %c0_i32 = arith.constant 0 : i32
    %c0_i32_0 = arith.constant 0 : i32
    %c0_i32_1 = arith.constant 0 : i32
    return %c0_i32, %c0_i32_0 : i32, i32
  }
  func.func @transform_2(%arg0: i32) -> (i32, i32, i32) {
    %c0_i32 = arith.constant 0 : i32
    %c0_i32_0 = arith.constant 0 : i32
    %c0_i32_1 = arith.constant 0 : i32
    return %c0_i32, %arg0, %c0_i32_0 : i32, i32, i32
  }
}

</mosaic_0001>

<llo_original>
// kernel: image_captioner_forward.5
$region0: #{image_captioner_forward.5}
  #allocation0 [shape = 'u32[]', space=smem, size = 0x4, offset = 0x4, fixed_abs, tag = 'smem constant byte address 0x4 - core index']
  #allocation1 [shape = 'u32[72,128]{1,0:T(1,128)}', space=vmem, size = 0x9000, scoped, tag = 'internal scratch']
  %s0 = inlined_call_operand.vmem [shape: bf16[64,128], index: 0, kind: input, shape index: {}]
  %s1 = inlined_call_operand.vmem [shape: bf16[128,128], index: 1, kind: input, shape index: {}]
  %s2 = inlined_call_operand.vmem [shape: f32[1,128], index: 2, kind: input, shape index: {}]
  %s3 = inlined_call_operand.vmem [shape: f32[64,128], index: 3, kind: output, shape index: {}]
  %s4 = sld [smem:[#allocation0]]
  $region22: #{image_captioner_forward.5} parent=0
    _
  %s6 = ssub.s32 1, %s4
  %s7 = scalar_select 0, %s6, %s4
  // Predicated region
  $region2: #{image_captioner_forward.5} parent=0 // pred_check
    _
  $region3: #{image_captioner_forward.5} parent=0 // pred_check_branch
    %9 = sbr.rel (0) target = $region5
  $region4: #{image_captioner_forward.5} parent=0 // pred_region
    _
  $region5: #{image_captioner_forward.5} parent=0 // pred_fallthru
    _
  // Predicated region
  $region6: #{image_captioner_forward.5} parent=0 // pred_check
    _
  $region7: #{image_captioner_forward.5} parent=0 // pred_check_branch
    %11 = sbr.rel (0) target = $region9
  $region8: #{image_captioner_forward.5} parent=0 // pred_region
    _
  $region9: #{image_captioner_forward.5} parent=0 // pred_fallthru
    _
  // Predicated region
  $region10: #{image_captioner_forward.5} parent=0 // pred_check
    _
  $region11: #{image_captioner_forward.5} parent=0 // pred_check_branch
    %13 = sbr.rel (0) target = $region13
  $region12: #{image_captioner_forward.5} parent=0 // pred_region
    _
  $region13: #{image_captioner_forward.5} parent=0 // pred_fallthru
    _
  %v14 = vld [vmem:[%s0] sm:$0xf]
  %v15 = vld [vmem:[%s0 + $0x4] sm:$0xf]
  %v16 = vld [vmem:[%s0 + $0x8] sm:$0xf]
  %v17 = vld [vmem:[%s0 + $0xc] sm:$0xf]
  %v18 = vld [vmem:[%s0 + $0x10] sm:$0xf]
  %v19 = vld [vmem:[%s0 + $0x14] sm:$0xf]
  %v20 = vld [vmem:[%s0 + $0x18] sm:$0xf]
  %v21 = vld [vmem:[%s0 + $0x1c] sm:$0xf]
  %v22 = vld [vmem:[%s1] sm:$0xf]
  %v23 = vld [vmem:[%s1 + $0x4] sm:$0xf]
  %v24 = vld [vmem:[%s1 + $0x8] sm:$0xf]
  %v25 = vld [vmem:[%s1 + $0xc] sm:$0xf]
  %v26 = vld [vmem:[%s1 + $0x10] sm:$0xf]
  %v27 = vld [vmem:[%s1 + $0x14] sm:$0xf]
  %v28 = vld [vmem:[%s1 + $0x18] sm:$0xf]
  %v29 = vld [vmem:[%s1 + $0x1c] sm:$0xf]
  %v30 = vld [vmem:[%s1 + $0x20] sm:$0xf]
  %v31 = vld [vmem:[%s1 + $0x24] sm:$0xf]
  %v32 = vld [vmem:[%s1 + $0x28] sm:$0xf]
  %v33 = vld [vmem:[%s1 + $0x2c] sm:$0xf]
  %v34 = vld [vmem:[%s1 + $0x30] sm:$0xf]
  %v35 = vld [vmem:[%s1 + $0x34] sm:$0xf]
  %v36 = vld [vmem:[%s1 + $0x38] sm:$0xf]
  %v37 = vld [vmem:[%s1 + $0x3c] sm:$0xf]
  %v38 = vld [vmem:[%s2] sm:$0x1]
  %v40 = vperm.slane %v38, 0
  %v50 = vunpack.c.l.b16 %v14
  %v51 = vunpack.c.l.b16 %v15
  %v52 = vunpack.c.l.b16 %v16
  %v53 = vunpack.c.l.b16 %v17
  %v54 = vunpack.c.l.b16 %v18
  %v55 = vunpack.c.l.b16 %v19
  %v56 = vunpack.c.l.b16 %v20
  %v57 = vunpack.c.l.b16 %v21
  %v58 = vpack.c.b16 %v51, %v50
  %v59 = vpack.c.b16 %v53, %v52
  %v60 = vpack.c.b16 %v55, %v54
  %v61 = vpack.c.b16 %v57, %v56
  %v82 = vunpack.c.l.b16 %v22
  %v83 = vunpack.c.l.b16 %v23
  %v84 = vunpack.c.l.b16 %v24
  %v85 = vunpack.c.l.b16 %v25
  %v86 = vunpack.c.l.b16 %v26
  %v87 = vunpack.c.l.b16 %v27
  %v88 = vunpack.c.l.b16 %v28
  %v89 = vunpack.c.l.b16 %v29
  %v90 = vunpack.c.l.b16 %v30
  %v91 = vunpack.c.l.b16 %v31
  %v92 = vunpack.c.l.b16 %v32
  %v93 = vunpack.c.l.b16 %v33
  %v94 = vunpack.c.l.b16 %v34
  %v95 = vunpack.c.l.b16 %v35
  %v96 = vunpack.c.l.b16 %v36
  %v97 = vunpack.c.l.b16 %v37
  %v98 = vpack.c.b16 %v83, %v82
  %v99 = vpack.c.b16 %v85, %v84
  %v100 = vpack.c.b16 %v87, %v86
  %v101 = vpack.c.b16 %v89, %v88
  %v102 = vpack.c.b16 %v91, %v90
  %v103 = vpack.c.b16 %v93, %v92
  %v104 = vpack.c.b16 %v95, %v94
  %v105 = vpack.c.b16 %v97, %v96
  %114 = vmatpush.bf16.msra.mxu0 %v105
  %115 = vmatpush.bf16.msra.mxu0 %v104
  %116 = vmatpush.bf16.msra.mxu0 %v103
  %117 = vmatpush.bf16.msra.mxu0 %v102
  %118 = vmatpush.bf16.msra.mxu0 %v101
  %119 = vmatpush.bf16.msra.mxu0 %v100
  %120 = vmatpush.bf16.msra.mxu0 %v99
  %121 = vmatpush.bf16.msra.mxu0 %v98
  %122 = vmatmul.bf16.gmra.mxu0 %v58
  %v123 = vpop.f32.mrf.mxu0
  %v124 = vadd.f32 %v40, %v123
  %v125 = vpop.f32.mrf.mxu0
  %v126 = vadd.f32 %v40, %v125
  %127 = vmatmul.bf16.gmra.mxu0 %v59
  %v128 = vpop.f32.mrf.mxu0
  %v129 = vadd.f32 %v40, %v128
  %v130 = vpop.f32.mrf.mxu0
  %v131 = vadd.f32 %v40, %v130
  %132 = vmatmul.bf16.gmra.mxu0 %v60
  %v133 = vpop.f32.mrf.mxu0
  %v134 = vadd.f32 %v40, %v133
  %v135 = vpop.f32.mrf.mxu0
  %v136 = vadd.f32 %v40, %v135
  %137 = vmatmul.bf16.gmra.mxu0 %v61
  %v138 = vpop.f32.mrf.mxu0
  %v139 = vadd.f32 %v40, %v138
  %v140 = vpop.f32.mrf.mxu0
  %v141 = vadd.f32 %v40, %v140
  %142 = vdwg.mxu0
  %143 = vst [vmem:[%s3] sm:$0xff] %v124
  %144 = vst [vmem:[%s3 + $0x8] sm:$0xff] %v126
  %145 = vst [vmem:[%s3 + $0x10] sm:$0xff] %v129
  %146 = vst [vmem:[%s3 + $0x18] sm:$0xff] %v131
  %147 = vst [vmem:[%s3 + $0x20] sm:$0xff] %v134
  %148 = vst [vmem:[%s3 + $0x28] sm:$0xff] %v136
  %149 = vst [vmem:[%s3 + $0x30] sm:$0xff] %v139
  %150 = vst [vmem:[%s3 + $0x38] sm:$0xff] %v141
  // Predicated region
  $region14: #{image_captioner_forward.5} parent=0 // pred_check
    _
  $region15: #{image_captioner_forward.5} parent=0 // pred_check_branch
    %152 = sbr.rel (0) target = $region17
  $region16: #{image_captioner_forward.5} parent=0 // pred_region
    _
  $region17: #{image_captioner_forward.5} parent=0 // pred_fallthru
    _
  // Predicated region
  $region18: #{image_captioner_forward.5} parent=0 // pred_check
    _
  $region19: #{image_captioner_forward.5} parent=0 // pred_check_branch
    %154 = sbr.rel (0) target = $region21
  $region20: #{image_captioner_forward.5} parent=0 // pred_region
    _
  $region21: #{image_captioner_forward.5} parent=0 // pred_fallthru
    _

// kernel: image_captioner_forward.3
$region0: #{image_captioner_forward.3}
  #allocation0 [shape = 'u32[]', space=smem, size = 0x4, offset = 0x4, fixed_abs, tag = 'smem constant byte address 0x4 - core index']
  #allocation1 [shape = 'u32[72,128]{1,0:T(1,128)}', space=vmem, size = 0x9000, scoped, tag = 'internal scratch']
  %s0 = inlined_call_operand.vmem [shape: bf16[64,128], index: 0, kind: input, shape index: {}]
  %s1 = inlined_call_operand.hbm [shape: bf16[128,512], index: 1, kind: input, shape index: {}]
  %s2 = inlined_call_operand.vmem [shape: f32[1,512], index: 2, kind: input, shape index: {}]
  %s3 = inlined_call_operand.vmem [shape: bf16[64,512], index: 3, kind: output, shape index: {}]
  %s4 = sld [smem:[#allocation0]]
  $region26: #{image_captioner_forward.3} parent=0
    _
  %s6 = ssub.s32 1, %s4
  %s7 = scalar_select 0, %s6, %s4
  $region1: #{image_captioner_forward.3} parent=0
    #allocation2 [shape = 'u8[131072]{0}', space=vmem, size = 0x20000, scoped, tag = 'input window, operand 1, single buffered']
    #allocation3 [shape = 's32[1]{0}', space=sflag, size = 0x4, scoped, tag = 'scoped memory for image_captioner_forward.3']
    %8 = vsyncpa [#allocation3], 0
    // Predicated region
    $region2: #{image_captioner_forward.3} parent=1 // pred_check
      _
    $region3: #{image_captioner_forward.3} parent=1 // pred_check_branch
      %10 = sbr.rel (0) target = $region5
    $region4: #{image_captioner_forward.3} parent=1 // pred_region
      _
    $region5: #{image_captioner_forward.3} parent=1 // pred_fallthru
      _
    // Predicated region
    $region6: #{image_captioner_forward.3} parent=1 // pred_check
      _
    $region7: #{image_captioner_forward.3} parent=1 // pred_check_branch
      %12 = sbr.rel (0) target = $region9
    $region8: #{image_captioner_forward.3} parent=1 // pred_region
      %14 = vsyncadd [#allocation3], 0
      %s15 = sshll.u32 %s1, 4
      %s16 = int_to_ptr.hbm [resolvable:$true] %s15
      %s17 = sshll.u32 [#allocation2], 4
      %s18 = int_to_ptr.vmem [resolvable:$true] %s17
      %23 = dma.hbm_to_vmem [thread:$0]  %s16, 4096, %s18, [#allocation3], 256, 256, 16
    $region9: #{image_captioner_forward.3} parent=1 // pred_fallthru
      _
    // Predicated region
    $region10: #{image_captioner_forward.3} parent=1 // pred_check
      _
    $region11: #{image_captioner_forward.3} parent=1 // pred_check_branch
      %25 = sbr.rel (0) target = $region13
    $region12: #{image_captioner_forward.3} parent=1 // pred_region
      _
    $region13: #{image_captioner_forward.3} parent=1 // pred_fallthru
      _
    // Predicated region
    $region14: #{image_captioner_forward.3} parent=1 // pred_check
      _
    $region15: #{image_captioner_forward.3} parent=1 // pred_check_branch
      %27 = sbr.rel (0) target = $region17
    $region16: #{image_captioner_forward.3} parent=1 // pred_region
      %29 = dma.done [#allocation3], 4096
    $region17: #{image_captioner_forward.3} parent=1 // pred_fallthru
      _
    %v30 = vld [vmem:[%s0] sm:$0xf]
    %v31 = vld [vmem:[%s0 + $0x4] sm:$0xf]
    %v32 = vld [vmem:[%s0 + $0x8] sm:$0xf]
    %v33 = vld [vmem:[%s0 + $0xc] sm:$0xf]
    %v34 = vld [vmem:[%s0 + $0x10] sm:$0xf]
    %v35 = vld [vmem:[%s0 + $0x14] sm:$0xf]
    %v36 = vld [vmem:[%s0 + $0x18] sm:$0xf]
    %v37 = vld [vmem:[%s0 + $0x1c] sm:$0xf]
    %v38 = vld [vmem:[#allocation2] sm:$0xff]
    %v39 = vld [vmem:[#allocation2 + $0x8] sm:$0xff]
    %v40 = vld [vmem:[#allocation2 + $0x10] sm:$0xff]
    %v41 = vld [vmem:[#allocation2 + $0x18] sm:$0xff]
    %v42 = vld [vmem:[#allocation2 + $0x20] sm:$0xff]
    %v43 = vld [vmem:[#allocation2 + $0x28] sm:$0xff]
    %v44 = vld [vmem:[#allocation2 + $0x30] sm:$0xff]
    %v45 = vld [vmem:[#allocation2 + $0x38] sm:$0xff]
    %v46 = vld [vmem:[#allocation2 + $0x40] sm:$0xff]
    %v47 = vld [vmem:[#allocation2 + $0x48] sm:$0xff]
    %v48 = vld [vmem:[#allocation2 + $0x50] sm:$0xff]
    %v49 = vld [vmem:[#allocation2 + $0x58] sm:$0xff]
    %v50 = vld [vmem:[#allocation2 + $0x60] sm:$0xff]
    %v51 = vld [vmem:[#allocation2 + $0x68] sm:$0xff]
    %v52 = vld [vmem:[#allocation2 + $0x70] sm:$0xff]
    %v53 = vld [vmem:[#allocation2 + $0x78] sm:$0xff]
    %v54 = vld [vmem:[#allocation2 + $0x80] sm:$0xff]
    %v55 = vld [vmem:[#allocation2 + $0x88] sm:$0xff]
    %v56 = vld [vmem:[#allocation2 + $0x90] sm:$0xff]
    %v57 = vld [vmem:[#allocation2 + $0x98] sm:$0xff]
    %v58 = vld [vmem:[#allocation2 + $0xa0] sm:$0xff]
    %v59 = vld [vmem:[#allocation2 + $0xa8] sm:$0xff]
    %v60 = vld [vmem:[#allocation2 + $0xb0] sm:$0xff]
    %v61 = vld [vmem:[#allocation2 + $0xb8] sm:$0xff]
    %v62 = vld [vmem:[#allocation2 + $0xc0] sm:$0xff]
    %v63 = vld [vmem:[#allocation2 + $0xc8] sm:$0xff]
    %v64 = vld [vmem:[#allocation2 + $0xd0] sm:$0xff]
    %v65 = vld [vmem:[#allocation2 + $0xd8] sm:$0xff]
    %v66 = vld [vmem:[#allocation2 + $0xe0] sm:$0xff]
    %v67 = vld [vmem:[#allocation2 + $0xe8] sm:$0xff]
    %v68 = vld [vmem:[#allocation2 + $0xf0] sm:$0xff]
    %v69 = vld [vmem:[#allocation2 + $0xf8] sm:$0xff]
    %v70 = vld [vmem:[%s2] sm:$0xf]
    %v72 = vperm.slane %v70, 0
    %v73 = vperm.slane %v70, 1
    %v74 = vperm.slane %v70, 2
    %v75 = vperm.slane %v70, 3
    %v88 = vunpack.c.l.b16 %v30
    %v89 = vunpack.c.l.b16 %v31
    %v90 = vunpack.c.l.b16 %v32
    %v91 = vunpack.c.l.b16 %v33
    %v92 = vunpack.c.l.b16 %v34
    %v93 = vunpack.c.l.b16 %v35
    %v94 = vunpack.c.l.b16 %v36
    %v95 = vunpack.c.l.b16 %v37
    %v96 = vpack.c.b16 %v89, %v88
    %v97 = vpack.c.b16 %v91, %v90
    %v98 = vpack.c.b16 %v93, %v92
    %v99 = vpack.c.b16 %v95, %v94
    %v136 = vunpack.c.l.b16 %v38
    %v137 = vunpack.c.h.b16 %v38
    %v138 = vunpack.c.l.b16 %v39
    %v139 = vunpack.c.h.b16 %v39
    %v140 = vunpack.c.l.b16 %v40
    %v141 = vunpack.c.h.b16 %v40
    %v142 = vunpack.c.l.b16 %v41
    %v143 = vunpack.c.h.b16 %v41
    %v144 = vunpack.c.l.b16 %v42
    %v145 = vunpack.c.h.b16 %v42
    %v146 = vunpack.c.l.b16 %v43
    %v147 = vunpack.c.h.b16 %v43
    %v148 = vunpack.c.l.b16 %v44
    %v149 = vunpack.c.h.b16 %v44
    %v150 = vunpack.c.l.b16 %v45
    %v151 = vunpack.c.h.b16 %v45
    %v152 = vunpack.c.l.b16 %v46
    %v153 = vunpack.c.h.b16 %v46
    %v154 = vunpack.c.l.b16 %v47
    %v155 = vunpack.c.h.b16 %v47
    %v156 = vunpack.c.l.b16 %v48
    %v157 = vunpack.c.h.b16 %v48
    %v158 = vunpack.c.l.b16 %v49
    %v159 = vunpack.c.h.b16 %v49
    %v160 = vunpack.c.l.b16 %v50
    %v161 = vunpack.c.h.b16 %v50
    %v162 = vunpack.c.l.b16 %v51
    %v163 = vunpack.c.h.b16 %v51
    %v164 = vunpack.c.l.b16 %v52
    %v165 = vunpack.c.h.b16 %v52
    %v166 = vunpack.c.l.b16 %v53
    %v167 = vunpack.c.h.b16 %v53
    %v168 = vunpack.c.l.b16 %v54
    %v169 = vunpack.c.h.b16 %v54
    %v170 = vunpack.c.l.b16 %v55
    %v171 = vunpack.c.h.b16 %v55
    %v172 = vunpack.c.l.b16 %v56
    %v173 = vunpack.c.h.b16 %v56
    %v174 = vunpack.c.l.b16 %v57
    %v175 = vunpack.c.h.b16 %v57
    %v176 = vunpack.c.l.b16 %v58
    %v177 = vunpack.c.h.b16 %v58
    %v178 = vunpack.c.l.b16 %v59
    %v179 = vunpack.c.h.b16 %v59
    %v180 = vunpack.c.l.b16 %v60
    %v181 = vunpack.c.h.b16 %v60
    %v182 = vunpack.c.l.b16 %v61
    %v183 = vunpack.c.h.b16 %v61
    %v184 = vunpack.c.l.b16 %v62
    %v185 = vunpack.c.h.b16 %v62
    %v186 = vunpack.c.l.b16 %v63
    %v187 = vunpack.c.h.b16 %v63
    %v188 = vunpack.c.l.b16 %v64
    %v189 = vunpack.c.h.b16 %v64
    %v190 = vunpack.c.l.b16 %v65
    %v191 = vunpack.c.h.b16 %v65
    %v192 = vunpack.c.l.b16 %v66
    %v193 = vunpack.c.h.b16 %v66
    %v194 = vunpack.c.l.b16 %v67
    %v195 = vunpack.c.h.b16 %v67
    %v196 = vunpack.c.l.b16 %v68
    %v197 = vunpack.c.h.b16 %v68
    %v198 = vunpack.c.l.b16 %v69
    %v199 = vunpack.c.h.b16 %v69
    %v200 = vpack.c.b16 %v140, %v136
    %v201 = vpack.c.b16 %v141, %v137
    %v202 = vpack.c.b16 %v142, %v138
    %v203 = vpack.c.b16 %v143, %v139
    %v204 = vpack.c.b16 %v148, %v144
    %v205 = vpack.c.b16 %v149, %v145
    %v206 = vpack.c.b16 %v150, %v146
    %v207 = vpack.c.b16 %v151, %v147
    %v208 = vpack.c.b16 %v156, %v152
    %v209 = vpack.c.b16 %v157, %v153
    %v210 = vpack.c.b16 %v158, %v154
    %v211 = vpack.c.b16 %v159, %v155
    %v212 = vpack.c.b16 %v164, %v160
    %v213 = vpack.c.b16 %v165, %v161
    %v214 = vpack.c.b16 %v166, %v162
    %v215 = vpack.c.b16 %v167, %v163
    %v216 = vpack.c.b16 %v172, %v168
    %v217 = vpack.c.b16 %v173, %v169
    %v218 = vpack.c.b16 %v174, %v170
    %v219 = vpack.c.b16 %v175, %v171
    %v220 = vpack.c.b16 %v180, %v176
    %v221 = vpack.c.b16 %v181, %v177
    %v222 = vpack.c.b16 %v182, %v178
    %v223 = vpack.c.b16 %v183, %v179
    %v224 = vpack.c.b16 %v188, %v184
    %v225 = vpack.c.b16 %v189, %v185
    %v226 = vpack.c.b16 %v190, %v186
    %v227 = vpack.c.b16 %v191, %v187
    %v228 = vpack.c.b16 %v196, %v192
    %v229 = vpack.c.b16 %v197, %v193
    %v230 = vpack.c.b16 %v198, %v194
    %v231 = vpack.c.b16 %v199, %v195
    %264 = vmatpush.bf16.msra.mxu0 %v228
    %265 = vmatpush.bf16.msra.mxu0 %v224
    %266 = vmatpush.bf16.msra.mxu0 %v220
    %267 = vmatpush.bf16.msra.mxu0 %v216
    %268 = vmatpush.bf16.msra.mxu0 %v212
    %269 = vmatpush.bf16.msra.mxu0 %v208
    %270 = vmatpush.bf16.msra.mxu0 %v204
    %271 = vmatpush.bf16.msra.mxu0 %v200
    %272 = vmatmul.bf16.gmra.mxu0 %v96
    %v273 = vpop.f32.mrf.mxu0
    %v274 = vadd.f32 %v72, %v273
    %v275 = vpop.f32.mrf.mxu0
    %v276 = vadd.f32 %v72, %v275
    %277 = vmatmul.bf16.gmra.mxu0 %v97
    %v278 = vpop.f32.mrf.mxu0
    %v279 = vadd.f32 %v72, %v278
    %v280 = vpop.f32.mrf.mxu0
    %v281 = vadd.f32 %v72, %v280
    %282 = vmatmul.bf16.gmra.mxu0 %v98
    %v283 = vpop.f32.mrf.mxu0
    %v284 = vadd.f32 %v72, %v283
    %v285 = vpop.f32.mrf.mxu0
    %v286 = vadd.f32 %v72, %v285
    %287 = vmatmul.bf16.gmra.mxu0 %v99
    %v288 = vpop.f32.mrf.mxu0
    %v289 = vadd.f32 %v72, %v288
    %v290 = vpop.f32.mrf.mxu0
    %v291 = vadd.f32 %v72, %v290
    %292 = vdwg.mxu0
    %293 = vmatpush.bf16.msra.mxu0 %v229
    %294 = vmatpush.bf16.msra.mxu0 %v225
    %295 = vmatpush.bf16.msra.mxu0 %v221
    %296 = vmatpush.bf16.msra.mxu0 %v217
    %297 = vmatpush.bf16.msra.mxu0 %v213
    %298 = vmatpush.bf16.msra.mxu0 %v209
    %299 = vmatpush.bf16.msra.mxu0 %v205
    %300 = vmatpush.bf16.msra.mxu0 %v201
    %301 = vmatmul.bf16.gmra.mxu0 %v96
    %v302 = vpop.f32.mrf.mxu0
    %v303 = vadd.f32 %v73, %v302
    %v304 = vpop.f32.mrf.mxu0
    %v305 = vadd.f32 %v73, %v304
    %306 = vmatmul.bf16.gmra.mxu0 %v97
    %v307 = vpop.f32.mrf.mxu0
    %v308 = vadd.f32 %v73, %v307
    %v309 = vpop.f32.mrf.mxu0
    %v310 = vadd.f32 %v73, %v309
    %311 = vmatmul.bf16.gmra.mxu0 %v98
    %v312 = vpop.f32.mrf.mxu0
    %v313 = vadd.f32 %v73, %v312
    %v314 = vpop.f32.mrf.mxu0
    %v315 = vadd.f32 %v73, %v314
    %316 = vmatmul.bf16.gmra.mxu0 %v99
    %v317 = vpop.f32.mrf.mxu0
    %v318 = vadd.f32 %v73, %v317
    %v319 = vpop.f32.mrf.mxu0
    %v320 = vadd.f32 %v73, %v319
    %321 = vdwg.mxu0
    %322 = vmatpush.bf16.msra.mxu0 %v230
    %323 = vmatpush.bf16.msra.mxu0 %v226
    %324 = vmatpush.bf16.msra.mxu0 %v222
    %325 = vmatpush.bf16.msra.mxu0 %v218
    %326 = vmatpush.bf16.msra.mxu0 %v214
    %327 = vmatpush.bf16.msra.mxu0 %v210
    %328 = vmatpush.bf16.msra.mxu0 %v206
    %329 = vmatpush.bf16.msra.mxu0 %v202
    %330 = vmatmul.bf16.gmra.mxu0 %v96
    %v331 = vpop.f32.mrf.mxu0
    %v332 = vadd.f32 %v74, %v331
    %v333 = vpop.f32.mrf.mxu0
    %v334 = vadd.f32 %v74, %v333
    %335 = vmatmul.bf16.gmra.mxu0 %v97
    %v336 = vpop.f32.mrf.mxu0
    %v337 = vadd.f32 %v74, %v336
    %v338 = vpop.f32.mrf.mxu0
    %v339 = vadd.f32 %v74, %v338
    %340 = vmatmul.bf16.gmra.mxu0 %v98
    %v341 = vpop.f32.mrf.mxu0
    %v342 = vadd.f32 %v74, %v341
    %v343 = vpop.f32.mrf.mxu0
    %v344 = vadd.f32 %v74, %v343
    %345 = vmatmul.bf16.gmra.mxu0 %v99
    %v346 = vpop.f32.mrf.mxu0
    %v347 = vadd.f32 %v74, %v346
    %v348 = vpop.f32.mrf.mxu0
    %v349 = vadd.f32 %v74, %v348
    %350 = vdwg.mxu0
    %351 = vmatpush.bf16.msra.mxu0 %v231
    %352 = vmatpush.bf16.msra.mxu0 %v227
    %353 = vmatpush.bf16.msra.mxu0 %v223
    %354 = vmatpush.bf16.msra.mxu0 %v219
    %355 = vmatpush.bf16.msra.mxu0 %v215
    %356 = vmatpush.bf16.msra.mxu0 %v211
    %357 = vmatpush.bf16.msra.mxu0 %v207
    %358 = vmatpush.bf16.msra.mxu0 %v203
    %359 = vmatmul.bf16.gmra.mxu0 %v96
    %v360 = vpop.f32.mrf.mxu0
    %v361 = vadd.f32 %v75, %v360
    %v362 = vpop.f32.mrf.mxu0
    %v363 = vadd.f32 %v75, %v362
    %364 = vmatmul.bf16.gmra.mxu0 %v97
    %v365 = vpop.f32.mrf.mxu0
    %v366 = vadd.f32 %v75, %v365
    %v367 = vpop.f32.mrf.mxu0
    %v368 = vadd.f32 %v75, %v367
    %369 = vmatmul.bf16.gmra.mxu0 %v98
    %v370 = vpop.f32.mrf.mxu0
    %v371 = vadd.f32 %v75, %v370
    %v372 = vpop.f32.mrf.mxu0
    %v373 = vadd.f32 %v75, %v372
    %374 = vmatmul.bf16.gmra.mxu0 %v99
    %v375 = vpop.f32.mrf.mxu0
    %v376 = vadd.f32 %v75, %v375
    %v377 = vpop.f32.mrf.mxu0
    %v378 = vadd.f32 %v75, %v377
    %379 = vdwg.mxu0
    %v380 = vpack.c.bf16 %v303, %v274
    %v381 = vpack.c.bf16 %v361, %v332
    %v382 = vpack.c.bf16 %v305, %v276
    %v383 = vpack.c.bf16 %v363, %v334
    %v384 = vpack.c.bf16 %v308, %v279
    %v385 = vpack.c.bf16 %v366, %v337
    %v386 = vpack.c.bf16 %v310, %v281
    %v387 = vpack.c.bf16 %v368, %v339
    %v388 = vpack.c.bf16 %v313, %v284
    %v389 = vpack.c.bf16 %v371, %v342
    %v390 = vpack.c.bf16 %v315, %v286
    %v391 = vpack.c.bf16 %v373, %v344
    %v392 = vpack.c.bf16 %v318, %v289
    %v393 = vpack.c.bf16 %v376, %v347
    %v394 = vpack.c.bf16 %v320, %v291
    %v395 = vpack.c.bf16 %v378, %v349
    %396 = vst [vmem:[%s3] sm:$0xff] %v380
    %397 = vst [vmem:[%s3 + $0x8] sm:$0xff] %v381
    %398 = vst [vmem:[%s3 + $0x10] sm:$0xff] %v382
    %399 = vst [vmem:[%s3 + $0x18] sm:$0xff] %v383
    %400 = vst [vmem:[%s3 + $0x20] sm:$0xff] %v384
    %401 = vst [vmem:[%s3 + $0x28] sm:$0xff] %v385
    %402 = vst [vmem:[%s3 + $0x30] sm:$0xff] %v386
    %403 = vst [vmem:[%s3 + $0x38] sm:$0xff] %v387
    %404 = vst [vmem:[%s3 + $0x40] sm:$0xff] %v388
    %405 = vst [vmem:[%s3 + $0x48] sm:$0xff] %v389
    %406 = vst [vmem:[%s3 + $0x50] sm:$0xff] %v390
    %407 = vst [vmem:[%s3 + $0x58] sm:$0xff] %v391
    %408 = vst [vmem:[%s3 + $0x60] sm:$0xff] %v392
    %409 = vst [vmem:[%s3 + $0x68] sm:$0xff] %v393
    %410 = vst [vmem:[%s3 + $0x70] sm:$0xff] %v394
    %411 = vst [vmem:[%s3 + $0x78] sm:$0xff] %v395
    // Predicated region
    $region18: #{image_captioner_forward.3} parent=1 // pred_check
      _
    $region19: #{image_captioner_forward.3} parent=1 // pred_check_branch
      %413 = sbr.rel (0) target = $region21
    $region20: #{image_captioner_forward.3} parent=1 // pred_region
      _
    $region21: #{image_captioner_forward.3} parent=1 // pred_fallthru
      _
    // Predicated region
    $region22: #{image_captioner_forward.3} parent=1 // pred_check
      _
    $region23: #{image_captioner_forward.3} parent=1 // pred_check_branch
      %415 = sbr.rel (0) target = $region25
    $region24: #{image_captioner_forward.3} parent=1 // pred_region
      _
    $region25: #{image_captioner_forward.3} parent=1 // pred_fallthru
      _
    %416 = vsyncpa [#allocation3], 1

// kernel: image_captioner_forward.4
$region0: #{image_captioner_forward.4}
  #allocation0 [shape = 'u32[]', space=smem, size = 0x4, offset = 0x4, fixed_abs, tag = 'smem constant byte address 0x4 - core index']
  #allocation1 [shape = 'u32[72,128]{1,0:T(1,128)}', space=vmem, size = 0x9000, scoped, tag = 'internal scratch']
  %s0 = inlined_call_operand.vmem [shape: bf16[8,8,512], index: 0, kind: input, shape index: {}]
  %s1 = inlined_call_operand.hbm [shape: bf16[128,512], index: 1, kind: input, shape index: {}]
  %s2 = inlined_call_operand.vmem [shape: bf16[8,8,128], index: 2, kind: output, shape index: {}]
  %s3 = sld [smem:[#allocation0]]
  $region22: #{image_captioner_forward.4} parent=0
    _
  %s5 = ssub.s32 1, %s3
  %s6 = scalar_select 0, %s5, %s3
  $region1: #{image_captioner_forward.4} parent=0
    #allocation2 [shape = 'u8[131072]{0}', space=vmem, size = 0x20000, scoped, tag = 'input window, operand 1, single buffered']
    #allocation3 [shape = 's32[1]{0}', space=sflag, size = 0x4, scoped, tag = 'scoped memory for image_captioner_forward.4']
    %7 = vsyncpa [#allocation3], 0
    // Predicated region
    $region2: #{image_captioner_forward.4} parent=1 // pred_check
      _
    $region3: #{image_captioner_forward.4} parent=1 // pred_check_branch
      %9 = sbr.rel (0) target = $region5
    $region4: #{image_captioner_forward.4} parent=1 // pred_region
      _
    $region5: #{image_captioner_forward.4} parent=1 // pred_fallthru
      _
    // Predicated region
    $region6: #{image_captioner_forward.4} parent=1 // pred_check
      _
    $region7: #{image_captioner_forward.4} parent=1 // pred_check_branch
      %11 = sbr.rel (0) target = $region9
    $region8: #{image_captioner_forward.4} parent=1 // pred_region
      %13 = vsyncadd [#allocation3], 0
      %s14 = sshll.u32 %s1, 4
      %s15 = int_to_ptr.hbm [resolvable:$true] %s14
      %s16 = sshll.u32 [#allocation2], 4
      %s17 = int_to_ptr.vmem [resolvable:$true] %s16
      %22 = dma.hbm_to_vmem [thread:$0]  %s15, 4096, %s17, [#allocation3], 256, 256, 16
    $region9: #{image_captioner_forward.4} parent=1 // pred_fallthru
      _
    // Predicated region
    $region10: #{image_captioner_forward.4} parent=1 // pred_check
      _
    $region11: #{image_captioner_forward.4} parent=1 // pred_check_branch
      %24 = sbr.rel (0) target = $region13
    $region12: #{image_captioner_forward.4} parent=1 // pred_region
      %26 = dma.done [#allocation3], 4096
    $region13: #{image_captioner_forward.4} parent=1 // pred_fallthru
      _
    %v28 = vld [vmem:[%s0] sm:$0xff]
    %v29 = vld [vmem:[%s0 + $0x8] sm:$0xff]
    %v30 = vunpack.c.l.bf16 %v28
    %v31 = vunpack.c.h.bf16 %v28
    %v32 = vunpack.c.l.bf16 %v29
    %v33 = vunpack.c.h.bf16 %v29
    %v34 = vld [vmem:[#allocation2] sm:$0xff]
    %v35 = vld [vmem:[#allocation2 + $0x8] sm:$0xff]
    %v36 = vld [vmem:[#allocation2 + $0x10] sm:$0xff]
    %v37 = vld [vmem:[#allocation2 + $0x18] sm:$0xff]
    %v38 = vld [vmem:[#allocation2 + $0x20] sm:$0xff]
    %v39 = vld [vmem:[#allocation2 + $0x28] sm:$0xff]
    %v40 = vld [vmem:[#allocation2 + $0x30] sm:$0xff]
    %v41 = vld [vmem:[#allocation2 + $0x38] sm:$0xff]
    %v42 = vld [vmem:[#allocation2 + $0x40] sm:$0xff]
    %v43 = vld [vmem:[#allocation2 + $0x48] sm:$0xff]
    %v44 = vld [vmem:[#allocation2 + $0x50] sm:$0xff]
    %v45 = vld [vmem:[#allocation2 + $0x58] sm:$0xff]
    %v46 = vld [vmem:[#allocation2 + $0x60] sm:$0xff]
    %v47 = vld [vmem:[#allocation2 + $0x68] sm:$0xff]
    %v48 = vld [vmem:[#allocation2 + $0x70] sm:$0xff]
    %v49 = vld [vmem:[#allocation2 + $0x78] sm:$0xff]
    %v50 = vld [vmem:[#allocation2 + $0x80] sm:$0xff]
    %v51 = vld [vmem:[#allocation2 + $0x88] sm:$0xff]
    %v52 = vld [vmem:[#allocation2 + $0x90] sm:$0xff]
    %v53 = vld [vmem:[#allocation2 + $0x98] sm:$0xff]
    %v54 = vld [vmem:[#allocation2 + $0xa0] sm:$0xff]
    %v55 = vld [vmem:[#allocation2 + $0xa8] sm:$0xff]
    %v56 = vld [vmem:[#allocation2 + $0xb0] sm:$0xff]
    %v57 = vld [vmem:[#allocation2 + $0xb8] sm:$0xff]
    %v58 = vld [vmem:[#allocation2 + $0xc0] sm:$0xff]
    %v59 = vld [vmem:[#allocation2 + $0xc8] sm:$0xff]
    %v60 = vld [vmem:[#allocation2 + $0xd0] sm:$0xff]
    %v61 = vld [vmem:[#allocation2 + $0xd8] sm:$0xff]
    %v62 = vld [vmem:[#allocation2 + $0xe0] sm:$0xff]
    %v63 = vld [vmem:[#allocation2 + $0xe8] sm:$0xff]
    %v64 = vld [vmem:[#allocation2 + $0xf0] sm:$0xff]
    %v65 = vld [vmem:[#allocation2 + $0xf8] sm:$0xff]
    %v98 = vunpack.c.l.b16 %v34
    %v99 = vunpack.c.h.b16 %v34
    %v100 = vunpack.c.l.b16 %v35
    %v101 = vunpack.c.h.b16 %v35
    %v102 = vunpack.c.l.b16 %v36
    %v103 = vunpack.c.h.b16 %v36
    %v104 = vunpack.c.l.b16 %v37
    %v105 = vunpack.c.h.b16 %v37
    %v106 = vunpack.c.l.b16 %v38
    %v107 = vunpack.c.h.b16 %v38
    %v108 = vunpack.c.l.b16 %v39
    %v109 = vunpack.c.h.b16 %v39
    %v110 = vunpack.c.l.b16 %v40
    %v111 = vunpack.c.h.b16 %v40
    %v112 = vunpack.c.l.b16 %v41
    %v113 = vunpack.c.h.b16 %v41
    %v114 = vunpack.c.l.b16 %v42
    %v115 = vunpack.c.h.b16 %v42
    %v116 = vunpack.c.l.b16 %v43
    %v117 = vunpack.c.h.b16 %v43
    %v118 = vunpack.c.l.b16 %v44
    %v119 = vunpack.c.h.b16 %v44
    %v120 = vunpack.c.l.b16 %v45
    %v121 = vunpack.c.h.b16 %v45
    %v122 = vunpack.c.l.b16 %v46
    %v123 = vunpack.c.h.b16 %v46
    %v124 = vunpack.c.l.b16 %v47
    %v125 = vunpack.c.h.b16 %v47
    %v126 = vunpack.c.l.b16 %v48
    %v127 = vunpack.c.h.b16 %v48
    %v128 = vunpack.c.l.b16 %v49
    %v129 = vunpack.c.h.b16 %v49
    %v130 = vunpack.c.l.b16 %v50
    %v131 = vunpack.c.h.b16 %v50
    %v132 = vunpack.c.l.b16 %v51
    %v133 = vunpack.c.h.b16 %v51
    %v134 = vunpack.c.l.b16 %v52
    %v135 = vunpack.c.h.b16 %v52
    %v136 = vunpack.c.l.b16 %v53
    %v137 = vunpack.c.h.b16 %v53
    %v138 = vunpack.c.l.b16 %v54
    %v139 = vunpack.c.h.b16 %v54
    %v140 = vunpack.c.l.b16 %v55
    %v141 = vunpack.c.h.b16 %v55
    %v142 = vunpack.c.l.b16 %v56
    %v143 = vunpack.c.h.b16 %v56
    %v144 = vunpack.c.l.b16 %v57
    %v145 = vunpack.c.h.b16 %v57
    %v146 = vunpack.c.l.b16 %v58
    %v147 = vunpack.c.h.b16 %v58
    %v148 = vunpack.c.l.b16 %v59
    %v149 = vunpack.c.h.b16 %v59
    %v150 = vunpack.c.l.b16 %v60
    %v151 = vunpack.c.h.b16 %v60
    %v152 = vunpack.c.l.b16 %v61
    %v153 = vunpack.c.h.b16 %v61
    %v154 = vunpack.c.l.b16 %v62
    %v155 = vunpack.c.h.b16 %v62
    %v156 = vunpack.c.l.b16 %v63
    %v157 = vunpack.c.h.b16 %v63
    %v158 = vunpack.c.l.b16 %v64
    %v159 = vunpack.c.h.b16 %v64
    %v160 = vunpack.c.l.b16 %v65
    %v161 = vunpack.c.h.b16 %v65
    %v162 = vpack.c.b16 %v102, %v98
    %v163 = vpack.c.b16 %v103, %v99
    %v164 = vpack.c.b16 %v104, %v100
    %v165 = vpack.c.b16 %v105, %v101
    %v166 = vpack.c.b16 %v110, %v106
    %v167 = vpack.c.b16 %v111, %v107
    %v168 = vpack.c.b16 %v112, %v108
    %v169 = vpack.c.b16 %v113, %v109
    %v170 = vpack.c.b16 %v118, %v114
    %v171 = vpack.c.b16 %v119, %v115
    %v172 = vpack.c.b16 %v120, %v116
    %v173 = vpack.c.b16 %v121, %v117
    %v174 = vpack.c.b16 %v126, %v122
    %v175 = vpack.c.b16 %v127, %v123
    %v176 = vpack.c.b16 %v128, %v124
    %v177 = vpack.c.b16 %v129, %v125
    %v178 = vpack.c.b16 %v134, %v130
    %v179 = vpack.c.b16 %v135, %v131
    %v180 = vpack.c.b16 %v136, %v132
    %v181 = vpack.c.b16 %v137, %v133
    %v182 = vpack.c.b16 %v142, %v138
    %v183 = vpack.c.b16 %v143, %v139
    %v184 = vpack.c.b16 %v144, %v140
    %v185 = vpack.c.b16 %v145, %v141
    %v186 = vpack.c.b16 %v150, %v146
    %v187 = vpack.c.b16 %v151, %v147
    %v188 = vpack.c.b16 %v152, %v148
    %v189 = vpack.c.b16 %v153, %v149
    %v190 = vpack.c.b16 %v158, %v154
    %v191 = vpack.c.b16 %v159, %v155
    %v192 = vpack.c.b16 %v160, %v156
    %v193 = vpack.c.b16 %v161, %v157
    %226 = vmatpush.bf16.msra.mxu0 %v190
    %227 = vmatpush.bf16.msra.mxu0 %v186
    %228 = vmatpush.bf16.msra.mxu0 %v182
    %229 = vmatpush.bf16.msra.mxu0 %v178
    %230 = vmatpush.bf16.msra.mxu0 %v174
    %231 = vmatpush.bf16.msra.mxu0 %v170
    %232 = vmatpush.bf16.msra.mxu0 %v166
    %233 = vmatpush.bf16.msra.mxu0 %v162
    %234 = vmatmul.bf16.gmra.mxu0 0
    %v235 = vpop.f32.mrf.mxu0
    %v236 = vadd.f32 0.0, %v235
    %v237 = vpop.f32.mrf.mxu0
    %238 = vdwg.mxu0
    %239 = vmatpush.bf16.msra.mxu0 %v191
    %240 = vmatpush.bf16.msra.mxu0 %v187
    %241 = vmatpush.bf16.msra.mxu0 %v183
    %242 = vmatpush.bf16.msra.mxu0 %v179
    %243 = vmatpush.bf16.msra.mxu0 %v175
    %244 = vmatpush.bf16.msra.mxu0 %v171
    %245 = vmatpush.bf16.msra.mxu0 %v167
    %246 = vmatpush.bf16.msra.mxu0 %v163
    %247 = vmatmul.bf16.gmra.mxu0 0
    %v248 = vpop.f32.mrf.mxu0
    %v249 = vadd.f32 0.0, %v248
    %v250 = vpop.f32.mrf.mxu0
    %251 = vdwg.mxu0
    %252 = vmatpush.bf16.msra.mxu0 %v192
    %253 = vmatpush.bf16.msra.mxu0 %v188
    %254 = vmatpush.bf16.msra.mxu0 %v184
    %255 = vmatpush.bf16.msra.mxu0 %v180
    %256 = vmatpush.bf16.msra.mxu0 %v176
    %257 = vmatpush.bf16.msra.mxu0 %v172
    %258 = vmatpush.bf16.msra.mxu0 %v168
    %259 = vmatpush.bf16.msra.mxu0 %v164
    %260 = vmatmul.bf16.gmra.mxu0 0
    %v261 = vpop.f32.mrf.mxu0
    %v262 = vadd.f32 0.0, %v261
    %v263 = vpop.f32.mrf.mxu0
    %264 = vdwg.mxu0
    %265 = vmatpush.bf16.msra.mxu0 %v193
    %266 = vmatpush.bf16.msra.mxu0 %v189
    %267 = vmatpush.bf16.msra.mxu0 %v185
    %268 = vmatpush.bf16.msra.mxu0 %v181
    %269 = vmatpush.bf16.msra.mxu0 %v177
    %270 = vmatpush.bf16.msra.mxu0 %v173
    %271 = vmatpush.bf16.msra.mxu0 %v169
    %272 = vmatpush.bf16.msra.mxu0 %v165
    %273 = vmatmul.bf16.gmra.mxu0 0
    %v274 = vpop.f32.mrf.mxu0
    %v275 = vadd.f32 0.0, %v274
    %v276 = vpop.f32.mrf.mxu0
    %277 = vdwg.mxu0
    %v278 = vadd.f32 %v30, %v236
    %v279 = vadd.f32 %v31, %v249
    %v280 = vadd.f32 %v32, %v262
    %v281 = vadd.f32 %v33, %v275
    %v282 = vxor.u32 %v278, 2147483648
    %v283 = vmul.f32 %v282, 1.442695
    %v284 = vpow.pop %v283
    %v285 = vadd.f32 %v284, 1.0
    %v286 = vrcp.pop %v285
    %v287 = vmul.f32 %v285, %v286
    %v288 = vsub.f32 1.0, %v287
    %v289 = vmul.f32 %v286, %v288
    %v290 = vadd.f32 %v286, %v289
    %vm291 = vweird.f32 %v285
    %vm292 = vweird.f32 %v286
    %vm293 = vmor %vm291, %vm292
    %v294 = vsel %vm293, %v286, %v290
    %v295 = vand.u32 2147483647, %v285
    %vm296 = vcmp.eq.f32.partialorder %v295, 8.507059e+37
    %v297 = vand.u32 %v285, 2147483648
    %v298 = vor.u32 1.1754944e-38, %v297
    %v299 = vsel %vm296, %v298, %v294
    %v300 = vmul.f32 1.0, %v299
    %v301 = vxor.u32 %v279, 2147483648
    %v302 = vmul.f32 %v301, 1.442695
    %v303 = vpow.pop %v302
    %v304 = vadd.f32 %v303, 1.0
    %v305 = vrcp.pop %v304
    %v306 = vmul.f32 %v304, %v305
    %v307 = vsub.f32 1.0, %v306
    %v308 = vmul.f32 %v305, %v307
    %v309 = vadd.f32 %v305, %v308
    %vm310 = vweird.f32 %v304
    %vm311 = vweird.f32 %v305
    %vm312 = vmor %vm310, %vm311
    %v313 = vsel %vm312, %v305, %v309
    %v314 = vand.u32 2147483647, %v304
    %vm315 = vcmp.eq.f32.partialorder %v314, 8.507059e+37
    %v316 = vand.u32 %v304, 2147483648
    %v317 = vor.u32 1.1754944e-38, %v316
    %v318 = vsel %vm315, %v317, %v313
    %v319 = vmul.f32 1.0, %v318
    %v320 = vtanh.pop %v280
    %v321 = vxor.u32 %v281, 2147483648
    %v322 = vmul.f32 %v321, 1.442695
    %v323 = vpow.pop %v322
    %v324 = vadd.f32 %v323, 1.0
    %v325 = vrcp.pop %v324
    %v326 = vmul.f32 %v324, %v325
    %v327 = vsub.f32 1.0, %v326
    %v328 = vmul.f32 %v325, %v327
    %v329 = vadd.f32 %v325, %v328
    %vm330 = vweird.f32 %v324
    %vm331 = vweird.f32 %v325
    %vm332 = vmor %vm330, %vm331
    %v333 = vsel %vm332, %v325, %v329
    %v334 = vand.u32 2147483647, %v324
    %vm335 = vcmp.eq.f32.partialorder %v334, 8.507059e+37
    %v336 = vand.u32 %v324, 2147483648
    %v337 = vor.u32 1.1754944e-38, %v336
    %v338 = vsel %vm335, %v337, %v333
    %v339 = vmul.f32 1.0, %v338
    %v340 = vmul.f32 %v319, 0.0
    %v341 = vmul.f32 %v300, %v320
    %v342 = vadd.f32 %v340, %v341
    %v343 = vtanh.pop %v342
    %v344 = vmul.f32 %v339, %v343
    %v345 = vpack.c.bf16 %v344, %v344
    %346 = vst [vmem:[%s2] sm:$0xf] %v345
    %s347 = scalar_lea.vmem %s0, 16
    %v348 = vld [vmem:[%s347] sm:$0xff]
    %v349 = vld [vmem:[%s347 + $0x8] sm:$0xff]
    %v350 = vunpack.c.l.bf16 %v348
    %v351 = vunpack.c.h.bf16 %v348
    %v352 = vunpack.c.l.bf16 %v349
    %v353 = vunpack.c.h.bf16 %v349
    %v354 = vld [vmem:[#allocation2] sm:$0xff]
    %v355 = vld [vmem:[#allocation2 + $0x8] sm:$0xff]
    %v356 = vld [vmem:[#allocation2 + $0x10] sm:$0xff]
    %v357 = vld [vmem:[#allocation2 + $0x18] sm:$0xff]
    %v358 = vld [vmem:[#allocation2 + $0x20] sm:$0xff]
    %v359 = vld [vmem:[#allocation2 + $0x28] sm:$0xff]
    %v360 = vld [vmem:[#allocation2 + $0x30] sm:$0xff]
    %v361 = vld [vmem:[#allocation2 + $0x38] sm:$0xff]
    %v362 = vld [vmem:[#allocation2 + $0x40] sm:$0xff]
    %v363 = vld [vmem:[#allocation2 + $0x48] sm:$0xff]
    %v364 = vld [vmem:[#allocation2 + $0x50] sm:$0xff]
    %v365 = vld [vmem:[#allocation2 + $0x58] sm:$0xff]
    %v366 = vld [vmem:[#allocation2 + $0x60] sm:$0xff]
    %v367 = vld [vmem:[#allocation2 + $0x68] sm:$0xff]
    %v368 = vld [vmem:[#allocation2 + $0x70] sm:$0xff]
    %v369 = vld [vmem:[#allocation2 + $0x78] sm:$0xff]
    %v370 = vld [vmem:[#allocation2 + $0x80] sm:$0xff]
    %v371 = vld [vmem:[#allocation2 + $0x88] sm:$0xff]
    %v372 = vld [vmem:[#allocation2 + $0x90] sm:$0xff]
    %v373 = vld [vmem:[#allocation2 + $0x98] sm:$0xff]
    %v374 = vld [vmem:[#allocation2 + $0xa0] sm:$0xff]
    %v375 = vld [vmem:[#allocation2 + $0xa8] sm:$0xff]
    %v376 = vld [vmem:[#allocation2 + $0xb0] sm:$0xff]
    %v377 = vld [vmem:[#allocation2 + $0xb8] sm:$0xff]
    %v378 = vld [vmem:[#allocation2 + $0xc0] sm:$0xff]
    %v379 = vld [vmem:[#allocation2 + $0xc8] sm:$0xff]
    %v380 = vld [vmem:[#allocation2 + $0xd0] sm:$0xff]
    %v381 = vld [vmem:[#allocation2 + $0xd8] sm:$0xff]
    %v382 = vld [vmem:[#allocation2 + $0xe0] sm:$0xff]
    %v383 = vld [vmem:[#allocation2 + $0xe8] sm:$0xff]
    %v384 = vld [vmem:[#allocation2 + $0xf0] sm:$0xff]
    %v385 = vld [vmem:[#allocation2 + $0xf8] sm:$0xff]
    %v418 = vunpack.c.l.b16 %v354
    %v419 = vunpack.c.h.b16 %v354
    %v420 = vunpack.c.l.b16 %v355
    %v421 = vunpack.c.h.b16 %v355
    %v422 = vunpack.c.l.b16 %v356
    %v423 = vunpack.c.h.b16 %v356
    %v424 = vunpack.c.l.b16 %v357
    %v425 = vunpack.c.h.b16 %v357
    %v426 = vunpack.c.l.b16 %v358
    %v427 = vunpack.c.h.b16 %v358
    %v428 = vunpack.c.l.b16 %v359
    %v429 = vunpack.c.h.b16 %v359
    %v430 = vunpack.c.l.b16 %v360
    %v431 = vunpack.c.h.b16 %v360
    %v432 = vunpack.c.l.b16 %v361
    %v433 = vunpack.c.h.b16 %v361
    %v434 = vunpack.c.l.b16 %v362
    %v435 = vunpack.c.h.b16 %v362
    %v436 = vunpack.c.l.b16 %v363
    %v437 = vunpack.c.h.b16 %v363
    %v438 = vunpack.c.l.b16 %v364
    %v439 = vunpack.c.h.b16 %v364
    %v440 = vunpack.c.l.b16 %v365
    %v441 = vunpack.c.h.b16 %v365
    %v442 = vunpack.c.l.b16 %v366
    %v443 = vunpack.c.h.b16 %v366
    %v444 = vunpack.c.l.b16 %v367
    %v445 = vunpack.c.h.b16 %v367
    %v446 = vunpack.c.l.b16 %v368
    %v447 = vunpack.c.h.b16 %v368
    %v448 = vunpack.c.l.b16 %v369
    %v449 = vunpack.c.h.b16 %v369
    %v450 = vunpack.c.l.b16 %v370
    %v451 = vunpack.c.h.b16 %v370
    %v452 = vunpack.c.l.b16 %v371
    %v453 = vunpack.c.h.b16 %v371
    %v454 = vunpack.c.l.b16 %v372
    %v455 = vunpack.c.h.b16 %v372
    %v456 = vunpack.c.l.b16 %v373
    %v457 = vunpack.c.h.b16 %v373
    %v458 = vunpack.c.l.b16 %v374
    %v459 = vunpack.c.h.b16 %v374
    %v460 = vunpack.c.l.b16 %v375
    %v461 = vunpack.c.h.b16 %v375
    %v462 = vunpack.c.l.b16 %v376
    %v463 = vunpack.c.h.b16 %v376
    %v464 = vunpack.c.l.b16 %v377
    %v465 = vunpack.c.h.b16 %v377
    %v466 = vunpack.c.l.b16 %v378
    %v467 = vunpack.c.h.b16 %v378
    %v468 = vunpack.c.l.b16 %v379
    %v469 = vunpack.c.h.b16 %v379
    %v470 = vunpack.c.l.b16 %v380
    %v471 = vunpack.c.h.b16 %v380
    %v472 = vunpack.c.l.b16 %v381
    %v473 = vunpack.c.h.b16 %v381
    %v474 = vunpack.c.l.b16 %v382
    %v475 = vunpack.c.h.b16 %v382
    %v476 = vunpack.c.l.b16 %v383
    %v477 = vunpack.c.h.b16 %v383
    %v478 = vunpack.c.l.b16 %v384
    %v479 = vunpack.c.h.b16 %v384
    %v480 = vunpack.c.l.b16 %v385
    %v481 = vunpack.c.h.b16 %v385
    %v482 = vpack.c.b16 %v422, %v418
    %v483 = vpack.c.b16 %v423, %v419
    %v484 = vpack.c.b16 %v424, %v420
    %v485 = vpack.c.b16 %v425, %v421
    %v486 = vpack.c.b16 %v430, %v426
    %v487 = vpack.c.b16 %v431, %v427
    %v488 = vpack.c.b16 %v432, %v428
    %v489 = vpack.c.b16 %v433, %v429
    %v490 = vpack.c.b16 %v438, %v434
    %v491 = vpack.c.b16 %v439, %v435
    %v492 = vpack.c.b16 %v440, %v436
    %v493 = vpack.c.b16 %v441, %v437
    %v494 = vpack.c.b16 %v446, %v442
    %v495 = vpack.c.b16 %v447, %v443
    %v496 = vpack.c.b16 %v448, %v444
    %v497 = vpack.c.b16 %v449, %v445
    %v498 = vpack.c.b16 %v454, %v450
    %v499 = vpack.c.b16 %v455, %v451
    %v500 = vpack.c.b16 %v456, %v452
    %v501 = vpack.c.b16 %v457, %v453
    %v502 = vpack.c.b16 %v462, %v458
    %v503 = vpack.c.b16 %v463, %v459
    %v504 = vpack.c.b16 %v464, %v460
    %v505 = vpack.c.b16 %v465, %v461
    %v506 = vpack.c.b16 %v470, %v466
    %v507 = vpack.c.b16 %v471, %v467
    %v508 = vpack.c.b16 %v472, %v468
    %v509 = vpack.c.b16 %v473, %v469
    %v510 = vpack.c.b16 %v478, %v474
    %v511 = vpack.c.b16 %v479, %v475
    %v512 = vpack.c.b16 %v480, %v476
    %v513 = vpack.c.b16 %v481, %v477
    %546 = vmatpush.bf16.msra.mxu0 %v510
    %547 = vmatpush.bf16.msra.mxu0 %v506
    %548 = vmatpush.bf16.msra.mxu0 %v502
    %549 = vmatpush.bf16.msra.mxu0 %v498
    %550 = vmatpush.bf16.msra.mxu0 %v494
    %551 = vmatpush.bf16.msra.mxu0 %v490
    %552 = vmatpush.bf16.msra.mxu0 %v486
    %553 = vmatpush.bf16.msra.mxu0 %v482
    %554 = vmatmul.bf16.gmra.mxu0 %v345
    %v555 = vpop.f32.mrf.mxu0
    %v556 = vadd.f32 0.0, %v555
    %v557 = vpop.f32.mrf.mxu0
    %558 = vdwg.mxu0
    %559 = vmatpush.bf16.msra.mxu0 %v511
    %560 = vmatpush.bf16.msra.mxu0 %v507
    %561 = vmatpush.bf16.msra.mxu0 %v503
    %562 = vmatpush.bf16.msra.mxu0 %v499
    %563 = vmatpush.bf16.msra.mxu0 %v495
    %564 = vmatpush.bf16.msra.mxu0 %v491
    %565 = vmatpush.bf16.msra.mxu0 %v487
    %566 = vmatpush.bf16.msra.mxu0 %v483
    %567 = vmatmul.bf16.gmra.mxu0 %v345
    %v568 = vpop.f32.mrf.mxu0
    %v569 = vadd.f32 0.0, %v568
    %v570 = vpop.f32.mrf.mxu0
    %571 = vdwg.mxu0
    %572 = vmatpush.bf16.msra.mxu0 %v512
    %573 = vmatpush.bf16.msra.mxu0 %v508
    %574 = vmatpush.bf16.msra.mxu0 %v504
    %575 = vmatpush.bf16.msra.mxu0 %v500
    %576 = vmatpush.bf16.msra.mxu0 %v496
    %577 = vmatpush.bf16.msra.mxu0 %v492
    %578 = vmatpush.bf16.msra.mxu0 %v488
    %579 = vmatpush.bf16.msra.mxu0 %v484
    %580 = vmatmul.bf16.gmra.mxu0 %v345
    %v581 = vpop.f32.mrf.mxu0
    %v582 = vadd.f32 0.0, %v581
    %v583 = vpop.f32.mrf.mxu0
    %584 = vdwg.mxu0
    %585 = vmatpush.bf16.msra.mxu0 %v513
    %586 = vmatpush.bf16.msra.mxu0 %v509
    %587 = vmatpush.bf16.msra.mxu0 %v505
    %588 = vmatpush.bf16.msra.mxu0 %v501
    %589 = vmatpush.bf16.msra.mxu0 %v497
    %590 = vmatpush.bf16.msra.mxu0 %v493
    %591 = vmatpush.bf16.msra.mxu0 %v489
    %592 = vmatpush.bf16.msra.mxu0 %v485
    %593 = vmatmul.bf16.gmra.mxu0 %v345
    %v594 = vpop.f32.mrf.mxu0
    %v595 = vadd.f32 0.0, %v594
    %v596 = vpop.f32.mrf.mxu0
    %597 = vdwg.mxu0
    %v598 = vadd.f32 %v350, %v556
    %v599 = vadd.f32 %v351, %v569
    %v600 = vadd.f32 %v352, %v582
    %v601 = vadd.f32 %v353, %v595
    %v602 = vxor.u32 %v598, 2147483648
    %v603 = vmul.f32 %v602, 1.442695
    %v604 = vpow.pop %v603
    %v605 = vadd.f32 %v604, 1.0
    %v606 = vrcp.pop %v605
    %v607 = vmul.f32 %v605, %v606
    %v608 = vsub.f32 1.0, %v607
    %v609 = vmul.f32 %v606, %v608
    %v610 = vadd.f32 %v606, %v609
    %vm611 = vweird.f32 %v605
    %vm612 = vweird.f32 %v606
    %vm613 = vmor %vm611, %vm612
    %v614 = vsel %vm613, %v606, %v610
    %v615 = vand.u32 2147483647, %v605
    %vm616 = vcmp.eq.f32.partialorder %v615, 8.507059e+37
    %v617 = vand.u32 %v605, 2147483648
    %v618 = vor.u32 1.1754944e-38, %v617
    %v619 = vsel %vm616, %v618, %v614
    %v620 = vmul.f32 1.0, %v619
    %v621 = vxor.u32 %v599, 2147483648
    %v622 = vmul.f32 %v621, 1.442695
    %v623 = vpow.pop %v622
    %v624 = vadd.f32 %v623, 1.0
    %v625 = vrcp.pop %v624
    %v626 = vmul.f32 %v624, %v625
    %v627 = vsub.f32 1.0, %v626
    %v628 = vmul.f32 %v625, %v627
    %v629 = vadd.f32 %v625, %v628
    %vm630 = vweird.f32 %v624
    %vm631 = vweird.f32 %v625
    %vm632 = vmor %vm630, %vm631
    %v633 = vsel %vm632, %v625, %v629
    %v634 = vand.u32 2147483647, %v624
    %vm635 = vcmp.eq.f32.partialorder %v634, 8.507059e+37
    %v636 = vand.u32 %v624, 2147483648
    %v637 = vor.u32 1.1754944e-38, %v636
    %v638 = vsel %vm635, %v637, %v633
    %v639 = vmul.f32 1.0, %v638
    %v640 = vtanh.pop %v600
    %v641 = vxor.u32 %v601, 2147483648
    %v642 = vmul.f32 %v641, 1.442695
    %v643 = vpow.pop %v642
    %v644 = vadd.f32 %v643, 1.0
    %v645 = vrcp.pop %v644
    %v646 = vmul.f32 %v644, %v645
    %v647 = vsub.f32 1.0, %v646
    %v648 = vmul.f32 %v645, %v647
    %v649 = vadd.f32 %v645, %v648
    %vm650 = vweird.f32 %v644
    %vm651 = vweird.f32 %v645
    %vm652 = vmor %vm650, %vm651
    %v653 = vsel %vm652, %v645, %v649
    %v654 = vand.u32 2147483647, %v644
    %vm655 = vcmp.eq.f32.partialorder %v654, 8.507059e+37
    %v656 = vand.u32 %v644, 2147483648
    %v657 = vor.u32 1.1754944e-38, %v656
    %v658 = vsel %vm655, %v657, %v653
    %v659 = vmul.f32 1.0, %v658
    %v660 = vmul.f32 %v639, %v342
    %v661 = vmul.f32 %v620, %v640
    %v662 = vadd.f32 %v660, %v661
    %v663 = vtanh.pop %v662
    %v664 = vmul.f32 %v659, %v663
    %v665 = vpack.c.bf16 %v664, %v664
    %s666 = scalar_lea.vmem %s2, 4
    %667 = vst [vmem:[%s666] sm:$0xf] %v665
    %s668 = scalar_lea.vmem %s0, 32
    %v669 = vld [vmem:[%s668] sm:$0xff]
    %v670 = vld [vmem:[%s668 + $0x8] sm:$0xff]
    %v671 = vunpack.c.l.bf16 %v669
    %v672 = vunpack.c.h.bf16 %v669
    %v673 = vunpack.c.l.bf16 %v670
    %v674 = vunpack.c.h.bf16 %v670
    %v675 = vld [vmem:[#allocation2] sm:$0xff]
    %v676 = vld [vmem:[#allocation2 + $0x8] sm:$0xff]
    %v677 = vld [vmem:[#allocation2 + $0x10] sm:$0xff]
    %v678 = vld [vmem:[#allocation2 + $0x18] sm:$0xff]
    %v679 = vld [vmem:[#allocation2 + $0x20] sm:$0xff]
    %v680 = vld [vmem:[#allocation2 + $0x28] sm:$0xff]
    %v681 = vld [vmem:[#allocation2 + $0x30] sm:$0xff]
    %v682 = vld [vmem:[#allocation2 + $0x38] sm:$0xff]
    %v683 = vld [vmem:[#allocation2 + $0x40] sm:$0xff]
    %v684 = vld [vmem:[#allocation2 + $0x48] sm:$0xff]
    %v685 = vld [vmem:[#allocation2 + $0x50] sm:$0xff]
    %v686 = vld [vmem:[#allocation2 + $0x58] sm:$0xff]
    %v687 = vld [vmem:[#allocation2 + $0x60] sm:$0xff]
    %v688 = vld [vmem:[#allocation2 + $0x68] sm:$0xff]
    %v689 = vld [vmem:[#allocation2 + $0x70] sm:$0xff]
    %v690 = vld [vmem:[#allocation2 + $0x78] sm:$0xff]
    %v691 = vld [vmem:[#allocation2 + $0x80] sm:$0xff]
    %v692 = vld [vmem:[#allocation2 + $0x88] sm:$0xff]
    %v693 = vld [vmem:[#allocation2 + $0x90] sm:$0xff]
    %v694 = vld [vmem:[#allocation2 + $0x98] sm:$0xff]
    %v695 = vld [vmem:[#allocation2 + $0xa0] sm:$0xff]
    %v696 = vld [vmem:[#allocation2 + $0xa8] sm:$0xff]
    %v697 = vld [vmem:[#allocation2 + $0xb0] sm:$0xff]
    %v698 = vld [vmem:[#allocation2 + $0xb8] sm:$0xff]
    %v699 = vld [vmem:[#allocation2 + $0xc0] sm:$0xff]
    %v700 = vld [vmem:[#allocation2 + $0xc8] sm:$0xff]
    %v701 = vld [vmem:[#allocation2 + $0xd0] sm:$0xff]
    %v702 = vld [vmem:[#allocation2 + $0xd8] sm:$0xff]
    %v703 = vld [vmem:[#allocation2 + $0xe0] sm:$0xff]
    %v704 = vld [vmem:[#allocation2 + $0xe8] sm:$0xff]
    %v705 = vld [vmem:[#allocation2 + $0xf0] sm:$0xff]
    %v706 = vld [vmem:[#allocation2 + $0xf8] sm:$0xff]
    %v739 = vunpack.c.l.b16 %v675
    %v740 = vunpack.c.h.b16 %v675
    %v741 = vunpack.c.l.b16 %v676
    %v742 = vunpack.c.h.b16 %v676
    %v743 = vunpack.c.l.b16 %v677
    %v744 = vunpack.c.h.b16 %v677
    %v745 = vunpack.c.l.b16 %v678
    %v746 = vunpack.c.h.b16 %v678
    %v747 = vunpack.c.l.b16 %v679
    %v748 = vunpack.c.h.b16 %v679
    %v749 = vunpack.c.l.b16 %v680
    %v750 = vunpack.c.h.b16 %v680
    %v751 = vunpack.c.l.b16 %v681
    %v752 = vunpack.c.h.b16 %v681
    %v753 = vunpack.c.l.b16 %v682
    %v754 = vunpack.c.h.b16 %v682
    %v755 = vunpack.c.l.b16 %v683
    %v756 = vunpack.c.h.b16 %v683
    %v757 = vunpack.c.l.b16 %v684
    %v758 = vunpack.c.h.b16 %v684
    %v759 = vunpack.c.l.b16 %v685
    %v760 = vunpack.c.h.b16 %v685
    %v761 = vunpack.c.l.b16 %v686
    %v762 = vunpack.c.h.b16 %v686
    %v763 = vunpack.c.l.b16 %v687
    %v764 = vunpack.c.h.b16 %v687
    %v765 = vunpack.c.l.b16 %v688
    %v766 = vunpack.c.h.b16 %v688
    %v767 = vunpack.c.l.b16 %v689
    %v768 = vunpack.c.h.b16 %v689
    %v769 = vunpack.c.l.b16 %v690
    %v770 = vunpack.c.h.b16 %v690
    %v771 = vunpack.c.l.b16 %v691
    %v772 = vunpack.c.h.b16 %v691
    %v773 = vunpack.c.l.b16 %v692
    %v774 = vunpack.c.h.b16 %v692
    %v775 = vunpack.c.l.b16 %v693
    %v776 = vunpack.c.h.b16 %v693
    %v777 = vunpack.c.l.b16 %v694
    %v778 = vunpack.c.h.b16 %v694
    %v779 = vunpack.c.l.b16 %v695
    %v780 = vunpack.c.h.b16 %v695
    %v781 = vunpack.c.l.b16 %v696
    %v782 = vunpack.c.h.b16 %v696
    %v783 = vunpack.c.l.b16 %v697
    %v784 = vunpack.c.h.b16 %v697
    %v785 = vunpack.c.l.b16 %v698
    %v786 = vunpack.c.h.b16 %v698
    %v787 = vunpack.c.l.b16 %v699
    %v788 = vunpack.c.h.b16 %v699
    %v789 = vunpack.c.l.b16 %v700
    %v790 = vunpack.c.h.b16 %v700
    %v791 = vunpack.c.l.b16 %v701
    %v792 = vunpack.c.h.b16 %v701
    %v793 = vunpack.c.l.b16 %v702
    %v794 = vunpack.c.h.b16 %v702
    %v795 = vunpack.c.l.b16 %v703
    %v796 = vunpack.c.h.b16 %v703
    %v797 = vunpack.c.l.b16 %v704
    %v798 = vunpack.c.h.b16 %v704
    %v799 = vunpack.c.l.b16 %v705
    %v800 = vunpack.c.h.b16 %v705
    %v801 = vunpack.c.l.b16 %v706
    %v802 = vunpack.c.h.b16 %v706
    %v803 = vpack.c.b16 %v743, %v739
    %v804 = vpack.c.b16 %v744, %v740
    %v805 = vpack.c.b16 %v745, %v741
    %v806 = vpack.c.b16 %v746, %v742
    %v807 = vpack.c.b16 %v751, %v747
    %v808 = vpack.c.b16 %v752, %v748
    %v809 = vpack.c.b16 %v753, %v749
    %v810 = vpack.c.b16 %v754, %v750
    %v811 = vpack.c.b16 %v759, %v755
    %v812 = vpack.c.b16 %v760, %v756
    %v813 = vpack.c.b16 %v761, %v757
    %v814 = vpack.c.b16 %v762, %v758
    %v815 = vpack.c.b16 %v767, %v763
    %v816 = vpack.c.b16 %v768, %v764
    %v817 = vpack.c.b16 %v769, %v765
    %v818 = vpack.c.b16 %v770, %v766
    %v819 = vpack.c.b16 %v775, %v771
    %v820 = vpack.c.b16 %v776, %v772
    %v821 = vpack.c.b16 %v777, %v773
    %v822 = vpack.c.b16 %v778, %v774
    %v823 = vpack.c.b16 %v783, %v779
    %v824 = vpack.c.b16 %v784, %v780
    %v825 = vpack.c.b16 %v785, %v781
    %v826 = vpack.c.b16 %v786, %v782
    %v827 = vpack.c.b16 %v791, %v787
    %v828 = vpack.c.b16 %v792, %v788
    %v829 = vpack.c.b16 %v793, %v789
    %v830 = vpack.c.b16 %v794, %v790
    %v831 = vpack.c.b16 %v799, %v795
    %v832 = vpack.c.b16 %v800, %v796
    %v833 = vpack.c.b16 %v801, %v797
    %v834 = vpack.c.b16 %v802, %v798
    %867 = vmatpush.bf16.msra.mxu0 %v831
    %868 = vmatpush.bf16.msra.mxu0 %v827
    %869 = vmatpush.bf16.msra.mxu0 %v823
    %870 = vmatpush.bf16.msra.mxu0 %v819
    %871 = vmatpush.bf16.msra.mxu0 %v815
    %872 = vmatpush.bf16.msra.mxu0 %v811
    %873 = vmatpush.bf16.msra.mxu0 %v807
    %874 = vmatpush.bf16.msra.mxu0 %v803
    %875 = vmatmul.bf16.gmra.mxu0 %v665
    %v876 = vpop.f32.mrf.mxu0
    %v877 = vadd.f32 0.0, %v876
    %v878 = vpop.f32.mrf.mxu0
    %879 = vdwg.mxu0
    %880 = vmatpush.bf16.msra.mxu0 %v832
    %881 = vmatpush.bf16.msra.mxu0 %v828
    %882 = vmatpush.bf16.msra.mxu0 %v824
    %883 = vmatpush.bf16.msra.mxu0 %v820
    %884 = vmatpush.bf16.msra.mxu0 %v816
    %885 = vmatpush.bf16.msra.mxu0 %v812
    %886 = vmatpush.bf16.msra.mxu0 %v808
    %887 = vmatpush.bf16.msra.mxu0 %v804
    %888 = vmatmul.bf16.gmra.mxu0 %v665
    %v889 = vpop.f32.mrf.mxu0
    %v890 = vadd.f32 0.0, %v889
    %v891 = vpop.f32.mrf.mxu0
    %892 = vdwg.mxu0
    %893 = vmatpush.bf16.msra.mxu0 %v833
    %894 = vmatpush.bf16.msra.mxu0 %v829
    %895 = vmatpush.bf16.msra.mxu0 %v825
    %896 = vmatpush.bf16.msra.mxu0 %v821
    %897 = vmatpush.bf16.msra.mxu0 %v817
    %898 = vmatpush.bf16.msra.mxu0 %v813
    %899 = vmatpush.bf16.msra.mxu0 %v809
    %900 = vmatpush.bf16.msra.mxu0 %v805
    %901 = vmatmul.bf16.gmra.mxu0 %v665
    %v902 = vpop.f32.mrf.mxu0
    %v903 = vadd.f32 0.0, %v902
    %v904 = vpop.f32.mrf.mxu0
    %905 = vdwg.mxu0
    %906 = vmatpush.bf16.msra.mxu0 %v834
    %907 = vmatpush.bf16.msra.mxu0 %v830
    %908 = vmatpush.bf16.msra.mxu0 %v826
    %909 = vmatpush.bf16.msra.mxu0 %v822
    %910 = vmatpush.bf16.msra.mxu0 %v818
    %911 = vmatpush.bf16.msra.mxu0 %v814
    %912 = vmatpush.bf16.msra.mxu0 %v810
    %913 = vmatpush.bf16.msra.mxu0 %v806
    %914 = vmatmul.bf16.gmra.mxu0 %v665
    %v915 = vpop.f32.mrf.mxu0
    %v916 = vadd.f32 0.0, %v915
    %v917 = vpop.f32.mrf.mxu0
    %918 = vdwg.mxu0
    %v919 = vadd.f32 %v671, %v877
    %v920 = vadd.f32 %v672, %v890
    %v921 = vadd.f32 %v673, %v903
    %v922 = vadd.f32 %v674, %v916
    %v923 = vxor.u32 %v919, 2147483648
    %v924 = vmul.f32 %v923, 1.442695
    %v925 = vpow.pop %v924
    %v926 = vadd.f32 %v925, 1.0
    %v927 = vrcp.pop %v926
    %v928 = vmul.f32 %v926, %v927
    %v929 = vsub.f32 1.0, %v928
    %v930 = vmul.f32 %v927, %v929
    %v931 = vadd.f32 %v927, %v930
    %vm932 = vweird.f32 %v926
    %vm933 = vweird.f32 %v927
    %vm934 = vmor %vm932, %vm933
    %v935 = vsel %vm934, %v927, %v931
    %v936 = vand.u32 2147483647, %v926
    %vm937 = vcmp.eq.f32.partialorder %v936, 8.507059e+37
    %v938 = vand.u32 %v926, 2147483648
    %v939 = vor.u32 1.1754944e-38, %v938
    %v940 = vsel %vm937, %v939, %v935
    %v941 = vmul.f32 1.0, %v940
    %v942 = vxor.u32 %v920, 2147483648
    %v943 = vmul.f32 %v942, 1.442695
    %v944 = vpow.pop %v943
    %v945 = vadd.f32 %v944, 1.0
    %v946 = vrcp.pop %v945
    %v947 = vmul.f32 %v945, %v946
    %v948 = vsub.f32 1.0, %v947
    %v949 = vmul.f32 %v946, %v948
    %v950 = vadd.f32 %v946, %v949
    %vm951 = vweird.f32 %v945
    %vm952 = vweird.f32 %v946
    %vm953 = vmor %vm951, %vm952
    %v954 = vsel %vm953, %v946, %v950
    %v955 = vand.u32 2147483647, %v945
    %vm956 = vcmp.eq.f32.partialorder %v955, 8.507059e+37
    %v957 = vand.u32 %v945, 2147483648
    %v958 = vor.u32 1.1754944e-38, %v957
    %v959 = vsel %vm956, %v958, %v954
    %v960 = vmul.f32 1.0, %v959
    %v961 = vtanh.pop %v921
    %v962 = vxor.u32 %v922, 2147483648
    %v963 = vmul.f32 %v962, 1.442695
    %v964 = vpow.pop %v963
    %v965 = vadd.f32 %v964, 1.0
    %v966 = vrcp.pop %v965
    %v967 = vmul.f32 %v965, %v966
    %v968 = vsub.f32 1.0, %v967
    %v969 = vmul.f32 %v966, %v968
    %v970 = vadd.f32 %v966, %v969
    %vm971 = vweird.f32 %v965
    %vm972 = vweird.f32 %v966
    %vm973 = vmor %vm971, %vm972
    %v974 = vsel %vm973, %v966, %v970
    %v975 = vand.u32 2147483647, %v965
    %vm976 = vcmp.eq.f32.partialorder %v975, 8.507059e+37
    %v977 = vand.u32 %v965, 2147483648
    %v978 = vor.u32 1.1754944e-38, %v977
    %v979 = vsel %vm976, %v978, %v974
    %v980 = vmul.f32 1.0, %v979
    %v981 = vmul.f32 %v960, %v662
    %v982 = vmul.f32 %v941, %v961
    %v983 = vadd.f32 %v981, %v982
    %v984 = vtanh.pop %v983
    %v985 = vmul.f32 %v980, %v984
    %v986 = vpack.c.bf16 %v985, %v985
    %s987 = scalar_lea.vmem %s2, 8
    %988 = vst [vmem:[%s987] sm:$0xf] %v986
    %s989 = scalar_lea.vmem %s0, 48
    %v990 = vld [vmem:[%s989] sm:$0xff]
    %v991 = vld [vmem:[%s989 + $0x8] sm:$0xff]
    %v992 = vunpack.c.l.bf16 %v990
    %v993 = vunpack.c.h.bf16 %v990
    %v994 = vunpack.c.l.bf16 %v991
    %v995 = vunpack.c.h.bf16 %v991
    %v996 = vld [vmem:[#allocation2] sm:$0xff]
    %v997 = vld [vmem:[#allocation2 + $0x8] sm:$0xff]
    %v998 = vld [vmem:[#allocation2 + $0x10] sm:$0xff]
    %v999 = vld [vmem:[#allocation2 + $0x18] sm:$0xff]
    %v1000 = vld [vmem:[#allocation2 + $0x20] sm:$0xff]
    %v1001 = vld [vmem:[#allocation2 + $0x28] sm:$0xff]
    %v1002 = vld [vmem:[#allocation2 + $0x30] sm:$0xff]
    %v1003 = vld [vmem:[#allocation2 + $0x38] sm:$0xff]
    %v1004 = vld [vmem:[#allocation2 + $0x40] sm:$0xff]
    %v1005 = vld [vmem:[#allocation2 + $0x48] sm:$0xff]
    %v1006 = vld [vmem:[#allocation2 + $0x50] sm:$0xff]
    %v1007 = vld [vmem:[#allocation2 + $0x58] sm:$0xff]
    %v1008 = vld [vmem:[#allocation2 + $0x60] sm:$0xff]
    %v1009 = vld [vmem:[#allocation2 + $0x68] sm:$0xff]
    %v1010 = vld [vmem:[#allocation2 + $0x70] sm:$0xff]
    %v1011 = vld [vmem:[#allocation2 + $0x78] sm:$0xff]
    %v1012 = vld [vmem:[#allocation2 + $0x80] sm:$0xff]
    %v1013 = vld [vmem:[#allocation2 + $0x88] sm:$0xff]
    %v1014 = vld [vmem:[#allocation2 + $0x90] sm:$0xff]
    %v1015 = vld [vmem:[#allocation2 + $0x98] sm:$0xff]
    %v1016 = vld [vmem:[#allocation2 + $0xa0] sm:$0xff]
    %v1017 = vld [vmem:[#allocation2 + $0xa8] sm:$0xff]
    %v1018 = vld [vmem:[#allocation2 + $0xb0] sm:$0xff]
    %v1019 = vld [vmem:[#allocation2 + $0xb8] sm:$0xff]
    %v1020 = vld [vmem:[#allocation2 + $0xc0] sm:$0xff]
    %v1021 = vld [vmem:[#allocation2 + $0xc8] sm:$0xff]
    %v1022 = vld [vmem:[#allocation2 + $0xd0] sm:$0xff]
    %v1023 = vld [vmem:[#allocation2 + $0xd8] sm:$0xff]
    %v1024 = vld [vmem:[#allocation2 + $0xe0] sm:$0xff]
    %v1025 = vld [vmem:[#allocation2 + $0xe8] sm:$0xff]
    %v1026 = vld [vmem:[#allocation2 + $0xf0] sm:$0xff]
    %v1027 = vld [vmem:[#allocation2 + $0xf8] sm:$0xff]
    %v1060 = vunpack.c.l.b16 %v996
    %v1061 = vunpack.c.h.b16 %v996
    %v1062 = vunpack.c.l.b16 %v997
    %v1063 = vunpack.c.h.b16 %v997
    %v1064 = vunpack.c.l.b16 %v998
    %v1065 = vunpack.c.h.b16 %v998
    %v1066 = vunpack.c.l.b16 %v999
    %v1067 = vunpack.c.h.b16 %v999
    %v1068 = vunpack.c.l.b16 %v1000
    %v1069 = vunpack.c.h.b16 %v1000
    %v1070 = vunpack.c.l.b16 %v1001
    %v1071 = vunpack.c.h.b16 %v1001
    %v1072 = vunpack.c.l.b16 %v1002
    %v1073 = vunpack.c.h.b16 %v1002
    %v1074 = vunpack.c.l.b16 %v1003
    %v1075 = vunpack.c.h.b16 %v1003
    %v1076 = vunpack.c.l.b16 %v1004
    %v1077 = vunpack.c.h.b16 %v1004
    %v1078 = vunpack.c.l.b16 %v1005
    %v1079 = vunpack.c.h.b16 %v1005
    %v1080 = vunpack.c.l.b16 %v1006
    %v1081 = vunpack.c.h.b16 %v1006
    %v1082 = vunpack.c.l.b16 %v1007
    %v1083 = vunpack.c.h.b16 %v1007
    %v1084 = vunpack.c.l.b16 %v1008
    %v1085 = vunpack.c.h.b16 %v1008
    %v1086 = vunpack.c.l.b16 %v1009
    %v1087 = vunpack.c.h.b16 %v1009
    %v1088 = vunpack.c.l.b16 %v1010
    %v1089 = vunpack.c.h.b16 %v1010
    %v1090 = vunpack.c.l.b16 %v1011
    %v1091 = vunpack.c.h.b16 %v1011
    %v1092 = vunpack.c.l.b16 %v1012
    %v1093 = vunpack.c.h.b16 %v1012
    %v1094 = vunpack.c.l.b16 %v1013
    %v1095 = vunpack.c.h.b16 %v1013
    %v1096 = vunpack.c.l.b16 %v1014
    %v1097 = vunpack.c.h.b16 %v1014
    %v1098 = vunpack.c.l.b16 %v1015
    %v1099 = vunpack.c.h.b16 %v1015
    %v1100 = vunpack.c.l.b16 %v1016
    %v1101 = vunpack.c.h.b16 %v1016
    %v1102 = vunpack.c.l.b16 %v1017
    %v1103 = vunpack.c.h.b16 %v1017
    %v1104 = vunpack.c.l.b16 %v1018
    %v1105 = vunpack.c.h.b16 %v1018
    %v1106 = vunpack.c.l.b16 %v1019
    %v1107 = vunpack.c.h.b16 %v1019
    %v1108 = vunpack.c.l.b16 %v1020
    %v1109 = vunpack.c.h.b16 %v1020
    %v1110 = vunpack.c.l.b16 %v1021
    %v1111 = vunpack.c.h.b16 %v1021
    %v1112 = vunpack.c.l.b16 %v1022
    %v1113 = vunpack.c.h.b16 %v1022
    %v1114 = vunpack.c.l.b16 %v1023
    %v1115 = vunpack.c.h.b16 %v1023
    %v1116 = vunpack.c.l.b16 %v1024
    %v1117 = vunpack.c.h.b16 %v1024
    %v1118 = vunpack.c.l.b16 %v1025
    %v1119 = vunpack.c.h.b16 %v1025
    %v1120 = vunpack.c.l.b16 %v1026
    %v1121 = vunpack.c.h.b16 %v1026
    %v1122 = vunpack.c.l.b16 %v1027
    %v1123 = vunpack.c.h.b16 %v1027
    %v1124 = vpack.c.b16 %v1064, %v1060
    %v1125 = vpack.c.b16 %v1065, %v1061
    %v1126 = vpack.c.b16 %v1066, %v1062
    %v1127 = vpack.c.b16 %v1067, %v1063
    %v1128 = vpack.c.b16 %v1072, %v1068
    %v1129 = vpack.c.b16 %v1073, %v1069
    %v1130 = vpack.c.b16 %v1074, %v1070
    %v1131 = vpack.c.b16 %v1075, %v1071
    %v1132 = vpack.c.b16 %v1080, %v1076
    %v1133 = vpack.c.b16 %v1081, %v1077
    %v1134 = vpack.c.b16 %v1082, %v1078
    %v1135 = vpack.c.b16 %v1083, %v1079
    %v1136 = vpack.c.b16 %v1088, %v1084
    %v1137 = vpack.c.b16 %v1089, %v1085
    %v1138 = vpack.c.b16 %v1090, %v1086
    %v1139 = vpack.c.b16 %v1091, %v1087
    %v1140 = vpack.c.b16 %v1096, %v1092
    %v1141 = vpack.c.b16 %v1097, %v1093
    %v1142 = vpack.c.b16 %v1098, %v1094
    %v1143 = vpack.c.b16 %v1099, %v1095
    %v1144 = vpack.c.b16 %v1104, %v1100
    %v1145 = vpack.c.b16 %v1105, %v1101
    %v1146 = vpack.c.b16 %v1106, %v1102
    %v1147 = vpack.c.b16 %v1107, %v1103
    %v1148 = vpack.c.b16 %v1112, %v1108
    %v1149 = vpack.c.b16 %v1113, %v1109
    %v1150 = vpack.c.b16 %v1114, %v1110
    %v1151 = vpack.c.b16 %v1115, %v1111
    %v1152 = vpack.c.b16 %v1120, %v1116
    %v1153 = vpack.c.b16 %v1121, %v1117
    %v1154 = vpack.c.b16 %v1122, %v1118
    %v1155 = vpack.c.b16 %v1123, %v1119
    %1188 = vmatpush.bf16.msra.mxu0 %v1152
    %1189 = vmatpush.bf16.msra.mxu0 %v1148
    %1190 = vmatpush.bf16.msra.mxu0 %v1144
    %1191 = vmatpush.bf16.msra.mxu0 %v1140
    %1192 = vmatpush.bf16.msra.mxu0 %v1136
    %1193 = vmatpush.bf16.msra.mxu0 %v1132
    %1194 = vmatpush.bf16.msra.mxu0 %v1128
    %1195 = vmatpush.bf16.msra.mxu0 %v1124
    %1196 = vmatmul.bf16.gmra.mxu0 %v986
    %v1197 = vpop.f32.mrf.mxu0
    %v1198 = vadd.f32 0.0, %v1197
    %v1199 = vpop.f32.mrf.mxu0
    %1200 = vdwg.mxu0
    %1201 = vmatpush.bf16.msra.mxu0 %v1153
    %1202 = vmatpush.bf16.msra.mxu0 %v1149
    %1203 = vmatpush.bf16.msra.mxu0 %v1145
    %1204 = vmatpush.bf16.msra.mxu0 %v1141
    %1205 = vmatpush.bf16.msra.mxu0 %v1137
    %1206 = vmatpush.bf16.msra.mxu0 %v1133
    %1207 = vmatpush.bf16.msra.mxu0 %v1129
    %1208 = vmatpush.bf16.msra.mxu0 %v1125
    %1209 = vmatmul.bf16.gmra.mxu0 %v986
    %v1210 = vpop.f32.mrf.mxu0
    %v1211 = vadd.f32 0.0, %v1210
    %v1212 = vpop.f32.mrf.mxu0
    %1213 = vdwg.mxu0
    %1214 = vmatpush.bf16.msra.mxu0 %v1154
    %1215 = vmatpush.bf16.msra.mxu0 %v1150
    %1216 = vmatpush.bf16.msra.mxu0 %v1146
    %1217 = vmatpush.bf16.msra.mxu0 %v1142
    %1218 = vmatpush.bf16.msra.mxu0 %v1138
    %1219 = vmatpush.bf16.msra.mxu0 %v1134
    %1220 = vmatpush.bf16.msra.mxu0 %v1130
    %1221 = vmatpush.bf16.msra.mxu0 %v1126
    %1222 = vmatmul.bf16.gmra.mxu0 %v986
    %v1223 = vpop.f32.mrf.mxu0
    %v1224 = vadd.f32 0.0, %v1223
    %v1225 = vpop.f32.mrf.mxu0
    %1226 = vdwg.mxu0
    %1227 = vmatpush.bf16.msra.mxu0 %v1155
    %1228 = vmatpush.bf16.msra.mxu0 %v1151
    %1229 = vmatpush.bf16.msra.mxu0 %v1147
    %1230 = vmatpush.bf16.msra.mxu0 %v1143
    %1231 = vmatpush.bf16.msra.mxu0 %v1139
    %1232 = vmatpush.bf16.msra.mxu0 %v1135
    %1233 = vmatpush.bf16.msra.mxu0 %v1131
    %1234 = vmatpush.bf16.msra.mxu0 %v1127
    %1235 = vmatmul.bf16.gmra.mxu0 %v986
    %v1236 = vpop.f32.mrf.mxu0
    %v1237 = vadd.f32 0.0, %v1236
    %v1238 = vpop.f32.mrf.mxu0
    %1239 = vdwg.mxu0
    %v1240 = vadd.f32 %v992, %v1198
    %v1241 = vadd.f32 %v993, %v1211
    %v1242 = vadd.f32 %v994, %v1224
    %v1243 = vadd.f32 %v995, %v1237
    %v1244 = vxor.u32 %v1240, 2147483648
    %v1245 = vmul.f32 %v1244, 1.442695
    %v1246 = vpow.pop %v1245
    %v1247 = vadd.f32 %v1246, 1.0
    %v1248 = vrcp.pop %v1247
    %v1249 = vmul.f32 %v1247, %v1248
    %v1250 = vsub.f32 1.0, %v1249
    %v1251 = vmul.f32 %v1248, %v1250
    %v1252 = vadd.f32 %v1248, %v1251
    %vm1253 = vweird.f32 %v1247
    %vm1254 = vweird.f32 %v1248
    %vm1255 = vmor %vm1253, %vm1254
    %v1256 = vsel %vm1255, %v1248, %v1252
    %v1257 = vand.u32 2147483647, %v1247
    %vm1258 = vcmp.eq.f32.partialorder %v1257, 8.507059e+37
    %v1259 = vand.u32 %v1247, 2147483648
    %v1260 = vor.u32 1.1754944e-38, %v1259
    %v1261 = vsel %vm1258, %v1260, %v1256
    %v1262 = vmul.f32 1.0, %v1261
    %v1263 = vxor.u32 %v1241, 2147483648
    %v1264 = vmul.f32 %v1263, 1.442695
    %v1265 = vpow.pop %v1264
    %v1266 = vadd.f32 %v1265, 1.0
    %v1267 = vrcp.pop %v1266
    %v1268 = vmul.f32 %v1266, %v1267
    %v1269 = vsub.f32 1.0, %v1268
    %v1270 = vmul.f32 %v1267, %v1269
    %v1271 = vadd.f32 %v1267, %v1270
    %vm1272 = vweird.f32 %v1266
    %vm1273 = vweird.f32 %v1267
    %vm1274 = vmor %vm1272, %vm1273
    %v1275 = vsel %vm1274, %v1267, %v1271
    %v1276 = vand.u32 2147483647, %v1266
    %vm1277 = vcmp.eq.f32.partialorder %v1276, 8.507059e+37
    %v1278 = vand.u32 %v1266, 2147483648
    %v1279 = vor.u32 1.1754944e-38, %v1278
    %v1280 = vsel %vm1277, %v1279, %v1275
    %v1281 = vmul.f32 1.0, %v1280
    %v1282 = vtanh.pop %v1242
    %v1283 = vxor.u32 %v1243, 2147483648
    %v1284 = vmul.f32 %v1283, 1.442695
    %v1285 = vpow.pop %v1284
    %v1286 = vadd.f32 %v1285, 1.0
    %v1287 = vrcp.pop %v1286
    %v1288 = vmul.f32 %v1286, %v1287
    %v1289 = vsub.f32 1.0, %v1288
    %v1290 = vmul.f32 %v1287, %v1289
    %v1291 = vadd.f32 %v1287, %v1290
    %vm1292 = vweird.f32 %v1286
    %vm1293 = vweird.f32 %v1287
    %vm1294 = vmor %vm1292, %vm1293
    %v1295 = vsel %vm1294, %v1287, %v1291
    %v1296 = vand.u32 2147483647, %v1286
    %vm1297 = vcmp.eq.f32.partialorder %v1296, 8.507059e+37
    %v1298 = vand.u32 %v1286, 2147483648
    %v1299 = vor.u32 1.1754944e-38, %v1298
    %v1300 = vsel %vm1297, %v1299, %v1295
    %v1301 = vmul.f32 1.0, %v1300
    %v1302 = vmul.f32 %v1281, %v983
    %v1303 = vmul.f32 %v1262, %v1282
    %v1304 = vadd.f32 %v1302, %v1303
    %v1305 = vtanh.pop %v1304
    %v1306 = vmul.f32 %v1301, %v1305
    %v1307 = vpack.c.bf16 %v1306, %v1306
    %s1308 = scalar_lea.vmem %s2, 12
    %1309 = vst [vmem:[%s1308] sm:$0xf] %v1307
    %s1310 = scalar_lea.vmem %s0, 64
    %v1311 = vld [vmem:[%s1310] sm:$0xff]
    %v1312 = vld [vmem:[%s1310 + $0x8] sm:$0xff]
    %v1313 = vunpack.c.l.bf16 %v1311
    %v1314 = vunpack.c.h.bf16 %v1311
    %v1315 = vunpack.c.l.bf16 %v1312
    %v1316 = vunpack.c.h.bf16 %v1312
    %v1317 = vld [vmem:[#allocation2] sm:$0xff]
    %v1318 = vld [vmem:[#allocation2 + $0x8] sm:$0xff]
    %v1319 = vld [vmem:[#allocation2 + $0x10] sm:$0xff]
    %v1320 = vld [vmem:[#allocation2 + $0x18] sm:$0xff]
    %v1321 = vld [vmem:[#allocation2 + $0x20] sm:$0xff]
    %v1322 = vld [vmem:[#allocation2 + $0x28] sm:$0xff]
    %v1323 = vld [vmem:[#allocation2 + $0x30] sm:$0xff]
    %v1324 = vld [vmem:[#allocation2 + $0x38] sm:$0xff]
    %v1325 = vld [vmem:[#allocation2 + $0x40] sm:$0xff]
    %v1326 = vld [vmem:[#allocation2 + $0x48] sm:$0xff]
    %v1327 = vld [vmem:[#allocation2 + $0x50] sm:$0xff]
    %v1328 = vld [vmem:[#allocation2 + $0x58] sm:$0xff]
    %v1329 = vld [vmem:[#allocation2 + $0x60] sm:$0xff]
    %v1330 = vld [vmem:[#allocation2 + $0x68] sm:$0xff]
    %v1331 = vld [vmem:[#allocation2 + $0x70] sm:$0xff]
    %v1332 = vld [vmem:[#allocation2 + $0x78] sm:$0xff]
    %v1333 = vld [vmem:[#allocation2 + $0x80] sm:$0xff]
    %v1334 = vld [vmem:[#allocation2 + $0x88] sm:$0xff]
    %v1335 = vld [vmem:[#allocation2 + $0x90] sm:$0xff]
    %v1336 = vld [vmem:[#allocation2 + $0x98] sm:$0xff]
    %v1337 = vld [vmem:[#allocation2 + $0xa0] sm:$0xff]
    %v1338 = vld [vmem:[#allocation2 + $0xa8] sm:$0xff]
    %v1339 = vld [vmem:[#allocation2 + $0xb0] sm:$0xff]
    %v1340 = vld [vmem:[#allocation2 + $0xb8] sm:$0xff]
    %v1341 = vld [vmem:[#allocation2 + $0xc0] sm:$0xff]
    %v1342 = vld [vmem:[#allocation2 + $0xc8] sm:$0xff]
    %v1343 = vld [vmem:[#allocation2 + $0xd0] sm:$0xff]
    %v1344 = vld [vmem:[#allocation2 + $0xd8] sm:$0xff]
    %v1345 = vld [vmem:[#allocation2 + $0xe0] sm:$0xff]
    %v1346 = vld [vmem:[#allocation2 + $0xe8] sm:$0xff]
    %v1347 = vld [vmem:[#allocation2 + $0xf0] sm:$0xff]
    %v1348 = vld [vmem:[#allocation2 + $0xf8] sm:$0xff]
    %v1381 = vunpack.c.l.b16 %v1317
    %v1382 = vunpack.c.h.b16 %v1317
    %v1383 = vunpack.c.l.b16 %v1318
    %v1384 = vunpack.c.h.b16 %v1318
    %v1385 = vunpack.c.l.b16 %v1319
    %v1386 = vunpack.c.h.b16 %v1319
    %v1387 = vunpack.c.l.b16 %v1320
    %v1388 = vunpack.c.h.b16 %v1320
    %v1389 = vunpack.c.l.b16 %v1321
    %v1390 = vunpack.c.h.b16 %v1321
    %v1391 = vunpack.c.l.b16 %v1322
    %v1392 = vunpack.c.h.b16 %v1322
    %v1393 = vunpack.c.l.b16 %v1323
    %v1394 = vunpack.c.h.b16 %v1323
    %v1395 = vunpack.c.l.b16 %v1324
    %v1396 = vunpack.c.h.b16 %v1324
    %v1397 = vunpack.c.l.b16 %v1325
    %v1398 = vunpack.c.h.b16 %v1325
    %v1399 = vunpack.c.l.b16 %v1326
    %v1400 = vunpack.c.h.b16 %v1326
    %v1401 = vunpack.c.l.b16 %v1327
    %v1402 = vunpack.c.h.b16 %v1327
    %v1403 = vunpack.c.l.b16 %v1328
    %v1404 = vunpack.c.h.b16 %v1328
    %v1405 = vunpack.c.l.b16 %v1329
    %v1406 = vunpack.c.h.b16 %v1329
    %v1407 = vunpack.c.l.b16 %v1330
    %v1408 = vunpack.c.h.b16 %v1330
    %v1409 = vunpack.c.l.b16 %v1331
    %v1410 = vunpack.c.h.b16 %v1331
    %v1411 = vunpack.c.l.b16 %v1332
    %v1412 = vunpack.c.h.b16 %v1332
    %v1413 = vunpack.c.l.b16 %v1333
    %v1414 = vunpack.c.h.b16 %v1333
    %v1415 = vunpack.c.l.b16 %v1334
    %v1416 = vunpack.c.h.b16 %v1334
    %v1417 = vunpack.c.l.b16 %v1335
    %v1418 = vunpack.c.h.b16 %v1335
    %v1419 = vunpack.c.l.b16 %v1336
    %v1420 = vunpack.c.h.b16 %v1336
    %v1421 = vunpack.c.l.b16 %v1337
    %v1422 = vunpack.c.h.b16 %v1337
    %v1423 = vunpack.c.l.b16 %v1338
    %v1424 = vunpack.c.h.b16 %v1338
    %v1425 = vunpack.c.l.b16 %v1339
    %v1426 = vunpack.c.h.b16 %v1339
    %v1427 = vunpack.c.l.b16 %v1340
    %v1428 = vunpack.c.h.b16 %v1340
    %v1429 = vunpack.c.l.b16 %v1341
    %v1430 = vunpack.c.h.b16 %v1341
    %v1431 = vunpack.c.l.b16 %v1342
    %v1432 = vunpack.c.h.b16 %v1342
    %v1433 = vunpack.c.l.b16 %v1343
    %v1434 = vunpack.c.h.b16 %v1343
    %v1435 = vunpack.c.l.b16 %v1344
    %v1436 = vunpack.c.h.b16 %v1344
    %v1437 = vunpack.c.l.b16 %v1345
    %v1438 = vunpack.c.h.b16 %v1345
    %v1439 = vunpack.c.l.b16 %v1346
    %v1440 = vunpack.c.h.b16 %v1346
    %v1441 = vunpack.c.l.b16 %v1347
    %v1442 = vunpack.c.h.b16 %v1347
    %v1443 = vunpack.c.l.b16 %v1348
    %v1444 = vunpack.c.h.b16 %v1348
    %v1445 = vpack.c.b16 %v1385, %v1381
    %v1446 = vpack.c.b16 %v1386, %v1382
    %v1447 = vpack.c.b16 %v1387, %v1383
    %v1448 = vpack.c.b16 %v1388, %v1384
    %v1449 = vpack.c.b16 %v1393, %v1389
    %v1450 = vpack.c.b16 %v1394, %v1390
    %v1451 = vpack.c.b16 %v1395, %v1391
    %v1452 = vpack.c.b16 %v1396, %v1392
    %v1453 = vpack.c.b16 %v1401, %v1397
    %v1454 = vpack.c.b16 %v1402, %v1398
    %v1455 = vpack.c.b16 %v1403, %v1399
    %v1456 = vpack.c.b16 %v1404, %v1400
    %v1457 = vpack.c.b16 %v1409, %v1405
    %v1458 = vpack.c.b16 %v1410, %v1406
    %v1459 = vpack.c.b16 %v1411, %v1407
    %v1460 = vpack.c.b16 %v1412, %v1408
    %v1461 = vpack.c.b16 %v1417, %v1413
    %v1462 = vpack.c.b16 %v1418, %v1414
    %v1463 = vpack.c.b16 %v1419, %v1415
    %v1464 = vpack.c.b16 %v1420, %v1416
    %v1465 = vpack.c.b16 %v1425, %v1421
    %v1466 = vpack.c.b16 %v1426, %v1422
    %v1467 = vpack.c.b16 %v1427, %v1423
    %v1468 = vpack.c.b16 %v1428, %v1424
    %v1469 = vpack.c.b16 %v1433, %v1429
    %v1470 = vpack.c.b16 %v1434, %v1430
    %v1471 = vpack.c.b16 %v1435, %v1431
    %v1472 = vpack.c.b16 %v1436, %v1432
    %v1473 = vpack.c.b16 %v1441, %v1437
    %v1474 = vpack.c.b16 %v1442, %v1438
    %v1475 = vpack.c.b16 %v1443, %v1439
    %v1476 = vpack.c.b16 %v1444, %v1440
    %1509 = vmatpush.bf16.msra.mxu0 %v1473
    %1510 = vmatpush.bf16.msra.mxu0 %v1469
    %1511 = vmatpush.bf16.msra.mxu0 %v1465
    %1512 = vmatpush.bf16.msra.mxu0 %v1461
    %1513 = vmatpush.bf16.msra.mxu0 %v1457
    %1514 = vmatpush.bf16.msra.mxu0 %v1453
    %1515 = vmatpush.bf16.msra.mxu0 %v1449
    %1516 = vmatpush.bf16.msra.mxu0 %v1445
    %1517 = vmatmul.bf16.gmra.mxu0 %v1307
    %v1518 = vpop.f32.mrf.mxu0
    %v1519 = vadd.f32 0.0, %v1518
    %v1520 = vpop.f32.mrf.mxu0
    %1521 = vdwg.mxu0
    %1522 = vmatpush.bf16.msra.mxu0 %v1474
    %1523 = vmatpush.bf16.msra.mxu0 %v1470
    %1524 = vmatpush.bf16.msra.mxu0 %v1466
    %1525 = vmatpush.bf16.msra.mxu0 %v1462
    %1526 = vmatpush.bf16.msra.mxu0 %v1458
    %1527 = vmatpush.bf16.msra.mxu0 %v1454
    %1528 = vmatpush.bf16.msra.mxu0 %v1450
    %1529 = vmatpush.bf16.msra.mxu0 %v1446
    %1530 = vmatmul.bf16.gmra.mxu0 %v1307
    %v1531 = vpop.f32.mrf.mxu0
    %v1532 = vadd.f32 0.0, %v1531
    %v1533 = vpop.f32.mrf.mxu0
    %1534 = vdwg.mxu0
    %1535 = vmatpush.bf16.msra.mxu0 %v1475
    %1536 = vmatpush.bf16.msra.mxu0 %v1471
    %1537 = vmatpush.bf16.msra.mxu0 %v1467
    %1538 = vmatpush.bf16.msra.mxu0 %v1463
    %1539 = vmatpush.bf16.msra.mxu0 %v1459
    %1540 = vmatpush.bf16.msra.mxu0 %v1455
    %1541 = vmatpush.bf16.msra.mxu0 %v1451
    %1542 = vmatpush.bf16.msra.mxu0 %v1447
    %1543 = vmatmul.bf16.gmra.mxu0 %v1307
    %v1544 = vpop.f32.mrf.mxu0
    %v1545 = vadd.f32 0.0, %v1544
    %v1546 = vpop.f32.mrf.mxu0
    %1547 = vdwg.mxu0
    %1548 = vmatpush.bf16.msra.mxu0 %v1476
    %1549 = vmatpush.bf16.msra.mxu0 %v1472
    %1550 = vmatpush.bf16.msra.mxu0 %v1468
    %1551 = vmatpush.bf16.msra.mxu0 %v1464
    %1552 = vmatpush.bf16.msra.mxu0 %v1460
    %1553 = vmatpush.bf16.msra.mxu0 %v1456
    %1554 = vmatpush.bf16.msra.mxu0 %v1452
    %1555 = vmatpush.bf16.msra.mxu0 %v1448
    %1556 = vmatmul.bf16.gmra.mxu0 %v1307
    %v1557 = vpop.f32.mrf.mxu0
    %v1558 = vadd.f32 0.0, %v1557
    %v1559 = vpop.f32.mrf.mxu0
    %1560 = vdwg.mxu0
    %v1561 = vadd.f32 %v1313, %v1519
    %v1562 = vadd.f32 %v1314, %v1532
    %v1563 = vadd.f32 %v1315, %v1545
    %v1564 = vadd.f32 %v1316, %v1558
    %v1565 = vxor.u32 %v1561, 2147483648
    %v1566 = vmul.f32 %v1565, 1.442695
    %v1567 = vpow.pop %v1566
    %v1568 = vadd.f32 %v1567, 1.0
    %v1569 = vrcp.pop %v1568
    %v1570 = vmul.f32 %v1568, %v1569
    %v1571 = vsub.f32 1.0, %v1570
    %v1572 = vmul.f32 %v1569, %v1571
    %v1573 = vadd.f32 %v1569, %v1572
    %vm1574 = vweird.f32 %v1568
    %vm1575 = vweird.f32 %v1569
    %vm1576 = vmor %vm1574, %vm1575
    %v1577 = vsel %vm1576, %v1569, %v1573
    %v1578 = vand.u32 2147483647, %v1568
    %vm1579 = vcmp.eq.f32.partialorder %v1578, 8.507059e+37
    %v1580 = vand.u32 %v1568, 2147483648
    %v1581 = vor.u32 1.1754944e-38, %v1580
    %v1582 = vsel %vm1579, %v1581, %v1577
    %v1583 = vmul.f32 1.0, %v1582
    %v1584 = vxor.u32 %v1562, 2147483648
    %v1585 = vmul.f32 %v1584, 1.442695
    %v1586 = vpow.pop %v1585
    %v1587 = vadd.f32 %v1586, 1.0
    %v1588 = vrcp.pop %v1587
    %v1589 = vmul.f32 %v1587, %v1588
    %v1590 = vsub.f32 1.0, %v1589
    %v1591 = vmul.f32 %v1588, %v1590
    %v1592 = vadd.f32 %v1588, %v1591
    %vm1593 = vweird.f32 %v1587
    %vm1594 = vweird.f32 %v1588
    %vm1595 = vmor %vm1593, %vm1594
    %v1596 = vsel %vm1595, %v1588, %v1592
    %v1597 = vand.u32 2147483647, %v1587
    %vm1598 = vcmp.eq.f32.partialorder %v1597, 8.507059e+37
    %v1599 = vand.u32 %v1587, 2147483648
    %v1600 = vor.u32 1.1754944e-38, %v1599
    %v1601 = vsel %vm1598, %v1600, %v1596
    %v1602 = vmul.f32 1.0, %v1601
    %v1603 = vtanh.pop %v1563
    %v1604 = vxor.u32 %v1564, 2147483648
    %v1605 = vmul.f32 %v1604, 1.442695
    %v1606 = vpow.pop %v1605
    %v1607 = vadd.f32 %v1606, 1.0
    %v1608 = vrcp.pop %v1607
    %v1609 = vmul.f32 %v1607, %v1608
    %v1610 = vsub.f32 1.0, %v1609
    %v1611 = vmul.f32 %v1608, %v1610
    %v1612 = vadd.f32 %v1608, %v1611
    %vm1613 = vweird.f32 %v1607
    %vm1614 = vweird.f32 %v1608
    %vm1615 = vmor %vm1613, %vm1614
    %v1616 = vsel %vm1615, %v1608, %v1612
    %v1617 = vand.u32 2147483647, %v1607
    %vm1618 = vcmp.eq.f32.partialorder %v1617, 8.507059e+37
    %v1619 = vand.u32 %v1607, 2147483648
    %v1620 = vor.u32 1.1754944e-38, %v1619
    %v1621 = vsel %vm1618, %v1620, %v1616
    %v1622 = vmul.f32 1.0, %v1621
    %v1623 = vmul.f32 %v1602, %v1304
    %v1624 = vmul.f32 %v1583, %v1603
    %v1625 = vadd.f32 %v1623, %v1624
    %v1626 = vtanh.pop %v1625
    %v1627 = vmul.f32 %v1622, %v1626
    %v1628 = vpack.c.bf16 %v1627, %v1627
    %s1629 = scalar_lea.vmem %s2, 16
    %1630 = vst [vmem:[%s1629] sm:$0xf] %v1628
    %s1631 = scalar_lea.vmem %s0, 80
    %v1632 = vld [vmem:[%s1631] sm:$0xff]
    %v1633 = vld [vmem:[%s1631 + $0x8] sm:$0xff]
    %v1634 = vunpack.c.l.bf16 %v1632
    %v1635 = vunpack.c.h.bf16 %v1632
    %v1636 = vunpack.c.l.bf16 %v1633
    %v1637 = vunpack.c.h.bf16 %v1633
    %v1638 = vld [vmem:[#allocation2] sm:$0xff]
    %v1639 = vld [vmem:[#allocation2 + $0x8] sm:$0xff]
    %v1640 = vld [vmem:[#allocation2 + $0x10] sm:$0xff]
    %v1641 = vld [vmem:[#allocation2 + $0x18] sm:$0xff]
    %v1642 = vld [vmem:[#allocation2 + $0x20] sm:$0xff]
    %v1643 = vld [vmem:[#allocation2 + $0x28] sm:$0xff]
    %v1644 = vld [vmem:[#allocation2 + $0x30] sm:$0xff]
    %v1645 = vld [vmem:[#allocation2 + $0x38] sm:$0xff]
    %v1646 = vld [vmem:[#allocation2 + $0x40] sm:$0xff]
    %v1647 = vld [vmem:[#allocation2 + $0x48] sm:$0xff]
    %v1648 = vld [vmem:[#allocation2 + $0x50] sm:$0xff]
    %v1649 = vld [vmem:[#allocation2 + $0x58] sm:$0xff]
    %v1650 = vld [vmem:[#allocation2 + $0x60] sm:$0xff]
    %v1651 = vld [vmem:[#allocation2 + $0x68] sm:$0xff]
    %v1652 = vld [vmem:[#allocation2 + $0x70] sm:$0xff]
    %v1653 = vld [vmem:[#allocation2 + $0x78] sm:$0xff]
    %v1654 = vld [vmem:[#allocation2 + $0x80] sm:$0xff]
    %v1655 = vld [vmem:[#allocation2 + $0x88] sm:$0xff]
    %v1656 = vld [vmem:[#allocation2 + $0x90] sm:$0xff]
    %v1657 = vld [vmem:[#allocation2 + $0x98] sm:$0xff]
    %v1658 = vld [vmem:[#allocation2 + $0xa0] sm:$0xff]
    %v1659 = vld [vmem:[#allocation2 + $0xa8] sm:$0xff]
    %v1660 = vld [vmem:[#allocation2 + $0xb0] sm:$0xff]
    %v1661 = vld [vmem:[#allocation2 + $0xb8] sm:$0xff]
    %v1662 = vld [vmem:[#allocation2 + $0xc0] sm:$0xff]
    %v1663 = vld [vmem:[#allocation2 + $0xc8] sm:$0xff]
    %v1664 = vld [vmem:[#allocation2 + $0xd0] sm:$0xff]
    %v1665 = vld [vmem:[#allocation2 + $0xd8] sm:$0xff]
    %v1666 = vld [vmem:[#allocation2 + $0xe0] sm:$0xff]
    %v1667 = vld [vmem:[#allocation2 + $0xe8] sm:$0xff]
    %v1668 = vld [vmem:[#allocation2 + $0xf0] sm:$0xff]
    %v1669 = vld [vmem:[#allocation2 + $0xf8] sm:$0xff]
    %v1702 = vunpack.c.l.b16 %v1638
    %v1703 = vunpack.c.h.b16 %v1638
    %v1704 = vunpack.c.l.b16 %v1639
    %v1705 = vunpack.c.h.b16 %v1639
    %v1706 = vunpack.c.l.b16 %v1640
    %v1707 = vunpack.c.h.b16 %v1640
    %v1708 = vunpack.c.l.b16 %v1641
    %v1709 = vunpack.c.h.b16 %v1641
    %v1710 = vunpack.c.l.b16 %v1642
    %v1711 = vunpack.c.h.b16 %v1642
    %v1712 = vunpack.c.l.b16 %v1643
    %v1713 = vunpack.c.h.b16 %v1643
    %v1714 = vunpack.c.l.b16 %v1644
    %v1715 = vunpack.c.h.b16 %v1644
    %v1716 = vunpack.c.l.b16 %v1645
    %v1717 = vunpack.c.h.b16 %v1645
    %v1718 = vunpack.c.l.b16 %v1646
    %v1719 = vunpack.c.h.b16 %v1646
    %v1720 = vunpack.c.l.b16 %v1647
    %v1721 = vunpack.c.h.b16 %v1647
    %v1722 = vunpack.c.l.b16 %v1648
    %v1723 = vunpack.c.h.b16 %v1648
    %v1724 = vunpack.c.l.b16 %v1649
    %v1725 = vunpack.c.h.b16 %v1649
    %v1726 = vunpack.c.l.b16 %v1650
    %v1727 = vunpack.c.h.b16 %v1650
    %v1728 = vunpack.c.l.b16 %v1651
    %v1729 = vunpack.c.h.b16 %v1651
    %v1730 = vunpack.c.l.b16 %v1652
    %v1731 = vunpack.c.h.b16 %v1652
    %v1732 = vunpack.c.l.b16 %v1653
    %v1733 = vunpack.c.h.b16 %v1653
    %v1734 = vunpack.c.l.b16 %v1654
    %v1735 = vunpack.c.h.b16 %v1654
    %v1736 = vunpack.c.l.b16 %v1655
    %v1737 = vunpack.c.h.b16 %v1655
    %v1738 = vunpack.c.l.b16 %v1656
    %v1739 = vunpack.c.h.b16 %v1656
    %v1740 = vunpack.c.l.b16 %v1657
    %v1741 = vunpack.c.h.b16 %v1657
    %v1742 = vunpack.c.l.b16 %v1658
    %v1743 = vunpack.c.h.b16 %v1658
    %v1744 = vunpack.c.l.b16 %v1659
    %v1745 = vunpack.c.h.b16 %v1659
    %v1746 = vunpack.c.l.b16 %v1660
    %v1747 = vunpack.c.h.b16 %v1660
    %v1748 = vunpack.c.l.b16 %v1661
    %v1749 = vunpack.c.h.b16 %v1661
    %v1750 = vunpack.c.l.b16 %v1662
    %v1751 = vunpack.c.h.b16 %v1662
    %v1752 = vunpack.c.l.b16 %v1663
    %v1753 = vunpack.c.h.b16 %v1663
    %v1754 = vunpack.c.l.b16 %v1664
    %v1755 = vunpack.c.h.b16 %v1664
    %v1756 = vunpack.c.l.b16 %v1665
    %v1757 = vunpack.c.h.b16 %v1665
    %v1758 = vunpack.c.l.b16 %v1666
    %v1759 = vunpack.c.h.b16 %v1666
    %v1760 = vunpack.c.l.b16 %v1667
    %v1761 = vunpack.c.h.b16 %v1667
    %v1762 = vunpack.c.l.b16 %v1668
    %v1763 = vunpack.c.h.b16 %v1668
    %v1764 = vunpack.c.l.b16 %v1669
    %v1765 = vunpack.c.h.b16 %v1669
    %v1766 = vpack.c.b16 %v1706, %v1702
    %v1767 = vpack.c.b16 %v1707, %v1703
    %v1768 = vpack.c.b16 %v1708, %v1704
    %v1769 = vpack.c.b16 %v1709, %v1705
    %v1770 = vpack.c.b16 %v1714, %v1710
    %v1771 = vpack.c.b16 %v1715, %v1711
    %v1772 = vpack.c.b16 %v1716, %v1712
    %v1773 = vpack.c.b16 %v1717, %v1713
    %v1774 = vpack.c.b16 %v1722, %v1718
    %v1775 = vpack.c.b16 %v1723, %v1719
    %v1776 = vpack.c.b16 %v1724, %v1720
    %v1777 = vpack.c.b16 %v1725, %v1721
    %v1778 = vpack.c.b16 %v1730, %v1726
    %v1779 = vpack.c.b16 %v1731, %v1727
    %v1780 = vpack.c.b16 %v1732, %v1728
    %v1781 = vpack.c.b16 %v1733, %v1729
    %v1782 = vpack.c.b16 %v1738, %v1734
    %v1783 = vpack.c.b16 %v1739, %v1735
    %v1784 = vpack.c.b16 %v1740, %v1736
    %v1785 = vpack.c.b16 %v1741, %v1737
    %v1786 = vpack.c.b16 %v1746, %v1742
    %v1787 = vpack.c.b16 %v1747, %v1743
    %v1788 = vpack.c.b16 %v1748, %v1744
    %v1789 = vpack.c.b16 %v1749, %v1745
    %v1790 = vpack.c.b16 %v1754, %v1750
    %v1791 = vpack.c.b16 %v1755, %v1751
    %v1792 = vpack.c.b16 %v1756, %v1752
    %v1793 = vpack.c.b16 %v1757, %v1753
    %v1794 = vpack.c.b16 %v1762, %v1758
    %v1795 = vpack.c.b16 %v1763, %v1759
    %v1796 = vpack.c.b16 %v1764, %v1760
    %v1797 = vpack.c.b16 %v1765, %v1761
    %1830 = vmatpush.bf16.msra.mxu0 %v1794
    %1831 = vmatpush.bf16.msra.mxu0 %v1790
    %1832 = vmatpush.bf16.msra.mxu0 %v1786
    %1833 = vmatpush.bf16.msra.mxu0 %v1782
    %1834 = vmatpush.bf16.msra.mxu0 %v1778
    %1835 = vmatpush.bf16.msra.mxu0 %v1774
    %1836 = vmatpush.bf16.msra.mxu0 %v1770
    %1837 = vmatpush.bf16.msra.mxu0 %v1766
    %1838 = vmatmul.bf16.gmra.mxu0 %v1628
    %v1839 = vpop.f32.mrf.mxu0
    %v1840 = vadd.f32 0.0, %v1839
    %v1841 = vpop.f32.mrf.mxu0
    %1842 = vdwg.mxu0
    %1843 = vmatpush.bf16.msra.mxu0 %v1795
    %1844 = vmatpush.bf16.msra.mxu0 %v1791
    %1845 = vmatpush.bf16.msra.mxu0 %v1787
    %1846 = vmatpush.bf16.msra.mxu0 %v1783
    %1847 = vmatpush.bf16.msra.mxu0 %v1779
    %1848 = vmatpush.bf16.msra.mxu0 %v1775
    %1849 = vmatpush.bf16.msra.mxu0 %v1771
    %1850 = vmatpush.bf16.msra.mxu0 %v1767
    %1851 = vmatmul.bf16.gmra.mxu0 %v1628
    %v1852 = vpop.f32.mrf.mxu0
    %v1853 = vadd.f32 0.0, %v1852
    %v1854 = vpop.f32.mrf.mxu0
    %1855 = vdwg.mxu0
    %1856 = vmatpush.bf16.msra.mxu0 %v1796
    %1857 = vmatpush.bf16.msra.mxu0 %v1792
    %1858 = vmatpush.bf16.msra.mxu0 %v1788
    %1859 = vmatpush.bf16.msra.mxu0 %v1784
    %1860 = vmatpush.bf16.msra.mxu0 %v1780
    %1861 = vmatpush.bf16.msra.mxu0 %v1776
    %1862 = vmatpush.bf16.msra.mxu0 %v1772
    %1863 = vmatpush.bf16.msra.mxu0 %v1768
    %1864 = vmatmul.bf16.gmra.mxu0 %v1628
    %v1865 = vpop.f32.mrf.mxu0
    %v1866 = vadd.f32 0.0, %v1865
    %v1867 = vpop.f32.mrf.mxu0
    %1868 = vdwg.mxu0
    %1869 = vmatpush.bf16.msra.mxu0 %v1797
    %1870 = vmatpush.bf16.msra.mxu0 %v1793
    %1871 = vmatpush.bf16.msra.mxu0 %v1789
    %1872 = vmatpush.bf16.msra.mxu0 %v1785
    %1873 = vmatpush.bf16.msra.mxu0 %v1781
    %1874 = vmatpush.bf16.msra.mxu0 %v1777
    %1875 = vmatpush.bf16.msra.mxu0 %v1773
    %1876 = vmatpush.bf16.msra.mxu0 %v1769
    %1877 = vmatmul.bf16.gmra.mxu0 %v1628
    %v1878 = vpop.f32.mrf.mxu0
    %v1879 = vadd.f32 0.0, %v1878
    %v1880 = vpop.f32.mrf.mxu0
    %1881 = vdwg.mxu0
    %v1882 = vadd.f32 %v1634, %v1840
    %v1883 = vadd.f32 %v1635, %v1853
    %v1884 = vadd.f32 %v1636, %v1866
    %v1885 = vadd.f32 %v1637, %v1879
    %v1886 = vxor.u32 %v1882, 2147483648
    %v1887 = vmul.f32 %v1886, 1.442695
    %v1888 = vpow.pop %v1887
    %v1889 = vadd.f32 %v1888, 1.0
    %v1890 = vrcp.pop %v1889
    %v1891 = vmul.f32 %v1889, %v1890
    %v1892 = vsub.f32 1.0, %v1891
    %v1893 = vmul.f32 %v1890, %v1892
    %v1894 = vadd.f32 %v1890, %v1893
    %vm1895 = vweird.f32 %v1889
    %vm1896 = vweird.f32 %v1890
    %vm1897 = vmor %vm1895, %vm1896
    %v1898 = vsel %vm1897, %v1890, %v1894
    %v1899 = vand.u32 2147483647, %v1889
    %vm1900 = vcmp.eq.f32.partialorder %v1899, 8.507059e+37
    %v1901 = vand.u32 %v1889, 2147483648
    %v1902 = vor.u32 1.1754944e-38, %v1901
    %v1903 = vsel %vm1900, %v1902, %v1898
    %v1904 = vmul.f32 1.0, %v1903
    %v1905 = vxor.u32 %v1883, 2147483648
    %v1906 = vmul.f32 %v1905, 1.442695
    %v1907 = vpow.pop %v1906
    %v1908 = vadd.f32 %v1907, 1.0
    %v1909 = vrcp.pop %v1908
    %v1910 = vmul.f32 %v1908, %v1909
    %v1911 = vsub.f32 1.0, %v1910
    %v1912 = vmul.f32 %v1909, %v1911
    %v1913 = vadd.f32 %v1909, %v1912
    %vm1914 = vweird.f32 %v1908
    %vm1915 = vweird.f32 %v1909
    %vm1916 = vmor %vm1914, %vm1915
    %v1917 = vsel %vm1916, %v1909, %v1913
    %v1918 = vand.u32 2147483647, %v1908
    %vm1919 = vcmp.eq.f32.partialorder %v1918, 8.507059e+37
    %v1920 = vand.u32 %v1908, 2147483648
    %v1921 = vor.u32 1.1754944e-38, %v1920
    %v1922 = vsel %vm1919, %v1921, %v1917
    %v1923 = vmul.f32 1.0, %v1922
    %v1924 = vtanh.pop %v1884
    %v1925 = vxor.u32 %v1885, 2147483648
    %v1926 = vmul.f32 %v1925, 1.442695
    %v1927 = vpow.pop %v1926
    %v1928 = vadd.f32 %v1927, 1.0
    %v1929 = vrcp.pop %v1928
    %v1930 = vmul.f32 %v1928, %v1929
    %v1931 = vsub.f32 1.0, %v1930
    %v1932 = vmul.f32 %v1929, %v1931
    %v1933 = vadd.f32 %v1929, %v1932
    %vm1934 = vweird.f32 %v1928
    %vm1935 = vweird.f32 %v1929
    %vm1936 = vmor %vm1934, %vm1935
    %v1937 = vsel %vm1936, %v1929, %v1933
    %v1938 = vand.u32 2147483647, %v1928
    %vm1939 = vcmp.eq.f32.partialorder %v1938, 8.507059e+37
    %v1940 = vand.u32 %v1928, 2147483648
    %v1941 = vor.u32 1.1754944e-38, %v1940
    %v1942 = vsel %vm1939, %v1941, %v1937
    %v1943 = vmul.f32 1.0, %v1942
    %v1944 = vmul.f32 %v1923, %v1625
    %v1945 = vmul.f32 %v1904, %v1924
    %v1946 = vadd.f32 %v1944, %v1945
    %v1947 = vtanh.pop %v1946
    %v1948 = vmul.f32 %v1943, %v1947
    %v1949 = vpack.c.bf16 %v1948, %v1948
    %s1950 = scalar_lea.vmem %s2, 20
    %1951 = vst [vmem:[%s1950] sm:$0xf] %v1949
    %s1952 = scalar_lea.vmem %s0, 96
    %v1953 = vld [vmem:[%s1952] sm:$0xff]
    %v1954 = vld [vmem:[%s1952 + $0x8] sm:$0xff]
    %v1955 = vunpack.c.l.bf16 %v1953
    %v1956 = vunpack.c.h.bf16 %v1953
    %v1957 = vunpack.c.l.bf16 %v1954
    %v1958 = vunpack.c.h.bf16 %v1954
    %v1959 = vld [vmem:[#allocation2] sm:$0xff]
    %v1960 = vld [vmem:[#allocation2 + $0x8] sm:$0xff]
    %v1961 = vld [vmem:[#allocation2 + $0x10] sm:$0xff]
    %v1962 = vld [vmem:[#allocation2 + $0x18] sm:$0xff]
    %v1963 = vld [vmem:[#allocation2 + $0x20] sm:$0xff]
    %v1964 = vld [vmem:[#allocation2 + $0x28] sm:$0xff]
    %v1965 = vld [vmem:[#allocation2 + $0x30] sm:$0xff]
    %v1966 = vld [vmem:[#allocation2 + $0x38] sm:$0xff]
    %v1967 = vld [vmem:[#allocation2 + $0x40] sm:$0xff]
    %v1968 = vld [vmem:[#allocation2 + $0x48] sm:$0xff]
    %v1969 = vld [vmem:[#allocation2 + $0x50] sm:$0xff]
    %v1970 = vld [vmem:[#allocation2 + $0x58] sm:$0xff]
    %v1971 = vld [vmem:[#allocation2 + $0x60] sm:$0xff]
    %v1972 = vld [vmem:[#allocation2 + $0x68] sm:$0xff]
    %v1973 = vld [vmem:[#allocation2 + $0x70] sm:$0xff]
    %v1974 = vld [vmem:[#allocation2 + $0x78] sm:$0xff]
    %v1975 = vld [vmem:[#allocation2 + $0x80] sm:$0xff]
    %v1976 = vld [vmem:[#allocation2 + $0x88] sm:$0xff]
    %v1977 = vld [vmem:[#allocation2 + $0x90] sm:$0xff]
    %v1978 = vld [vmem:[#allocation2 + $0x98] sm:$0xff]
    %v1979 = vld [vmem:[#allocation2 + $0xa0] sm:$0xff]
    %v1980 = vld [vmem:[#allocation2 + $0xa8] sm:$0xff]
    %v1981 = vld [vmem:[#allocation2 + $0xb0] sm:$0xff]
    %v1982 = vld [vmem:[#allocation2 + $0xb8] sm:$0xff]
    %v1983 = vld [vmem:[#allocation2 + $0xc0] sm:$0xff]
    %v1984 = vld [vmem:[#allocation2 + $0xc8] sm:$0xff]
    %v1985 = vld [vmem:[#allocation2 + $0xd0] sm:$0xff]
    %v1986 = vld [vmem:[#allocation2 + $0xd8] sm:$0xff]
    %v1987 = vld [vmem:[#allocation2 + $0xe0] sm:$0xff]
    %v1988 = vld [vmem:[#allocation2 + $0xe8] sm:$0xff]
    %v1989 = vld [vmem:[#allocation2 + $0xf0] sm:$0xff]
    %v1990 = vld [vmem:[#allocation2 + $0xf8] sm:$0xff]
    %v2023 = vunpack.c.l.b16 %v1959
    %v2024 = vunpack.c.h.b16 %v1959
    %v2025 = vunpack.c.l.b16 %v1960
    %v2026 = vunpack.c.h.b16 %v1960
    %v2027 = vunpack.c.l.b16 %v1961
    %v2028 = vunpack.c.h.b16 %v1961
    %v2029 = vunpack.c.l.b16 %v1962
    %v2030 = vunpack.c.h.b16 %v1962
    %v2031 = vunpack.c.l.b16 %v1963
    %v2032 = vunpack.c.h.b16 %v1963
    %v2033 = vunpack.c.l.b16 %v1964
    %v2034 = vunpack.c.h.b16 %v1964
    %v2035 = vunpack.c.l.b16 %v1965
    %v2036 = vunpack.c.h.b16 %v1965
    %v2037 = vunpack.c.l.b16 %v1966
    %v2038 = vunpack.c.h.b16 %v1966
    %v2039 = vunpack.c.l.b16 %v1967
    %v2040 = vunpack.c.h.b16 %v1967
    %v2041 = vunpack.c.l.b16 %v1968
    %v2042 = vunpack.c.h.b16 %v1968
    %v2043 = vunpack.c.l.b16 %v1969
    %v2044 = vunpack.c.h.b16 %v1969
    %v2045 = vunpack.c.l.b16 %v1970
    %v2046 = vunpack.c.h.b16 %v1970
    %v2047 = vunpack.c.l.b16 %v1971
    %v2048 = vunpack.c.h.b16 %v1971
    %v2049 = vunpack.c.l.b16 %v1972
    %v2050 = vunpack.c.h.b16 %v1972
    %v2051 = vunpack.c.l.b16 %v1973
    %v2052 = vunpack.c.h.b16 %v1973
    %v2053 = vunpack.c.l.b16 %v1974
    %v2054 = vunpack.c.h.b16 %v1974
    %v2055 = vunpack.c.l.b16 %v1975
    %v2056 = vunpack.c.h.b16 %v1975
    %v2057 = vunpack.c.l.b16 %v1976
    %v2058 = vunpack.c.h.b16 %v1976
    %v2059 = vunpack.c.l.b16 %v1977
    %v2060 = vunpack.c.h.b16 %v1977
    %v2061 = vunpack.c.l.b16 %v1978
    %v2062 = vunpack.c.h.b16 %v1978
    %v2063 = vunpack.c.l.b16 %v1979
    %v2064 = vunpack.c.h.b16 %v1979
    %v2065 = vunpack.c.l.b16 %v1980
    %v2066 = vunpack.c.h.b16 %v1980
    %v2067 = vunpack.c.l.b16 %v1981
    %v2068 = vunpack.c.h.b16 %v1981
    %v2069 = vunpack.c.l.b16 %v1982
    %v2070 = vunpack.c.h.b16 %v1982
    %v2071 = vunpack.c.l.b16 %v1983
    %v2072 = vunpack.c.h.b16 %v1983
    %v2073 = vunpack.c.l.b16 %v1984
    %v2074 = vunpack.c.h.b16 %v1984
    %v2075 = vunpack.c.l.b16 %v1985
    %v2076 = vunpack.c.h.b16 %v1985
    %v2077 = vunpack.c.l.b16 %v1986
    %v2078 = vunpack.c.h.b16 %v1986
    %v2079 = vunpack.c.l.b16 %v1987
    %v2080 = vunpack.c.h.b16 %v1987
    %v2081 = vunpack.c.l.b16 %v1988
    %v2082 = vunpack.c.h.b16 %v1988
    %v2083 = vunpack.c.l.b16 %v1989
    %v2084 = vunpack.c.h.b16 %v1989
    %v2085 = vunpack.c.l.b16 %v1990
    %v2086 = vunpack.c.h.b16 %v1990
    %v2087 = vpack.c.b16 %v2027, %v2023
    %v2088 = vpack.c.b16 %v2028, %v2024
    %v2089 = vpack.c.b16 %v2029, %v2025
    %v2090 = vpack.c.b16 %v2030, %v2026
    %v2091 = vpack.c.b16 %v2035, %v2031
    %v2092 = vpack.c.b16 %v2036, %v2032
    %v2093 = vpack.c.b16 %v2037, %v2033
    %v2094 = vpack.c.b16 %v2038, %v2034
    %v2095 = vpack.c.b16 %v2043, %v2039
    %v2096 = vpack.c.b16 %v2044, %v2040
    %v2097 = vpack.c.b16 %v2045, %v2041
    %v2098 = vpack.c.b16 %v2046, %v2042
    %v2099 = vpack.c.b16 %v2051, %v2047
    %v2100 = vpack.c.b16 %v2052, %v2048
    %v2101 = vpack.c.b16 %v2053, %v2049
    %v2102 = vpack.c.b16 %v2054, %v2050
    %v2103 = vpack.c.b16 %v2059, %v2055
    %v2104 = vpack.c.b16 %v2060, %v2056
    %v2105 = vpack.c.b16 %v2061, %v2057
    %v2106 = vpack.c.b16 %v2062, %v2058
    %v2107 = vpack.c.b16 %v2067, %v2063
    %v2108 = vpack.c.b16 %v2068, %v2064
    %v2109 = vpack.c.b16 %v2069, %v2065
    %v2110 = vpack.c.b16 %v2070, %v2066
    %v2111 = vpack.c.b16 %v2075, %v2071
    %v2112 = vpack.c.b16 %v2076, %v2072
    %v2113 = vpack.c.b16 %v2077, %v2073
    %v2114 = vpack.c.b16 %v2078, %v2074
    %v2115 = vpack.c.b16 %v2083, %v2079
    %v2116 = vpack.c.b16 %v2084, %v2080
    %v2117 = vpack.c.b16 %v2085, %v2081
    %v2118 = vpack.c.b16 %v2086, %v2082
    %2151 = vmatpush.bf16.msra.mxu0 %v2115
    %2152 = vmatpush.bf16.msra.mxu0 %v2111
    %2153 = vmatpush.bf16.msra.mxu0 %v2107
    %2154 = vmatpush.bf16.msra.mxu0 %v2103
    %2155 = vmatpush.bf16.msra.mxu0 %v2099
    %2156 = vmatpush.bf16.msra.mxu0 %v2095
    %2157 = vmatpush.bf16.msra.mxu0 %v2091
    %2158 = vmatpush.bf16.msra.mxu0 %v2087
    %2159 = vmatmul.bf16.gmra.mxu0 %v1949
    %v2160 = vpop.f32.mrf.mxu0
    %v2161 = vadd.f32 0.0, %v2160
    %v2162 = vpop.f32.mrf.mxu0
    %2163 = vdwg.mxu0
    %2164 = vmatpush.bf16.msra.mxu0 %v2116
    %2165 = vmatpush.bf16.msra.mxu0 %v2112
    %2166 = vmatpush.bf16.msra.mxu0 %v2108
    %2167 = vmatpush.bf16.msra.mxu0 %v2104
    %2168 = vmatpush.bf16.msra.mxu0 %v2100
    %2169 = vmatpush.bf16.msra.mxu0 %v2096
    %2170 = vmatpush.bf16.msra.mxu0 %v2092
    %2171 = vmatpush.bf16.msra.mxu0 %v2088
    %2172 = vmatmul.bf16.gmra.mxu0 %v1949
    %v2173 = vpop.f32.mrf.mxu0
    %v2174 = vadd.f32 0.0, %v2173
    %v2175 = vpop.f32.mrf.mxu0
    %2176 = vdwg.mxu0
    %2177 = vmatpush.bf16.msra.mxu0 %v2117
    %2178 = vmatpush.bf16.msra.mxu0 %v2113
    %2179 = vmatpush.bf16.msra.mxu0 %v2109
    %2180 = vmatpush.bf16.msra.mxu0 %v2105
    %2181 = vmatpush.bf16.msra.mxu0 %v2101
    %2182 = vmatpush.bf16.msra.mxu0 %v2097
    %2183 = vmatpush.bf16.msra.mxu0 %v2093
    %2184 = vmatpush.bf16.msra.mxu0 %v2089
    %2185 = vmatmul.bf16.gmra.mxu0 %v1949
    %v2186 = vpop.f32.mrf.mxu0
    %v2187 = vadd.f32 0.0, %v2186
    %v2188 = vpop.f32.mrf.mxu0
    %2189 = vdwg.mxu0
    %2190 = vmatpush.bf16.msra.mxu0 %v2118
    %2191 = vmatpush.bf16.msra.mxu0 %v2114
    %2192 = vmatpush.bf16.msra.mxu0 %v2110
    %2193 = vmatpush.bf16.msra.mxu0 %v2106
    %2194 = vmatpush.bf16.msra.mxu0 %v2102
    %2195 = vmatpush.bf16.msra.mxu0 %v2098
    %2196 = vmatpush.bf16.msra.mxu0 %v2094
    %2197 = vmatpush.bf16.msra.mxu0 %v2090
    %2198 = vmatmul.bf16.gmra.mxu0 %v1949
    %v2199 = vpop.f32.mrf.mxu0
    %v2200 = vadd.f32 0.0, %v2199
    %v2201 = vpop.f32.mrf.mxu0
    %2202 = vdwg.mxu0
    %v2203 = vadd.f32 %v1955, %v2161
    %v2204 = vadd.f32 %v1956, %v2174
    %v2205 = vadd.f32 %v1957, %v2187
    %v2206 = vadd.f32 %v1958, %v2200
    %v2207 = vxor.u32 %v2203, 2147483648
    %v2208 = vmul.f32 %v2207, 1.442695
    %v2209 = vpow.pop %v2208
    %v2210 = vadd.f32 %v2209, 1.0
    %v2211 = vrcp.pop %v2210
    %v2212 = vmul.f32 %v2210, %v2211
    %v2213 = vsub.f32 1.0, %v2212
    %v2214 = vmul.f32 %v2211, %v2213
    %v2215 = vadd.f32 %v2211, %v2214
    %vm2216 = vweird.f32 %v2210
    %vm2217 = vweird.f32 %v2211
    %vm2218 = vmor %vm2216, %vm2217
    %v2219 = vsel %vm2218, %v2211, %v2215
    %v2220 = vand.u32 2147483647, %v2210
    %vm2221 = vcmp.eq.f32.partialorder %v2220, 8.507059e+37
    %v2222 = vand.u32 %v2210, 2147483648
    %v2223 = vor.u32 1.1754944e-38, %v2222
    %v2224 = vsel %vm2221, %v2223, %v2219
    %v2225 = vmul.f32 1.0, %v2224
    %v2226 = vxor.u32 %v2204, 2147483648
    %v2227 = vmul.f32 %v2226, 1.442695
    %v2228 = vpow.pop %v2227
    %v2229 = vadd.f32 %v2228, 1.0
    %v2230 = vrcp.pop %v2229
    %v2231 = vmul.f32 %v2229, %v2230
    %v2232 = vsub.f32 1.0, %v2231
    %v2233 = vmul.f32 %v2230, %v2232
    %v2234 = vadd.f32 %v2230, %v2233
    %vm2235 = vweird.f32 %v2229
    %vm2236 = vweird.f32 %v2230
    %vm2237 = vmor %vm2235, %vm2236
    %v2238 = vsel %vm2237, %v2230, %v2234
    %v2239 = vand.u32 2147483647, %v2229
    %vm2240 = vcmp.eq.f32.partialorder %v2239, 8.507059e+37
    %v2241 = vand.u32 %v2229, 2147483648
    %v2242 = vor.u32 1.1754944e-38, %v2241
    %v2243 = vsel %vm2240, %v2242, %v2238
    %v2244 = vmul.f32 1.0, %v2243
    %v2245 = vtanh.pop %v2205
    %v2246 = vxor.u32 %v2206, 2147483648
    %v2247 = vmul.f32 %v2246, 1.442695
    %v2248 = vpow.pop %v2247
    %v2249 = vadd.f32 %v2248, 1.0
    %v2250 = vrcp.pop %v2249
    %v2251 = vmul.f32 %v2249, %v2250
    %v2252 = vsub.f32 1.0, %v2251
    %v2253 = vmul.f32 %v2250, %v2252
    %v2254 = vadd.f32 %v2250, %v2253
    %vm2255 = vweird.f32 %v2249
    %vm2256 = vweird.f32 %v2250
    %vm2257 = vmor %vm2255, %vm2256
    %v2258 = vsel %vm2257, %v2250, %v2254
    %v2259 = vand.u32 2147483647, %v2249
    %vm2260 = vcmp.eq.f32.partialorder %v2259, 8.507059e+37
    %v2261 = vand.u32 %v2249, 2147483648
    %v2262 = vor.u32 1.1754944e-38, %v2261
    %v2263 = vsel %vm2260, %v2262, %v2258
    %v2264 = vmul.f32 1.0, %v2263
    %v2265 = vmul.f32 %v2244, %v1946
    %v2266 = vmul.f32 %v2225, %v2245
    %v2267 = vadd.f32 %v2265, %v2266
    %v2268 = vtanh.pop %v2267
    %v2269 = vmul.f32 %v2264, %v2268
    %v2270 = vpack.c.bf16 %v2269, %v2269
    %s2271 = scalar_lea.vmem %s2, 24
    %2272 = vst [vmem:[%s2271] sm:$0xf] %v2270
    %s2273 = scalar_lea.vmem %s0, 112
    %v2274 = vld [vmem:[%s2273] sm:$0xff]
    %v2275 = vld [vmem:[%s2273 + $0x8] sm:$0xff]
    %v2276 = vunpack.c.l.bf16 %v2274
    %v2277 = vunpack.c.h.bf16 %v2274
    %v2278 = vunpack.c.l.bf16 %v2275
    %v2279 = vunpack.c.h.bf16 %v2275
    %v2280 = vld [vmem:[#allocation2] sm:$0xff]
    %v2281 = vld [vmem:[#allocation2 + $0x8] sm:$0xff]
    %v2282 = vld [vmem:[#allocation2 + $0x10] sm:$0xff]
    %v2283 = vld [vmem:[#allocation2 + $0x18] sm:$0xff]
    %v2284 = vld [vmem:[#allocation2 + $0x20] sm:$0xff]
    %v2285 = vld [vmem:[#allocation2 + $0x28] sm:$0xff]
    %v2286 = vld [vmem:[#allocation2 + $0x30] sm:$0xff]
    %v2287 = vld [vmem:[#allocation2 + $0x38] sm:$0xff]
    %v2288 = vld [vmem:[#allocation2 + $0x40] sm:$0xff]
    %v2289 = vld [vmem:[#allocation2 + $0x48] sm:$0xff]
    %v2290 = vld [vmem:[#allocation2 + $0x50] sm:$0xff]
    %v2291 = vld [vmem:[#allocation2 + $0x58] sm:$0xff]
    %v2292 = vld [vmem:[#allocation2 + $0x60] sm:$0xff]
    %v2293 = vld [vmem:[#allocation2 + $0x68] sm:$0xff]
    %v2294 = vld [vmem:[#allocation2 + $0x70] sm:$0xff]
    %v2295 = vld [vmem:[#allocation2 + $0x78] sm:$0xff]
    %v2296 = vld [vmem:[#allocation2 + $0x80] sm:$0xff]
    %v2297 = vld [vmem:[#allocation2 + $0x88] sm:$0xff]
    %v2298 = vld [vmem:[#allocation2 + $0x90] sm:$0xff]
    %v2299 = vld [vmem:[#allocation2 + $0x98] sm:$0xff]
    %v2300 = vld [vmem:[#allocation2 + $0xa0] sm:$0xff]
    %v2301 = vld [vmem:[#allocation2 + $0xa8] sm:$0xff]
    %v2302 = vld [vmem:[#allocation2 + $0xb0] sm:$0xff]
    %v2303 = vld [vmem:[#allocation2 + $0xb8] sm:$0xff]
    %v2304 = vld [vmem:[#allocation2 + $0xc0] sm:$0xff]
    %v2305 = vld [vmem:[#allocation2 + $0xc8] sm:$0xff]
    %v2306 = vld [vmem:[#allocation2 + $0xd0] sm:$0xff]
    %v2307 = vld [vmem:[#allocation2 + $0xd8] sm:$0xff]
    %v2308 = vld [vmem:[#allocation2 + $0xe0] sm:$0xff]
    %v2309 = vld [vmem:[#allocation2 + $0xe8] sm:$0xff]
    %v2310 = vld [vmem:[#allocation2 + $0xf0] sm:$0xff]
    %v2311 = vld [vmem:[#allocation2 + $0xf8] sm:$0xff]
    %v2344 = vunpack.c.l.b16 %v2280
    %v2345 = vunpack.c.h.b16 %v2280
    %v2346 = vunpack.c.l.b16 %v2281
    %v2347 = vunpack.c.h.b16 %v2281
    %v2348 = vunpack.c.l.b16 %v2282
    %v2349 = vunpack.c.h.b16 %v2282
    %v2350 = vunpack.c.l.b16 %v2283
    %v2351 = vunpack.c.h.b16 %v2283
    %v2352 = vunpack.c.l.b16 %v2284
    %v2353 = vunpack.c.h.b16 %v2284
    %v2354 = vunpack.c.l.b16 %v2285
    %v2355 = vunpack.c.h.b16 %v2285
    %v2356 = vunpack.c.l.b16 %v2286
    %v2357 = vunpack.c.h.b16 %v2286
    %v2358 = vunpack.c.l.b16 %v2287
    %v2359 = vunpack.c.h.b16 %v2287
    %v2360 = vunpack.c.l.b16 %v2288
    %v2361 = vunpack.c.h.b16 %v2288
    %v2362 = vunpack.c.l.b16 %v2289
    %v2363 = vunpack.c.h.b16 %v2289
    %v2364 = vunpack.c.l.b16 %v2290
    %v2365 = vunpack.c.h.b16 %v2290
    %v2366 = vunpack.c.l.b16 %v2291
    %v2367 = vunpack.c.h.b16 %v2291
    %v2368 = vunpack.c.l.b16 %v2292
    %v2369 = vunpack.c.h.b16 %v2292
    %v2370 = vunpack.c.l.b16 %v2293
    %v2371 = vunpack.c.h.b16 %v2293
    %v2372 = vunpack.c.l.b16 %v2294
    %v2373 = vunpack.c.h.b16 %v2294
    %v2374 = vunpack.c.l.b16 %v2295
    %v2375 = vunpack.c.h.b16 %v2295
    %v2376 = vunpack.c.l.b16 %v2296
    %v2377 = vunpack.c.h.b16 %v2296
    %v2378 = vunpack.c.l.b16 %v2297
    %v2379 = vunpack.c.h.b16 %v2297
    %v2380 = vunpack.c.l.b16 %v2298
    %v2381 = vunpack.c.h.b16 %v2298
    %v2382 = vunpack.c.l.b16 %v2299
    %v2383 = vunpack.c.h.b16 %v2299
    %v2384 = vunpack.c.l.b16 %v2300
    %v2385 = vunpack.c.h.b16 %v2300
    %v2386 = vunpack.c.l.b16 %v2301
    %v2387 = vunpack.c.h.b16 %v2301
    %v2388 = vunpack.c.l.b16 %v2302
    %v2389 = vunpack.c.h.b16 %v2302
    %v2390 = vunpack.c.l.b16 %v2303
    %v2391 = vunpack.c.h.b16 %v2303
    %v2392 = vunpack.c.l.b16 %v2304
    %v2393 = vunpack.c.h.b16 %v2304
    %v2394 = vunpack.c.l.b16 %v2305
    %v2395 = vunpack.c.h.b16 %v2305
    %v2396 = vunpack.c.l.b16 %v2306
    %v2397 = vunpack.c.h.b16 %v2306
    %v2398 = vunpack.c.l.b16 %v2307
    %v2399 = vunpack.c.h.b16 %v2307
    %v2400 = vunpack.c.l.b16 %v2308
    %v2401 = vunpack.c.h.b16 %v2308
    %v2402 = vunpack.c.l.b16 %v2309
    %v2403 = vunpack.c.h.b16 %v2309
    %v2404 = vunpack.c.l.b16 %v2310
    %v2405 = vunpack.c.h.b16 %v2310
    %v2406 = vunpack.c.l.b16 %v2311
    %v2407 = vunpack.c.h.b16 %v2311
    %v2408 = vpack.c.b16 %v2348, %v2344
    %v2409 = vpack.c.b16 %v2349, %v2345
    %v2410 = vpack.c.b16 %v2350, %v2346
    %v2411 = vpack.c.b16 %v2351, %v2347
    %v2412 = vpack.c.b16 %v2356, %v2352
    %v2413 = vpack.c.b16 %v2357, %v2353
    %v2414 = vpack.c.b16 %v2358, %v2354
    %v2415 = vpack.c.b16 %v2359, %v2355
    %v2416 = vpack.c.b16 %v2364, %v2360
    %v2417 = vpack.c.b16 %v2365, %v2361
    %v2418 = vpack.c.b16 %v2366, %v2362
    %v2419 = vpack.c.b16 %v2367, %v2363
    %v2420 = vpack.c.b16 %v2372, %v2368
    %v2421 = vpack.c.b16 %v2373, %v2369
    %v2422 = vpack.c.b16 %v2374, %v2370
    %v2423 = vpack.c.b16 %v2375, %v2371
    %v2424 = vpack.c.b16 %v2380, %v2376
    %v2425 = vpack.c.b16 %v2381, %v2377
    %v2426 = vpack.c.b16 %v2382, %v2378
    %v2427 = vpack.c.b16 %v2383, %v2379
    %v2428 = vpack.c.b16 %v2388, %v2384
    %v2429 = vpack.c.b16 %v2389, %v2385
    %v2430 = vpack.c.b16 %v2390, %v2386
    %v2431 = vpack.c.b16 %v2391, %v2387
    %v2432 = vpack.c.b16 %v2396, %v2392
    %v2433 = vpack.c.b16 %v2397, %v2393
    %v2434 = vpack.c.b16 %v2398, %v2394
    %v2435 = vpack.c.b16 %v2399, %v2395
    %v2436 = vpack.c.b16 %v2404, %v2400
    %v2437 = vpack.c.b16 %v2405, %v2401
    %v2438 = vpack.c.b16 %v2406, %v2402
    %v2439 = vpack.c.b16 %v2407, %v2403
    %2472 = vmatpush.bf16.msra.mxu0 %v2436
    %2473 = vmatpush.bf16.msra.mxu0 %v2432
    %2474 = vmatpush.bf16.msra.mxu0 %v2428
    %2475 = vmatpush.bf16.msra.mxu0 %v2424
    %2476 = vmatpush.bf16.msra.mxu0 %v2420
    %2477 = vmatpush.bf16.msra.mxu0 %v2416
    %2478 = vmatpush.bf16.msra.mxu0 %v2412
    %2479 = vmatpush.bf16.msra.mxu0 %v2408
    %2480 = vmatmul.bf16.gmra.mxu0 %v2270
    %v2481 = vpop.f32.mrf.mxu0
    %v2482 = vadd.f32 0.0, %v2481
    %v2483 = vpop.f32.mrf.mxu0
    %2484 = vdwg.mxu0
    %2485 = vmatpush.bf16.msra.mxu0 %v2437
    %2486 = vmatpush.bf16.msra.mxu0 %v2433
    %2487 = vmatpush.bf16.msra.mxu0 %v2429
    %2488 = vmatpush.bf16.msra.mxu0 %v2425
    %2489 = vmatpush.bf16.msra.mxu0 %v2421
    %2490 = vmatpush.bf16.msra.mxu0 %v2417
    %2491 = vmatpush.bf16.msra.mxu0 %v2413
    %2492 = vmatpush.bf16.msra.mxu0 %v2409
    %2493 = vmatmul.bf16.gmra.mxu0 %v2270
    %v2494 = vpop.f32.mrf.mxu0
    %v2495 = vadd.f32 0.0, %v2494
    %v2496 = vpop.f32.mrf.mxu0
    %2497 = vdwg.mxu0
    %2498 = vmatpush.bf16.msra.mxu0 %v2438
    %2499 = vmatpush.bf16.msra.mxu0 %v2434
    %2500 = vmatpush.bf16.msra.mxu0 %v2430
    %2501 = vmatpush.bf16.msra.mxu0 %v2426
    %2502 = vmatpush.bf16.msra.mxu0 %v2422
    %2503 = vmatpush.bf16.msra.mxu0 %v2418
    %2504 = vmatpush.bf16.msra.mxu0 %v2414
    %2505 = vmatpush.bf16.msra.mxu0 %v2410
    %2506 = vmatmul.bf16.gmra.mxu0 %v2270
    %v2507 = vpop.f32.mrf.mxu0
    %v2508 = vadd.f32 0.0, %v2507
    %v2509 = vpop.f32.mrf.mxu0
    %2510 = vdwg.mxu0
    %2511 = vmatpush.bf16.msra.mxu0 %v2439
    %2512 = vmatpush.bf16.msra.mxu0 %v2435
    %2513 = vmatpush.bf16.msra.mxu0 %v2431
    %2514 = vmatpush.bf16.msra.mxu0 %v2427
    %2515 = vmatpush.bf16.msra.mxu0 %v2423
    %2516 = vmatpush.bf16.msra.mxu0 %v2419
    %2517 = vmatpush.bf16.msra.mxu0 %v2415
    %2518 = vmatpush.bf16.msra.mxu0 %v2411
    %2519 = vmatmul.bf16.gmra.mxu0 %v2270
    %v2520 = vpop.f32.mrf.mxu0
    %v2521 = vadd.f32 0.0, %v2520
    %v2522 = vpop.f32.mrf.mxu0
    %2523 = vdwg.mxu0
    %v2524 = vadd.f32 %v2276, %v2482
    %v2525 = vadd.f32 %v2277, %v2495
    %v2526 = vadd.f32 %v2278, %v2508
    %v2527 = vadd.f32 %v2279, %v2521
    %v2528 = vxor.u32 %v2524, 2147483648
    %v2529 = vmul.f32 %v2528, 1.442695
    %v2530 = vpow.pop %v2529
    %v2531 = vadd.f32 %v2530, 1.0
    %v2532 = vrcp.pop %v2531
    %v2533 = vmul.f32 %v2531, %v2532
    %v2534 = vsub.f32 1.0, %v2533
    %v2535 = vmul.f32 %v2532, %v2534
    %v2536 = vadd.f32 %v2532, %v2535
    %vm2537 = vweird.f32 %v2531
    %vm2538 = vweird.f32 %v2532
    %vm2539 = vmor %vm2537, %vm2538
    %v2540 = vsel %vm2539, %v2532, %v2536
    %v2541 = vand.u32 2147483647, %v2531
    %vm2542 = vcmp.eq.f32.partialorder %v2541, 8.507059e+37
    %v2543 = vand.u32 %v2531, 2147483648
    %v2544 = vor.u32 1.1754944e-38, %v2543
    %v2545 = vsel %vm2542, %v2544, %v2540
    %v2546 = vmul.f32 1.0, %v2545
    %v2547 = vxor.u32 %v2525, 2147483648
    %v2548 = vmul.f32 %v2547, 1.442695
    %v2549 = vpow.pop %v2548
    %v2550 = vadd.f32 %v2549, 1.0
    %v2551 = vrcp.pop %v2550
    %v2552 = vmul.f32 %v2550, %v2551
    %v2553 = vsub.f32 1.0, %v2552
    %v2554 = vmul.f32 %v2551, %v2553
    %v2555 = vadd.f32 %v2551, %v2554
    %vm2556 = vweird.f32 %v2550
    %vm2557 = vweird.f32 %v2551
    %vm2558 = vmor %vm2556, %vm2557
    %v2559 = vsel %vm2558, %v2551, %v2555
    %v2560 = vand.u32 2147483647, %v2550
    %vm2561 = vcmp.eq.f32.partialorder %v2560, 8.507059e+37
    %v2562 = vand.u32 %v2550, 2147483648
    %v2563 = vor.u32 1.1754944e-38, %v2562
    %v2564 = vsel %vm2561, %v2563, %v2559
    %v2565 = vmul.f32 1.0, %v2564
    %v2566 = vtanh.pop %v2526
    %v2567 = vxor.u32 %v2527, 2147483648
    %v2568 = vmul.f32 %v2567, 1.442695
    %v2569 = vpow.pop %v2568
    %v2570 = vadd.f32 %v2569, 1.0
    %v2571 = vrcp.pop %v2570
    %v2572 = vmul.f32 %v2570, %v2571
    %v2573 = vsub.f32 1.0, %v2572
    %v2574 = vmul.f32 %v2571, %v2573
    %v2575 = vadd.f32 %v2571, %v2574
    %vm2576 = vweird.f32 %v2570
    %vm2577 = vweird.f32 %v2571
    %vm2578 = vmor %vm2576, %vm2577
    %v2579 = vsel %vm2578, %v2571, %v2575
    %v2580 = vand.u32 2147483647, %v2570
    %vm2581 = vcmp.eq.f32.partialorder %v2580, 8.507059e+37
    %v2582 = vand.u32 %v2570, 2147483648
    %v2583 = vor.u32 1.1754944e-38, %v2582
    %v2584 = vsel %vm2581, %v2583, %v2579
    %v2585 = vmul.f32 1.0, %v2584
    %v2586 = vmul.f32 %v2565, %v2267
    %v2587 = vmul.f32 %v2546, %v2566
    %v2588 = vadd.f32 %v2586, %v2587
    %v2589 = vtanh.pop %v2588
    %v2590 = vmul.f32 %v2585, %v2589
    %v2591 = vpack.c.bf16 %v2590, %v2590
    %s2592 = scalar_lea.vmem %s2, 28
    %2593 = vst [vmem:[%s2592] sm:$0xf] %v2591
    // Predicated region
    $region14: #{image_captioner_forward.4} parent=1 // pred_check
      _
    $region15: #{image_captioner_forward.4} parent=1 // pred_check_branch
      %2595 = sbr.rel (0) target = $region17
    $region16: #{image_captioner_forward.4} parent=1 // pred_region
      _
    $region17: #{image_captioner_forward.4} parent=1 // pred_fallthru
      _
    // Predicated region
    $region18: #{image_captioner_forward.4} parent=1 // pred_check
      _
    $region19: #{image_captioner_forward.4} parent=1 // pred_check_branch
      %2597 = sbr.rel (0) target = $region21
    $region20: #{image_captioner_forward.4} parent=1 // pred_region
      _
    $region21: #{image_captioner_forward.4} parent=1 // pred_fallthru
      _
    %2598 = vsyncpa [#allocation3], 1

</llo_original>
